<compile_context>
chip_gen: v6e
topology: v6e:2x2x1
jax: 0.10.0
libtpu: 0.0.40
codegen_flags: <defaults>
</compile_context>

<pallas_src>
import math

import jax
import jax.numpy as jnp
from jax.experimental import pallas as pl
from jax.experimental.pallas import tpu as pltpu


def _lstm_decoder_kernel(
    xg_ref, ctx_ref, ctxp_ref, q_ref, qp_ref, cbias_ref, qbias_ref,
    h0_ref, c0_ref, wih_h_ref, whh_ref, wout_h_ref,
    out_h_ref, out_ctx_ref, out_q_ref, out_catt_ref, out_qatt_ref,
    hout_ref, cout_ref,
    h_s, c_s, co_s,
):
    H = h_s.shape[-1]
    TB = xg_ref.shape[0]          # decoder steps handled by this grid block
    tb = pl.program_id(0)

    # Initialize carried recurrent state on the first time block.
    @pl.when(tb == 0)
    def _init():
        h_s[...] = h0_ref[...]
        c_s[...] = c0_ref[...]
        co_s[...] = jnp.zeros(co_s.shape, co_s.dtype)   # make_init_output -> zeros

    # Loop-invariant operands: load / broadcast once per block (hoisted out of
    # the unrolled step loop; JAX does not CSE broadcast_in_dim inside loops).
    ctx = ctx_ref[...]                     # (B, Tc, H)
    ctxp = ctxp_ref[...]                   # (B, Tc, H)  context @ W_ctx_align
    q = q_ref[...]                         # (B, Tq, H)
    qp = qp_ref[...]                       # (B, Tq, H)  question @ W_q_align
    cbias3 = cbias_ref[...][:, None, :]    # (B, 1, Tc)  additive mask bias
    qbias3 = qbias_ref[...][:, None, :]    # (B, 1, Tq)
    wih_h = wih_h_ref[...]                 # (H, 4H)  input-feed columns of W_ih
    whh = whh_ref[...]                     # (H, 4H)
    wout_h = wout_h_ref[...]               # (H, 2H)  fused [W_ctx_h | W_q_h]

    def attend(h3, mem, mem_proj, bias3):
        # h3: (B,1,H); mem/mem_proj: (B,S,H); bias3: (B,1,S). MXU batched dots.
        s = jnp.einsum("bqh,bsh->bqs", h3, mem,
                       preferred_element_type=jnp.float32) + bias3
        m = jnp.max(s, axis=-1, keepdims=True)
        p = jnp.exp(s - m)
        inv = pl.reciprocal(jnp.sum(p, axis=-1, keepdims=True), approx=True)
        attn3 = p * inv                                          # (B, 1, S)
        align_p3 = jnp.einsum("bqs,bsk->bqk", attn3, mem_proj,
                              preferred_element_type=jnp.float32)  # (B, 1, H)
        return align_p3[:, 0, :], attn3[:, 0, :]

    def step(i, carry):
        h_prev, c_prev, co_prev = carry
        # LSTMCell: the x-contribution + biases are precomputed (xg); only the
        # two recurrent MXU pushes stay on the serial dependency chain.
        gates = (xg_ref[i]
                 + jnp.dot(co_prev, wih_h, preferred_element_type=jnp.float32)
                 + jnp.dot(h_prev, whh, preferred_element_type=jnp.float32))
        i_g = jax.nn.sigmoid(gates[:, 0 * H:1 * H])
        f_g = jax.nn.sigmoid(gates[:, 1 * H:2 * H])
        g_g = jnp.tanh(gates[:, 2 * H:3 * H])
        o_g = jax.nn.sigmoid(gates[:, 3 * H:4 * H])
        c_new = f_g * c_prev + i_g * g_g
        h_new = o_g * jnp.tanh(c_new)

        h3 = h_new[:, None, :]                                   # (B, 1, H)
        # Fused linear_out h-projection for both attentions: one MXU push.
        h_proj = jnp.dot(h_new, wout_h,
                         preferred_element_type=jnp.float32)     # (B, 2H)

        ca_proj, c_attn = attend(h3, ctx, ctxp, cbias3)
        qa_proj, q_attn = attend(h3, q, qp, qbias3)
        ctx_out = jnp.tanh(h_proj[:, :H] + ca_proj)
        q_out = jnp.tanh(h_proj[:, H:] + qa_proj)

        out_h_ref[i] = h_new
        out_ctx_ref[i] = ctx_out
        out_q_ref[i] = q_out
        out_catt_ref[i] = c_attn
        out_qatt_ref[i] = q_attn
        return h_new, c_new, ctx_out          # ctx_out feeds next step (input feed)

    h, c, co = jax.lax.fori_loop(
        0, TB, step, (h_s[...], c_s[...], co_s[...]), unroll=True)
    h_s[...] = h
    c_s[...] = c
    co_s[...] = co

    # Final hidden state: single store on the last time block only.
    @pl.when(tb == pl.num_programs(0) - 1)
    def _fin():
        hout_ref[...] = h
        cout_ref[...] = c


def _pick_time_block(T, max_tb=8):
    """Largest divisor of T that is <= max_tb (keeps the grid exact)."""
    for tb in range(min(T, max_tb), 0, -1):
        if T % tb == 0:
            return tb
    return 1


def lstm_decoder_forward(inp, context, question, context_mask, question_mask,
                         h0, c0, params):
    """inp: (B, T, d_in); context: (B, Tc, H); question: (B, Tq, H);
    masks: (B, Tc)/(B, Tq) of 0/1; h0, c0: (B, H)."""
    B, T, d_in = inp.shape
    _, Tc, H = context.shape
    Tq = question.shape[1]
    f32 = jnp.float32
    hi = jax.lax.Precision.HIGHEST

    w_ih_t = params["w_ih"].T.astype(f32)          # (d_in + H, 4H)
    wih_x = w_ih_t[:d_in]                          # (d_in, 4H)
    wih_h = w_ih_t[d_in:]                          # (H, 4H) input-feed columns
    whh = params["w_hh"].T.astype(f32)             # (H, 4H)
    b = (params["b_ih"] + params["b_hh"]).astype(f32).reshape(1, 1, 4 * H)
    wc_t = params["w_ctx_out"].T.astype(f32)       # (2H, H)
    wq_t = params["w_q_out"].T.astype(f32)
    wc_h, wc_a = wc_t[:H], wc_t[H:]
    wq_h, wq_a = wq_t[:H], wq_t[H:]
    wout_h = jnp.concatenate([wc_h, wq_h], axis=1)   # (H, 2H) fused h-projection

    inp_f = inp.astype(f32)
    x_tm = jnp.transpose(inp_f, (1, 0, 2))           # (T, B, d_in), time-major
    ctx_f = context.astype(f32)
    q_f = question.astype(f32)

    # Hoisted out of the recurrence: input projection (+ fused biases) and the
    # `align` halves of both linear_out projections.
    xg = jnp.einsum("tbd,dg->tbg", x_tm, wih_x, precision=hi) + b      # (T, B, 4H)
    ctx_proj = jnp.einsum("bsh,hk->bsk", ctx_f, wc_a, precision=hi)    # (B, Tc, H)
    q_proj = jnp.einsum("bsh,hk->bsk", q_f, wq_a, precision=hi)        # (B, Tq, H)

    # Additive mask bias computed once (replaces per-step compare+select).
    cbias = jnp.where(context_mask > 0, 0.0, -1e30).astype(f32)
    qbias = jnp.where(question_mask > 0, 0.0, -1e30).astype(f32)

    TB = _pick_time_block(T)
    nblk = T // TB

    out_shapes = (
        jax.ShapeDtypeStruct((T, B, H), f32),     # dec_state h_t
        jax.ShapeDtypeStruct((T, B, H), f32),     # context_output
        jax.ShapeDtypeStruct((T, B, H), f32),     # question_output
        jax.ShapeDtypeStruct((T, B, Tc), f32),    # context attention
        jax.ShapeDtypeStruct((T, B, Tq), f32),    # question attention
        jax.ShapeDtypeStruct((B, H), f32),        # final h
        jax.ShapeDtypeStruct((B, H), f32),        # final c
    )

    in_specs = [
        pl.BlockSpec((TB, B, 4 * H), lambda t: (t, 0, 0)),   # precomputed x-gates
        pl.BlockSpec((B, Tc, H), lambda t: (0, 0, 0)),       # context
        pl.BlockSpec((B, Tc, H), lambda t: (0, 0, 0)),       # context @ W_ctx_align
        pl.BlockSpec((B, Tq, H), lambda t: (0, 0, 0)),       # question
        pl.BlockSpec((B, Tq, H), lambda t: (0, 0, 0)),       # question @ W_q_align
        pl.BlockSpec((B, Tc), lambda t: (0, 0)),             # context mask bias
        pl.BlockSpec((B, Tq), lambda t: (0, 0)),             # question mask bias
        pl.BlockSpec((B, H), lambda t: (0, 0)),              # h0
        pl.BlockSpec((B, H), lambda t: (0, 0)),              # c0
        pl.BlockSpec((H, 4 * H), lambda t: (0, 0)),          # W_ih (input-feed cols)
        pl.BlockSpec((H, 4 * H), lambda t: (0, 0)),          # W_hh
        pl.BlockSpec((H, 2 * H), lambda t: (0, 0)),          # [W_ctx_h | W_q_h]
    ]
    out_specs = [
        pl.BlockSpec((TB, B, H), lambda t: (t, 0, 0)),
        pl.BlockSpec((TB, B, H), lambda t: (t, 0, 0)),
        pl.BlockSpec((TB, B, H), lambda t: (t, 0, 0)),
        pl.BlockSpec((TB, B, Tc), lambda t: (t, 0, 0)),
        pl.BlockSpec((TB, B, Tq), lambda t: (t, 0, 0)),
        pl.BlockSpec((B, H), lambda t: (0, 0)),
        pl.BlockSpec((B, H), lambda t: (0, 0)),
    ]

    outs = pl.pallas_call(
        _lstm_decoder_kernel,
        out_shape=out_shapes,
        grid_spec=pltpu.PrefetchScalarGridSpec(
            num_scalar_prefetch=0,
            grid=(nblk,),
            in_specs=in_specs,
            out_specs=out_specs,
            scratch_shapes=[
                pltpu.VMEM((B, H), f32),   # h carried across time blocks
                pltpu.VMEM((B, H), f32),   # c
                pltpu.VMEM((B, H), f32),   # context_output (input feed)
            ],
        ),
        compiler_params=pltpu.CompilerParams(
            dimension_semantics=("arbitrary",)),   # sequential recurrence over T
    )(xg, ctx_f, ctx_proj, q_f, q_proj, cbias, qbias,
      h0.astype(f32), c0.astype(f32), wih_h, whh, wout_h)

    h_tm, ctx_tm, qout_tm, catt_tm, qatt_tm, h_T, c_T = outs
    to_bm = lambda a: jnp.transpose(a, (1, 0, 2))
    h_bm, ctx_bm, qout_bm = to_bm(h_tm), to_bm(ctx_tm), to_bm(qout_tm)
    # concat([dec_state, ctx_out/q_out, decoder_input], -1) assembled by XLA so
    # the kernel only emits lane-dense H-wide streams.
    vps = jnp.concatenate([h_bm, ctx_bm, inp_f], axis=-1)
    cqs = jnp.concatenate([h_bm, qout_bm, inp_f], axis=-1)
    return (ctx_bm, vps, cqs, to_bm(catt_tm), to_bm(qatt_tm),
            (h_T[None], c_T[None]))


def reference_forward(inp, context, question, cmask, qmask, h0, c0, params):
    """Plain-JAX mirror of the PyTorch LSTMDecoder forward (dropout=0)."""
    B, T, _ = inp.shape
    H = h0.shape[-1]
    w_ih, w_hh = params["w_ih"], params["w_hh"]
    b = params["b_ih"] + params["b_hh"]
    wc, wq = params["w_ctx_out"], params["w_q_out"]
    h, c = h0, c0
    co = jnp.zeros((B, H), jnp.float32)
    ctx_outs, vps, cqs, catts, qatts = [], [], [], [], []
    hi = jax.lax.Precision.HIGHEST
    for t in range(T):
        x_t = inp[:, t, :]
        rnn_in = jnp.concatenate([x_t, co], axis=-1)
        gates = (jnp.dot(rnn_in, w_ih.T, precision=hi)
                 + jnp.dot(h, w_hh.T, precision=hi) + b)
        i = jax.nn.sigmoid(gates[:, :H])
        f = jax.nn.sigmoid(gates[:, H:2 * H])
        g = jnp.tanh(gates[:, 2 * H:3 * H])
        o = jax.nn.sigmoid(gates[:, 3 * H:])
        c = f * c + i * g
        h = o * jnp.tanh(c)

        def attend(mem, mask, w_out):
            scores = jnp.einsum("bh,bsh->bs", h, mem, precision=hi)
            scores = jnp.where(mask > 0, scores, -jnp.inf)
            attn = jax.nn.softmax(scores, axis=-1)
            align = jnp.einsum("bs,bsh->bh", attn, mem, precision=hi)
            comb = jnp.concatenate([h, align], axis=-1)
            return jnp.tanh(jnp.dot(comb, w_out.T, precision=hi)), attn

        ctx_o, ctx_a = attend(context, cmask, wc)
        q_o, q_a = attend(question, qmask, wq)
        co = ctx_o
        ctx_outs.append(ctx_o)
        vps.append(jnp.concatenate([h, ctx_o, x_t], -1))
        cqs.append(jnp.concatenate([h, q_o, x_t], -1))
        catts.append(ctx_a)
        qatts.append(q_a)
    stack = lambda xs: jnp.stack(xs, axis=1)
    return (stack(ctx_outs), stack(vps), stack(cqs), stack(catts), stack(qatts),
            (h[None], c[None]))


if __name__ == "__main__":
    B, T, d_in, H, Tc, Tq = 2, 5, 16, 32, 10, 7
    key = jax.random.PRNGKey(0)
    ks = jax.random.split(key, 11)

    inp = jax.random.normal(ks[0], (B, T, d_in), jnp.float32)
    context = jax.random.normal(ks[1], (B, Tc, H), jnp.float32)
    question = jax.random.normal(ks[2], (B, Tq, H), jnp.float32)
    cmask = jnp.ones((B, Tc), jnp.float32).at[1, Tc - 2:].set(0.0)
    qmask = jnp.ones((B, Tq), jnp.float32).at[0, Tq - 1:].set(0.0)
    h0 = 0.1 * jax.random.normal(ks[3], (B, H), jnp.float32)
    c0 = 0.1 * jax.random.normal(ks[4], (B, H), jnp.float32)

    k_lstm = 1.0 / math.sqrt(H)
    k_lin = 1.0 / math.sqrt(2 * H)
    params = dict(
        w_ih=jax.random.uniform(ks[5], (4 * H, d_in + H), jnp.float32, -k_lstm, k_lstm),
        w_hh=jax.random.uniform(ks[6], (4 * H, H), jnp.float32, -k_lstm, k_lstm),
        b_ih=jax.random.uniform(ks[7], (4 * H,), jnp.float32, -k_lstm, k_lstm),
        b_hh=jax.random.uniform(ks[8], (4 * H,), jnp.float32, -k_lstm, k_lstm),
        w_ctx_out=jax.random.uniform(ks[9], (H, 2 * H), jnp.float32, -k_lin, k_lin),
        w_q_out=jax.random.uniform(ks[10], (H, 2 * H), jnp.float32, -k_lin, k_lin),
    )

    outs = lstm_decoder_forward(inp, context, question, cmask, qmask, h0, c0, params)
    outs = jax.block_until_ready(outs)

    refs = reference_forward(inp, context, question, cmask, qmask, h0, c0, params)
    # 5e-3 tolerance: kernel uses the EUP approximate reciprocal in the softmax
    # and MXU f32 accumulation vs. HIGHEST-precision reference matmuls.
    for got, want in zip(jax.tree_util.tree_leaves(outs),
                         jax.tree_util.tree_leaves(refs)):
        assert got.shape == want.shape, (got.shape, want.shape)
        assert jnp.allclose(got, want, atol=5e-3, rtol=5e-3), float(
            jnp.max(jnp.abs(got - want)))

    print("KERNEL_OK")
</pallas_src>

<mosaic_0001>
module attributes {stable_mosaic.version = 11 : i64} {
  func.func @_lstm_decoder_kernel(%arg0: i32, %arg1: memref<5x2x128xf32, #tpu.memory_space<vmem>>, %arg2: memref<2x10x32xf32, #tpu.memory_space<vmem>>, %arg3: memref<2x10x32xf32, #tpu.memory_space<vmem>>, %arg4: memref<2x7x32xf32, #tpu.memory_space<vmem>>, %arg5: memref<2x7x32xf32, #tpu.memory_space<vmem>>, %arg6: memref<2x10xf32, #tpu.memory_space<vmem>>, %arg7: memref<2x7xf32, #tpu.memory_space<vmem>>, %arg8: memref<2x32xf32, #tpu.memory_space<vmem>>, %arg9: memref<2x32xf32, #tpu.memory_space<vmem>>, %arg10: memref<32x128xf32, #tpu.memory_space<vmem>>, %arg11: memref<32x128xf32, #tpu.memory_space<vmem>>, %arg12: memref<32x64xf32, #tpu.memory_space<vmem>>, %arg13: memref<5x2x32xf32, #tpu.memory_space<vmem>>, %arg14: memref<5x2x32xf32, #tpu.memory_space<vmem>>, %arg15: memref<5x2x32xf32, #tpu.memory_space<vmem>>, %arg16: memref<5x2x10xf32, #tpu.memory_space<vmem>>, %arg17: memref<5x2x7xf32, #tpu.memory_space<vmem>>, %arg18: memref<2x32xf32, #tpu.memory_space<vmem>>, %arg19: memref<2x32xf32, #tpu.memory_space<vmem>>, %arg20: memref<2x32xf32, #tpu.memory_space<vmem>>, %arg21: memref<2x32xf32, #tpu.memory_space<vmem>>, %arg22: memref<2x32xf32, #tpu.memory_space<vmem>>) attributes {dimension_semantics = [#tpu.dimension_semantics<arbitrary>], iteration_bounds = array<i64: 1>, scalar_prefetch = 0 : i64, scratch_operands = 3 : i64, tpu.core_type = #tpu.core_type<tc>, window_params = [{transform_indices = @transform_0, window_bounds = array<i64: 5, 2, 128>}, {pipeline_mode = #tpu.pipeline_mode<synchronous>, transform_indices = @transform_1, window_bounds = array<i64: 2, 10, 32>}, {pipeline_mode = #tpu.pipeline_mode<synchronous>, transform_indices = @transform_2, window_bounds = array<i64: 2, 10, 32>}, {pipeline_mode = #tpu.pipeline_mode<synchronous>, transform_indices = @transform_3, window_bounds = array<i64: 2, 7, 32>}, {pipeline_mode = #tpu.pipeline_mode<synchronous>, transform_indices = @transform_4, window_bounds = array<i64: 2, 7, 32>}, {pipeline_mode = #tpu.pipeline_mode<synchronous>, transform_indices = @transform_5, window_bounds = array<i64: 2, 10>}, {pipeline_mode = #tpu.pipeline_mode<synchronous>, transform_indices = @transform_6, window_bounds = array<i64: 2, 7>}, {pipeline_mode = #tpu.pipeline_mode<synchronous>, transform_indices = @transform_7, window_bounds = array<i64: 2, 32>}, {pipeline_mode = #tpu.pipeline_mode<synchronous>, transform_indices = @transform_8, window_bounds = array<i64: 2, 32>}, {pipeline_mode = #tpu.pipeline_mode<synchronous>, transform_indices = @transform_9, window_bounds = array<i64: 32, 128>}, {pipeline_mode = #tpu.pipeline_mode<synchronous>, transform_indices = @transform_10, window_bounds = array<i64: 32, 128>}, {pipeline_mode = #tpu.pipeline_mode<synchronous>, transform_indices = @transform_11, window_bounds = array<i64: 32, 64>}, {transform_indices = @transform_12, window_bounds = array<i64: 5, 2, 32>}, {transform_indices = @transform_13, window_bounds = array<i64: 5, 2, 32>}, {transform_indices = @transform_14, window_bounds = array<i64: 5, 2, 32>}, {transform_indices = @transform_15, window_bounds = array<i64: 5, 2, 10>}, {transform_indices = @transform_16, window_bounds = array<i64: 5, 2, 7>}, {pipeline_mode = #tpu.pipeline_mode<synchronous>, transform_indices = @transform_17, window_bounds = array<i64: 2, 32>}, {pipeline_mode = #tpu.pipeline_mode<synchronous>, transform_indices = @transform_18, window_bounds = array<i64: 2, 32>}]} {
    %c0_i32 = arith.constant 0 : i32
    %0 = arith.cmpi eq, %arg0, %c0_i32 : i32
    %1 = arith.extui %0 : i1 to i32
    %c0_i32_0 = arith.constant 0 : i32
    %2 = arith.cmpi ne, %1, %c0_i32_0 : i32
    scf.if %2 {
      %c0_166 = arith.constant 0 : index
      %c0_167 = arith.constant 0 : index
      %473 = vector.load %arg8[%c0_166, %c0_167] : memref<2x32xf32, #tpu.memory_space<vmem>>, vector<2x32xf32>
      %c0_168 = arith.constant 0 : index
      %c0_169 = arith.constant 0 : index
      %474 = vector.load %arg20[%c0_168, %c0_169] : memref<2x32xf32, #tpu.memory_space<vmem>>, vector<2x32xf32>
      tpu.vector_store %arg20[%c0_168, %c0_169], %473 {strides = array<i32>} : memref<2x32xf32, #tpu.memory_space<vmem>>, vector<2x32xf32>,
      %c0_170 = arith.constant 0 : index
      %c0_171 = arith.constant 0 : index
      %475 = vector.load %arg9[%c0_170, %c0_171] : memref<2x32xf32, #tpu.memory_space<vmem>>, vector<2x32xf32>
      %c0_172 = arith.constant 0 : index
      %c0_173 = arith.constant 0 : index
      %476 = vector.load %arg21[%c0_172, %c0_173] : memref<2x32xf32, #tpu.memory_space<vmem>>, vector<2x32xf32>
      tpu.vector_store %arg21[%c0_172, %c0_173], %475 {strides = array<i32>} : memref<2x32xf32, #tpu.memory_space<vmem>>, vector<2x32xf32>,
      %cst_174 = arith.constant 0.000000e+00 : f32
      %477 = vector.broadcast %cst_174 : f32 to vector<2x32xf32>
      %c0_175 = arith.constant 0 : index
      %c0_176 = arith.constant 0 : index
      %478 = vector.load %arg22[%c0_175, %c0_176] : memref<2x32xf32, #tpu.memory_space<vmem>>, vector<2x32xf32>
      tpu.vector_store %arg22[%c0_175, %c0_176], %477 {strides = array<i32>} : memref<2x32xf32, #tpu.memory_space<vmem>>, vector<2x32xf32>,
    } else {
    }
    %c0 = arith.constant 0 : index
    %c0_1 = arith.constant 0 : index
    %c0_2 = arith.constant 0 : index
    %3 = vector.load %arg2[%c0, %c0_1, %c0_2] : memref<2x10x32xf32, #tpu.memory_space<vmem>>, vector<2x10x32xf32>
    %c0_3 = arith.constant 0 : index
    %c0_4 = arith.constant 0 : index
    %c0_5 = arith.constant 0 : index
    %4 = vector.load %arg3[%c0_3, %c0_4, %c0_5] : memref<2x10x32xf32, #tpu.memory_space<vmem>>, vector<2x10x32xf32>
    %c0_6 = arith.constant 0 : index
    %c0_7 = arith.constant 0 : index
    %c0_8 = arith.constant 0 : index
    %5 = vector.load %arg4[%c0_6, %c0_7, %c0_8] : memref<2x7x32xf32, #tpu.memory_space<vmem>>, vector<2x7x32xf32>
    %c0_9 = arith.constant 0 : index
    %c0_10 = arith.constant 0 : index
    %c0_11 = arith.constant 0 : index
    %6 = vector.load %arg5[%c0_9, %c0_10, %c0_11] : memref<2x7x32xf32, #tpu.memory_space<vmem>>, vector<2x7x32xf32>
    %c0_12 = arith.constant 0 : index
    %c0_13 = arith.constant 0 : index
    %7 = vector.load %arg6[%c0_12, %c0_13] : memref<2x10xf32, #tpu.memory_space<vmem>>, vector<2x10xf32>
    %8 = vector.shape_cast %7 : vector<2x10xf32> to vector<2x1x10xf32>
    %c0_14 = arith.constant 0 : index
    %c0_15 = arith.constant 0 : index
    %9 = vector.load %arg7[%c0_14, %c0_15] : memref<2x7xf32, #tpu.memory_space<vmem>>, vector<2x7xf32>
    %10 = vector.shape_cast %9 : vector<2x7xf32> to vector<2x1x7xf32>
    %c0_16 = arith.constant 0 : index
    %c0_17 = arith.constant 0 : index
    %11 = vector.load %arg10[%c0_16, %c0_17] : memref<32x128xf32, #tpu.memory_space<vmem>>, vector<32x128xf32>
    %c0_18 = arith.constant 0 : index
    %c0_19 = arith.constant 0 : index
    %12 = vector.load %arg11[%c0_18, %c0_19] : memref<32x128xf32, #tpu.memory_space<vmem>>, vector<32x128xf32>
    %c0_20 = arith.constant 0 : index
    %c0_21 = arith.constant 0 : index
    %13 = vector.load %arg12[%c0_20, %c0_21] : memref<32x64xf32, #tpu.memory_space<vmem>>, vector<32x64xf32>
    %c0_22 = arith.constant 0 : index
    %c0_23 = arith.constant 0 : index
    %14 = vector.load %arg20[%c0_22, %c0_23] : memref<2x32xf32, #tpu.memory_space<vmem>>, vector<2x32xf32>
    %c0_24 = arith.constant 0 : index
    %c0_25 = arith.constant 0 : index
    %15 = vector.load %arg21[%c0_24, %c0_25] : memref<2x32xf32, #tpu.memory_space<vmem>>, vector<2x32xf32>
    %c0_26 = arith.constant 0 : index
    %c0_27 = arith.constant 0 : index
    %16 = vector.load %arg22[%c0_26, %c0_27] : memref<2x32xf32, #tpu.memory_space<vmem>>, vector<2x32xf32>
    %c0_i32_28 = arith.constant 0 : i32
    %17 = arith.index_cast %c0_i32_28 : i32 to index
    %c0_29 = arith.constant 0 : index
    %c0_30 = arith.constant 0 : index
    %18 = vector.load %arg1[%17, %c0_29, %c0_30] : memref<5x2x128xf32, #tpu.memory_space<vmem>>, vector<1x2x128xf32>
    %19 = vector.shape_cast %18 : vector<1x2x128xf32> to vector<2x128xf32>
    %cst = arith.constant dense<0.000000e+00> : vector<2x128xf32>
    %20 = tpu.matmul %16, %11, %cst {dimension_numbers = #tpu.dot_dimension_numbers<[1], [0], [0], [1], [0, 0, 1, 1], [], []>} : vector<2x32xf32>, vector<32x128xf32>, vector<2x128xf32> -> vector<2x128xf32>
    %21 = arith.addf %19, %20 : vector<2x128xf32>
    %cst_31 = arith.constant dense<0.000000e+00> : vector<2x128xf32>
    %22 = tpu.matmul %14, %12, %cst_31 {dimension_numbers = #tpu.dot_dimension_numbers<[1], [0], [0], [1], [0, 0, 1, 1], [], []>} : vector<2x32xf32>, vector<32x128xf32>, vector<2x128xf32> -> vector<2x128xf32>
    %23 = arith.addf %21, %22 : vector<2x128xf32>
    %24 = vector.extract_strided_slice %23 {offsets = [0, 0], sizes = [2, 32], strides = [1, 1]} : vector<2x128xf32> to vector<2x32xf32>
    %25 = arith.negf %24 : vector<2x32xf32>
    %26 = math.exp %25 : vector<2x32xf32>
    %cst_32 = arith.constant 1.000000e+00 : f32
    %27 = vector.broadcast %cst_32 : f32 to vector<2x32xf32>
    %28 = arith.addf %27, %26 : vector<2x32xf32>
    %29 = arith.divf %27, %28 : vector<2x32xf32>
    %30 = vector.extract_strided_slice %23 {offsets = [0, 32], sizes = [2, 32], strides = [1, 1]} : vector<2x128xf32> to vector<2x32xf32>
    %31 = arith.negf %30 : vector<2x32xf32>
    %32 = math.exp %31 : vector<2x32xf32>
    %cst_33 = arith.constant 1.000000e+00 : f32
    %33 = vector.broadcast %cst_33 : f32 to vector<2x32xf32>
    %34 = arith.addf %33, %32 : vector<2x32xf32>
    %35 = arith.divf %33, %34 : vector<2x32xf32>
    %36 = vector.extract_strided_slice %23 {offsets = [0, 64], sizes = [2, 32], strides = [1, 1]} : vector<2x128xf32> to vector<2x32xf32>
    %37 = math.tanh %36 : vector<2x32xf32>
    %38 = vector.extract_strided_slice %23 {offsets = [0, 96], sizes = [2, 32], strides = [1, 1]} : vector<2x128xf32> to vector<2x32xf32>
    %39 = arith.negf %38 : vector<2x32xf32>
    %40 = math.exp %39 : vector<2x32xf32>
    %cst_34 = arith.constant 1.000000e+00 : f32
    %41 = vector.broadcast %cst_34 : f32 to vector<2x32xf32>
    %42 = arith.addf %41, %40 : vector<2x32xf32>
    %43 = arith.divf %41, %42 : vector<2x32xf32>
    %44 = arith.mulf %35, %15 : vector<2x32xf32>
    %45 = arith.mulf %29, %37 : vector<2x32xf32>
    %46 = arith.addf %44, %45 : vector<2x32xf32>
    %47 = math.tanh %46 : vector<2x32xf32>
    %48 = arith.mulf %43, %47 : vector<2x32xf32>
    %49 = vector.shape_cast %48 : vector<2x32xf32> to vector<2x1x32xf32>
    %cst_35 = arith.constant dense<0.000000e+00> : vector<2x64xf32>
    %50 = tpu.matmul %48, %13, %cst_35 {dimension_numbers = #tpu.dot_dimension_numbers<[1], [0], [0], [1], [0, 0, 1, 1], [], []>} : vector<2x32xf32>, vector<32x64xf32>, vector<2x64xf32> -> vector<2x64xf32>
    "tpu.trace_start"() <{level = 10 : i32, message = "bqh,bsh->bqs"}> : () -> ()
    %cst_36 = arith.constant dense<0.000000e+00> : vector<2x1x10xf32>
    %51 = tpu.matmul %49, %3, %cst_36 {dimension_numbers = #tpu.dot_dimension_numbers<[2], [2], [1], [1], [0, 0, 0, 1, 1, 1], [0], [0]>} : vector<2x1x32xf32>, vector<2x10x32xf32>, vector<2x1x10xf32> -> vector<2x1x10xf32>
    "tpu.trace_stop"() : () -> ()
    %52 = arith.addf %51, %8 : vector<2x1x10xf32>
    %cst_37 = arith.constant dense<0xFF800000> : vector<2x1xf32>
    %53 = vector.multi_reduction <maximumf>, %52, %cst_37 [2] : vector<2x1x10xf32> to vector<2x1xf32>
    %54 = vector.shape_cast %53 : vector<2x1xf32> to vector<2x1x1xf32>
    %55 = vector.broadcast %54 : vector<2x1x1xf32> to vector<2x1x10xf32>
    %56 = arith.subf %52, %55 : vector<2x1x10xf32>
    %57 = math.exp %56 : vector<2x1x10xf32>
    %cst_38 = arith.constant dense<0.000000e+00> : vector<2x1xf32>
    %58 = vector.multi_reduction <add>, %57, %cst_38 [2] : vector<2x1x10xf32> to vector<2x1xf32>
    %59 = vector.shape_cast %58 : vector<2x1xf32> to vector<2x1x1xf32>
    %60 = tpu.reciprocal %59 {approx = true} : vector<2x1x1xf32> -> vector<2x1x1xf32>
    %61 = vector.broadcast %60 : vector<2x1x1xf32> to vector<2x1x10xf32>
    %62 = arith.mulf %57, %61 : vector<2x1x10xf32>
    "tpu.trace_start"() <{level = 10 : i32, message = "bqs,bsk->bqk"}> : () -> ()
    %cst_39 = arith.constant dense<0.000000e+00> : vector<2x1x32xf32>
    %63 = tpu.matmul %62, %4, %cst_39 {dimension_numbers = #tpu.dot_dimension_numbers<[2], [1], [1], [2], [0, 0, 0, 1, 1, 2], [0], [0]>} : vector<2x1x10xf32>, vector<2x10x32xf32>, vector<2x1x32xf32> -> vector<2x1x32xf32>
    "tpu.trace_stop"() : () -> ()
    %64 = vector.shape_cast %63 : vector<2x1x32xf32> to vector<2x32xf32>
    %65 = vector.shape_cast %62 : vector<2x1x10xf32> to vector<2x10xf32>
    "tpu.trace_start"() <{level = 10 : i32, message = "bqh,bsh->bqs"}> : () -> ()
    %cst_40 = arith.constant dense<0.000000e+00> : vector<2x1x7xf32>
    %66 = tpu.matmul %49, %5, %cst_40 {dimension_numbers = #tpu.dot_dimension_numbers<[2], [2], [1], [1], [0, 0, 0, 1, 1, 1], [0], [0]>} : vector<2x1x32xf32>, vector<2x7x32xf32>, vector<2x1x7xf32> -> vector<2x1x7xf32>
    "tpu.trace_stop"() : () -> ()
    %67 = arith.addf %66, %10 : vector<2x1x7xf32>
    %cst_41 = arith.constant dense<0xFF800000> : vector<2x1xf32>
    %68 = vector.multi_reduction <maximumf>, %67, %cst_41 [2] : vector<2x1x7xf32> to vector<2x1xf32>
    %69 = vector.shape_cast %68 : vector<2x1xf32> to vector<2x1x1xf32>
    %70 = vector.broadcast %69 : vector<2x1x1xf32> to vector<2x1x7xf32>
    %71 = arith.subf %67, %70 : vector<2x1x7xf32>
    %72 = math.exp %71 : vector<2x1x7xf32>
    %cst_42 = arith.constant dense<0.000000e+00> : vector<2x1xf32>
    %73 = vector.multi_reduction <add>, %72, %cst_42 [2] : vector<2x1x7xf32> to vector<2x1xf32>
    %74 = vector.shape_cast %73 : vector<2x1xf32> to vector<2x1x1xf32>
    %75 = tpu.reciprocal %74 {approx = true} : vector<2x1x1xf32> -> vector<2x1x1xf32>
    %76 = vector.broadcast %75 : vector<2x1x1xf32> to vector<2x1x7xf32>
    %77 = arith.mulf %72, %76 : vector<2x1x7xf32>
    "tpu.trace_start"() <{level = 10 : i32, message = "bqs,bsk->bqk"}> : () -> ()
    %cst_43 = arith.constant dense<0.000000e+00> : vector<2x1x32xf32>
    %78 = tpu.matmul %77, %6, %cst_43 {dimension_numbers = #tpu.dot_dimension_numbers<[2], [1], [1], [2], [0, 0, 0, 1, 1, 2], [0], [0]>} : vector<2x1x7xf32>, vector<2x7x32xf32>, vector<2x1x32xf32> -> vector<2x1x32xf32>
    "tpu.trace_stop"() : () -> ()
    %79 = vector.shape_cast %78 : vector<2x1x32xf32> to vector<2x32xf32>
    %80 = vector.shape_cast %77 : vector<2x1x7xf32> to vector<2x7xf32>
    %81 = vector.extract_strided_slice %50 {offsets = [0, 0], sizes = [2, 32], strides = [1, 1]} : vector<2x64xf32> to vector<2x32xf32>
    %82 = arith.addf %81, %64 : vector<2x32xf32>
    %83 = math.tanh %82 : vector<2x32xf32>
    %84 = vector.extract_strided_slice %50 {offsets = [0, 32], sizes = [2, 32], strides = [1, 1]} : vector<2x64xf32> to vector<2x32xf32>
    %85 = arith.addf %84, %79 : vector<2x32xf32>
    %86 = math.tanh %85 : vector<2x32xf32>
    %87 = arith.index_cast %c0_i32_28 : i32 to index
    %c0_44 = arith.constant 0 : index
    %c0_45 = arith.constant 0 : index
    %88 = vector.load %arg13[%87, %c0_44, %c0_45] : memref<5x2x32xf32, #tpu.memory_space<vmem>>, vector<1x2x32xf32>
    %89 = vector.shape_cast %88 : vector<1x2x32xf32> to vector<2x32xf32>
    %90 = vector.shape_cast %48 : vector<2x32xf32> to vector<1x2x32xf32>
    tpu.vector_store %arg13[%87, %c0_44, %c0_45], %90 {strides = array<i32>} : memref<5x2x32xf32, #tpu.memory_space<vmem>>, vector<1x2x32xf32>,
    %91 = arith.index_cast %c0_i32_28 : i32 to index
    %c0_46 = arith.constant 0 : index
    %c0_47 = arith.constant 0 : index
    %92 = vector.load %arg14[%91, %c0_46, %c0_47] : memref<5x2x32xf32, #tpu.memory_space<vmem>>, vector<1x2x32xf32>
    %93 = vector.shape_cast %92 : vector<1x2x32xf32> to vector<2x32xf32>
    %94 = vector.shape_cast %83 : vector<2x32xf32> to vector<1x2x32xf32>
    tpu.vector_store %arg14[%91, %c0_46, %c0_47], %94 {strides = array<i32>} : memref<5x2x32xf32, #tpu.memory_space<vmem>>, vector<1x2x32xf32>,
    %95 = arith.index_cast %c0_i32_28 : i32 to index
    %c0_48 = arith.constant 0 : index
    %c0_49 = arith.constant 0 : index
    %96 = vector.load %arg15[%95, %c0_48, %c0_49] : memref<5x2x32xf32, #tpu.memory_space<vmem>>, vector<1x2x32xf32>
    %97 = vector.shape_cast %96 : vector<1x2x32xf32> to vector<2x32xf32>
    %98 = vector.shape_cast %86 : vector<2x32xf32> to vector<1x2x32xf32>
    tpu.vector_store %arg15[%95, %c0_48, %c0_49], %98 {strides = array<i32>} : memref<5x2x32xf32, #tpu.memory_space<vmem>>, vector<1x2x32xf32>,
    %99 = arith.index_cast %c0_i32_28 : i32 to index
    %c0_50 = arith.constant 0 : index
    %c0_51 = arith.constant 0 : index
    %100 = vector.load %arg16[%99, %c0_50, %c0_51] : memref<5x2x10xf32, #tpu.memory_space<vmem>>, vector<1x2x10xf32>
    %101 = vector.shape_cast %100 : vector<1x2x10xf32> to vector<2x10xf32>
    %102 = vector.shape_cast %65 : vector<2x10xf32> to vector<1x2x10xf32>
    tpu.vector_store %arg16[%99, %c0_50, %c0_51], %102 {strides = array<i32>} : memref<5x2x10xf32, #tpu.memory_space<vmem>>, vector<1x2x10xf32>,
    %103 = arith.index_cast %c0_i32_28 : i32 to index
    %c0_52 = arith.constant 0 : index
    %c0_53 = arith.constant 0 : index
    %104 = vector.load %arg17[%103, %c0_52, %c0_53] : memref<5x2x7xf32, #tpu.memory_space<vmem>>, vector<1x2x7xf32>
    %105 = vector.shape_cast %104 : vector<1x2x7xf32> to vector<2x7xf32>
    %106 = vector.shape_cast %80 : vector<2x7xf32> to vector<1x2x7xf32>
    tpu.vector_store %arg17[%103, %c0_52, %c0_53], %106 {strides = array<i32>} : memref<5x2x7xf32, #tpu.memory_space<vmem>>, vector<1x2x7xf32>,
    %c1_i32 = arith.constant 1 : i32
    %107 = arith.index_cast %c1_i32 : i32 to index
    %c0_54 = arith.constant 0 : index
    %c0_55 = arith.constant 0 : index
    %108 = vector.load %arg1[%107, %c0_54, %c0_55] : memref<5x2x128xf32, #tpu.memory_space<vmem>>, vector<1x2x128xf32>
    %109 = vector.shape_cast %108 : vector<1x2x128xf32> to vector<2x128xf32>
    %cst_56 = arith.constant dense<0.000000e+00> : vector<2x128xf32>
    %110 = tpu.matmul %83, %11, %cst_56 {dimension_numbers = #tpu.dot_dimension_numbers<[1], [0], [0], [1], [0, 0, 1, 1], [], []>} : vector<2x32xf32>, vector<32x128xf32>, vector<2x128xf32> -> vector<2x128xf32>
    %111 = arith.addf %109, %110 : vector<2x128xf32>
    %cst_57 = arith.constant dense<0.000000e+00> : vector<2x128xf32>
    %112 = tpu.matmul %48, %12, %cst_57 {dimension_numbers = #tpu.dot_dimension_numbers<[1], [0], [0], [1], [0, 0, 1, 1], [], []>} : vector<2x32xf32>, vector<32x128xf32>, vector<2x128xf32> -> vector<2x128xf32>
    %113 = arith.addf %111, %112 : vector<2x128xf32>
    %114 = vector.extract_strided_slice %113 {offsets = [0, 0], sizes = [2, 32], strides = [1, 1]} : vector<2x128xf32> to vector<2x32xf32>
    %115 = arith.negf %114 : vector<2x32xf32>
    %116 = math.exp %115 : vector<2x32xf32>
    %cst_58 = arith.constant 1.000000e+00 : f32
    %117 = vector.broadcast %cst_58 : f32 to vector<2x32xf32>
    %118 = arith.addf %117, %116 : vector<2x32xf32>
    %119 = arith.divf %117, %118 : vector<2x32xf32>
    %120 = vector.extract_strided_slice %113 {offsets = [0, 32], sizes = [2, 32], strides = [1, 1]} : vector<2x128xf32> to vector<2x32xf32>
    %121 = arith.negf %120 : vector<2x32xf32>
    %122 = math.exp %121 : vector<2x32xf32>
    %cst_59 = arith.constant 1.000000e+00 : f32
    %123 = vector.broadcast %cst_59 : f32 to vector<2x32xf32>
    %124 = arith.addf %123, %122 : vector<2x32xf32>
    %125 = arith.divf %123, %124 : vector<2x32xf32>
    %126 = vector.extract_strided_slice %113 {offsets = [0, 64], sizes = [2, 32], strides = [1, 1]} : vector<2x128xf32> to vector<2x32xf32>
    %127 = math.tanh %126 : vector<2x32xf32>
    %128 = vector.extract_strided_slice %113 {offsets = [0, 96], sizes = [2, 32], strides = [1, 1]} : vector<2x128xf32> to vector<2x32xf32>
    %129 = arith.negf %128 : vector<2x32xf32>
    %130 = math.exp %129 : vector<2x32xf32>
    %cst_60 = arith.constant 1.000000e+00 : f32
    %131 = vector.broadcast %cst_60 : f32 to vector<2x32xf32>
    %132 = arith.addf %131, %130 : vector<2x32xf32>
    %133 = arith.divf %131, %132 : vector<2x32xf32>
    %134 = arith.mulf %125, %46 : vector<2x32xf32>
    %135 = arith.mulf %119, %127 : vector<2x32xf32>
    %136 = arith.addf %134, %135 : vector<2x32xf32>
    %137 = math.tanh %136 : vector<2x32xf32>
    %138 = arith.mulf %133, %137 : vector<2x32xf32>
    %139 = vector.shape_cast %138 : vector<2x32xf32> to vector<2x1x32xf32>
    %cst_61 = arith.constant dense<0.000000e+00> : vector<2x64xf32>
    %140 = tpu.matmul %138, %13, %cst_61 {dimension_numbers = #tpu.dot_dimension_numbers<[1], [0], [0], [1], [0, 0, 1, 1], [], []>} : vector<2x32xf32>, vector<32x64xf32>, vector<2x64xf32> -> vector<2x64xf32>
    "tpu.trace_start"() <{level = 10 : i32, message = "bqh,bsh->bqs"}> : () -> ()
    %cst_62 = arith.constant dense<0.000000e+00> : vector<2x1x10xf32>
    %141 = tpu.matmul %139, %3, %cst_62 {dimension_numbers = #tpu.dot_dimension_numbers<[2], [2], [1], [1], [0, 0, 0, 1, 1, 1], [0], [0]>} : vector<2x1x32xf32>, vector<2x10x32xf32>, vector<2x1x10xf32> -> vector<2x1x10xf32>
    "tpu.trace_stop"() : () -> ()
    %142 = arith.addf %141, %8 : vector<2x1x10xf32>
    %cst_63 = arith.constant dense<0xFF800000> : vector<2x1xf32>
    %143 = vector.multi_reduction <maximumf>, %142, %cst_63 [2] : vector<2x1x10xf32> to vector<2x1xf32>
    %144 = vector.shape_cast %143 : vector<2x1xf32> to vector<2x1x1xf32>
    %145 = vector.broadcast %144 : vector<2x1x1xf32> to vector<2x1x10xf32>
    %146 = arith.subf %142, %145 : vector<2x1x10xf32>
    %147 = math.exp %146 : vector<2x1x10xf32>
    %cst_64 = arith.constant dense<0.000000e+00> : vector<2x1xf32>
    %148 = vector.multi_reduction <add>, %147, %cst_64 [2] : vector<2x1x10xf32> to vector<2x1xf32>
    %149 = vector.shape_cast %148 : vector<2x1xf32> to vector<2x1x1xf32>
    %150 = tpu.reciprocal %149 {approx = true} : vector<2x1x1xf32> -> vector<2x1x1xf32>
    %151 = vector.broadcast %150 : vector<2x1x1xf32> to vector<2x1x10xf32>
    %152 = arith.mulf %147, %151 : vector<2x1x10xf32>
    "tpu.trace_start"() <{level = 10 : i32, message = "bqs,bsk->bqk"}> : () -> ()
    %cst_65 = arith.constant dense<0.000000e+00> : vector<2x1x32xf32>
    %153 = tpu.matmul %152, %4, %cst_65 {dimension_numbers = #tpu.dot_dimension_numbers<[2], [1], [1], [2], [0, 0, 0, 1, 1, 2], [0], [0]>} : vector<2x1x10xf32>, vector<2x10x32xf32>, vector<2x1x32xf32> -> vector<2x1x32xf32>
    "tpu.trace_stop"() : () -> ()
    %154 = vector.shape_cast %153 : vector<2x1x32xf32> to vector<2x32xf32>
    %155 = vector.shape_cast %152 : vector<2x1x10xf32> to vector<2x10xf32>
    "tpu.trace_start"() <{level = 10 : i32, message = "bqh,bsh->bqs"}> : () -> ()
    %cst_66 = arith.constant dense<0.000000e+00> : vector<2x1x7xf32>
    %156 = tpu.matmul %139, %5, %cst_66 {dimension_numbers = #tpu.dot_dimension_numbers<[2], [2], [1], [1], [0, 0, 0, 1, 1, 1], [0], [0]>} : vector<2x1x32xf32>, vector<2x7x32xf32>, vector<2x1x7xf32> -> vector<2x1x7xf32>
    "tpu.trace_stop"() : () -> ()
    %157 = arith.addf %156, %10 : vector<2x1x7xf32>
    %cst_67 = arith.constant dense<0xFF800000> : vector<2x1xf32>
    %158 = vector.multi_reduction <maximumf>, %157, %cst_67 [2] : vector<2x1x7xf32> to vector<2x1xf32>
    %159 = vector.shape_cast %158 : vector<2x1xf32> to vector<2x1x1xf32>
    %160 = vector.broadcast %159 : vector<2x1x1xf32> to vector<2x1x7xf32>
    %161 = arith.subf %157, %160 : vector<2x1x7xf32>
    %162 = math.exp %161 : vector<2x1x7xf32>
    %cst_68 = arith.constant dense<0.000000e+00> : vector<2x1xf32>
    %163 = vector.multi_reduction <add>, %162, %cst_68 [2] : vector<2x1x7xf32> to vector<2x1xf32>
    %164 = vector.shape_cast %163 : vector<2x1xf32> to vector<2x1x1xf32>
    %165 = tpu.reciprocal %164 {approx = true} : vector<2x1x1xf32> -> vector<2x1x1xf32>
    %166 = vector.broadcast %165 : vector<2x1x1xf32> to vector<2x1x7xf32>
    %167 = arith.mulf %162, %166 : vector<2x1x7xf32>
    "tpu.trace_start"() <{level = 10 : i32, message = "bqs,bsk->bqk"}> : () -> ()
    %cst_69 = arith.constant dense<0.000000e+00> : vector<2x1x32xf32>
    %168 = tpu.matmul %167, %6, %cst_69 {dimension_numbers = #tpu.dot_dimension_numbers<[2], [1], [1], [2], [0, 0, 0, 1, 1, 2], [0], [0]>} : vector<2x1x7xf32>, vector<2x7x32xf32>, vector<2x1x32xf32> -> vector<2x1x32xf32>
    "tpu.trace_stop"() : () -> ()
    %169 = vector.shape_cast %168 : vector<2x1x32xf32> to vector<2x32xf32>
    %170 = vector.shape_cast %167 : vector<2x1x7xf32> to vector<2x7xf32>
    %171 = vector.extract_strided_slice %140 {offsets = [0, 0], sizes = [2, 32], strides = [1, 1]} : vector<2x64xf32> to vector<2x32xf32>
    %172 = arith.addf %171, %154 : vector<2x32xf32>
    %173 = math.tanh %172 : vector<2x32xf32>
    %174 = vector.extract_strided_slice %140 {offsets = [0, 32], sizes = [2, 32], strides = [1, 1]} : vector<2x64xf32> to vector<2x32xf32>
    %175 = arith.addf %174, %169 : vector<2x32xf32>
    %176 = math.tanh %175 : vector<2x32xf32>
    %177 = arith.index_cast %c1_i32 : i32 to index
    %c0_70 = arith.constant 0 : index
    %c0_71 = arith.constant 0 : index
    %178 = vector.load %arg13[%177, %c0_70, %c0_71] : memref<5x2x32xf32, #tpu.memory_space<vmem>>, vector<1x2x32xf32>
    %179 = vector.shape_cast %178 : vector<1x2x32xf32> to vector<2x32xf32>
    %180 = vector.shape_cast %138 : vector<2x32xf32> to vector<1x2x32xf32>
    tpu.vector_store %arg13[%177, %c0_70, %c0_71], %180 {strides = array<i32>} : memref<5x2x32xf32, #tpu.memory_space<vmem>>, vector<1x2x32xf32>,
    %181 = arith.index_cast %c1_i32 : i32 to index
    %c0_72 = arith.constant 0 : index
    %c0_73 = arith.constant 0 : index
    %182 = vector.load %arg14[%181, %c0_72, %c0_73] : memref<5x2x32xf32, #tpu.memory_space<vmem>>, vector<1x2x32xf32>
    %183 = vector.shape_cast %182 : vector<1x2x32xf32> to vector<2x32xf32>
    %184 = vector.shape_cast %173 : vector<2x32xf32> to vector<1x2x32xf32>
    tpu.vector_store %arg14[%181, %c0_72, %c0_73], %184 {strides = array<i32>} : memref<5x2x32xf32, #tpu.memory_space<vmem>>, vector<1x2x32xf32>,
    %185 = arith.index_cast %c1_i32 : i32 to index
    %c0_74 = arith.constant 0 : index
    %c0_75 = arith.constant 0 : index
    %186 = vector.load %arg15[%185, %c0_74, %c0_75] : memref<5x2x32xf32, #tpu.memory_space<vmem>>, vector<1x2x32xf32>
    %187 = vector.shape_cast %186 : vector<1x2x32xf32> to vector<2x32xf32>
    %188 = vector.shape_cast %176 : vector<2x32xf32> to vector<1x2x32xf32>
    tpu.vector_store %arg15[%185, %c0_74, %c0_75], %188 {strides = array<i32>} : memref<5x2x32xf32, #tpu.memory_space<vmem>>, vector<1x2x32xf32>,
    %189 = arith.index_cast %c1_i32 : i32 to index
    %c0_76 = arith.constant 0 : index
    %c0_77 = arith.constant 0 : index
    %190 = vector.load %arg16[%189, %c0_76, %c0_77] : memref<5x2x10xf32, #tpu.memory_space<vmem>>, vector<1x2x10xf32>
    %191 = vector.shape_cast %190 : vector<1x2x10xf32> to vector<2x10xf32>
    %192 = vector.shape_cast %155 : vector<2x10xf32> to vector<1x2x10xf32>
    tpu.vector_store %arg16[%189, %c0_76, %c0_77], %192 {strides = array<i32>} : memref<5x2x10xf32, #tpu.memory_space<vmem>>, vector<1x2x10xf32>,
    %193 = arith.index_cast %c1_i32 : i32 to index
    %c0_78 = arith.constant 0 : index
    %c0_79 = arith.constant 0 : index
    %194 = vector.load %arg17[%193, %c0_78, %c0_79] : memref<5x2x7xf32, #tpu.memory_space<vmem>>, vector<1x2x7xf32>
    %195 = vector.shape_cast %194 : vector<1x2x7xf32> to vector<2x7xf32>
    %196 = vector.shape_cast %170 : vector<2x7xf32> to vector<1x2x7xf32>
    tpu.vector_store %arg17[%193, %c0_78, %c0_79], %196 {strides = array<i32>} : memref<5x2x7xf32, #tpu.memory_space<vmem>>, vector<1x2x7xf32>,
    %c2_i32 = arith.constant 2 : i32
    %197 = arith.index_cast %c2_i32 : i32 to index
    %c0_80 = arith.constant 0 : index
    %c0_81 = arith.constant 0 : index
    %198 = vector.load %arg1[%197, %c0_80, %c0_81] : memref<5x2x128xf32, #tpu.memory_space<vmem>>, vector<1x2x128xf32>
    %199 = vector.shape_cast %198 : vector<1x2x128xf32> to vector<2x128xf32>
    %cst_82 = arith.constant dense<0.000000e+00> : vector<2x128xf32>
    %200 = tpu.matmul %173, %11, %cst_82 {dimension_numbers = #tpu.dot_dimension_numbers<[1], [0], [0], [1], [0, 0, 1, 1], [], []>} : vector<2x32xf32>, vector<32x128xf32>, vector<2x128xf32> -> vector<2x128xf32>
    %201 = arith.addf %199, %200 : vector<2x128xf32>
    %cst_83 = arith.constant dense<0.000000e+00> : vector<2x128xf32>
    %202 = tpu.matmul %138, %12, %cst_83 {dimension_numbers = #tpu.dot_dimension_numbers<[1], [0], [0], [1], [0, 0, 1, 1], [], []>} : vector<2x32xf32>, vector<32x128xf32>, vector<2x128xf32> -> vector<2x128xf32>
    %203 = arith.addf %201, %202 : vector<2x128xf32>
    %204 = vector.extract_strided_slice %203 {offsets = [0, 0], sizes = [2, 32], strides = [1, 1]} : vector<2x128xf32> to vector<2x32xf32>
    %205 = arith.negf %204 : vector<2x32xf32>
    %206 = math.exp %205 : vector<2x32xf32>
    %cst_84 = arith.constant 1.000000e+00 : f32
    %207 = vector.broadcast %cst_84 : f32 to vector<2x32xf32>
    %208 = arith.addf %207, %206 : vector<2x32xf32>
    %209 = arith.divf %207, %208 : vector<2x32xf32>
    %210 = vector.extract_strided_slice %203 {offsets = [0, 32], sizes = [2, 32], strides = [1, 1]} : vector<2x128xf32> to vector<2x32xf32>
    %211 = arith.negf %210 : vector<2x32xf32>
    %212 = math.exp %211 : vector<2x32xf32>
    %cst_85 = arith.constant 1.000000e+00 : f32
    %213 = vector.broadcast %cst_85 : f32 to vector<2x32xf32>
    %214 = arith.addf %213, %212 : vector<2x32xf32>
    %215 = arith.divf %213, %214 : vector<2x32xf32>
    %216 = vector.extract_strided_slice %203 {offsets = [0, 64], sizes = [2, 32], strides = [1, 1]} : vector<2x128xf32> to vector<2x32xf32>
    %217 = math.tanh %216 : vector<2x32xf32>
    %218 = vector.extract_strided_slice %203 {offsets = [0, 96], sizes = [2, 32], strides = [1, 1]} : vector<2x128xf32> to vector<2x32xf32>
    %219 = arith.negf %218 : vector<2x32xf32>
    %220 = math.exp %219 : vector<2x32xf32>
    %cst_86 = arith.constant 1.000000e+00 : f32
    %221 = vector.broadcast %cst_86 : f32 to vector<2x32xf32>
    %222 = arith.addf %221, %220 : vector<2x32xf32>
    %223 = arith.divf %221, %222 : vector<2x32xf32>
    %224 = arith.mulf %215, %136 : vector<2x32xf32>
    %225 = arith.mulf %209, %217 : vector<2x32xf32>
    %226 = arith.addf %224, %225 : vector<2x32xf32>
    %227 = math.tanh %226 : vector<2x32xf32>
    %228 = arith.mulf %223, %227 : vector<2x32xf32>
    %229 = vector.shape_cast %228 : vector<2x32xf32> to vector<2x1x32xf32>
    %cst_87 = arith.constant dense<0.000000e+00> : vector<2x64xf32>
    %230 = tpu.matmul %228, %13, %cst_87 {dimension_numbers = #tpu.dot_dimension_numbers<[1], [0], [0], [1], [0, 0, 1, 1], [], []>} : vector<2x32xf32>, vector<32x64xf32>, vector<2x64xf32> -> vector<2x64xf32>
    "tpu.trace_start"() <{level = 10 : i32, message = "bqh,bsh->bqs"}> : () -> ()
    %cst_88 = arith.constant dense<0.000000e+00> : vector<2x1x10xf32>
    %231 = tpu.matmul %229, %3, %cst_88 {dimension_numbers = #tpu.dot_dimension_numbers<[2], [2], [1], [1], [0, 0, 0, 1, 1, 1], [0], [0]>} : vector<2x1x32xf32>, vector<2x10x32xf32>, vector<2x1x10xf32> -> vector<2x1x10xf32>
    "tpu.trace_stop"() : () -> ()
    %232 = arith.addf %231, %8 : vector<2x1x10xf32>
    %cst_89 = arith.constant dense<0xFF800000> : vector<2x1xf32>
    %233 = vector.multi_reduction <maximumf>, %232, %cst_89 [2] : vector<2x1x10xf32> to vector<2x1xf32>
    %234 = vector.shape_cast %233 : vector<2x1xf32> to vector<2x1x1xf32>
    %235 = vector.broadcast %234 : vector<2x1x1xf32> to vector<2x1x10xf32>
    %236 = arith.subf %232, %235 : vector<2x1x10xf32>
    %237 = math.exp %236 : vector<2x1x10xf32>
    %cst_90 = arith.constant dense<0.000000e+00> : vector<2x1xf32>
    %238 = vector.multi_reduction <add>, %237, %cst_90 [2] : vector<2x1x10xf32> to vector<2x1xf32>
    %239 = vector.shape_cast %238 : vector<2x1xf32> to vector<2x1x1xf32>
    %240 = tpu.reciprocal %239 {approx = true} : vector<2x1x1xf32> -> vector<2x1x1xf32>
    %241 = vector.broadcast %240 : vector<2x1x1xf32> to vector<2x1x10xf32>
    %242 = arith.mulf %237, %241 : vector<2x1x10xf32>
    "tpu.trace_start"() <{level = 10 : i32, message = "bqs,bsk->bqk"}> : () -> ()
    %cst_91 = arith.constant dense<0.000000e+00> : vector<2x1x32xf32>
    %243 = tpu.matmul %242, %4, %cst_91 {dimension_numbers = #tpu.dot_dimension_numbers<[2], [1], [1], [2], [0, 0, 0, 1, 1, 2], [0], [0]>} : vector<2x1x10xf32>, vector<2x10x32xf32>, vector<2x1x32xf32> -> vector<2x1x32xf32>
    "tpu.trace_stop"() : () -> ()
    %244 = vector.shape_cast %243 : vector<2x1x32xf32> to vector<2x32xf32>
    %245 = vector.shape_cast %242 : vector<2x1x10xf32> to vector<2x10xf32>
    "tpu.trace_start"() <{level = 10 : i32, message = "bqh,bsh->bqs"}> : () -> ()
    %cst_92 = arith.constant dense<0.000000e+00> : vector<2x1x7xf32>
    %246 = tpu.matmul %229, %5, %cst_92 {dimension_numbers = #tpu.dot_dimension_numbers<[2], [2], [1], [1], [0, 0, 0, 1, 1, 1], [0], [0]>} : vector<2x1x32xf32>, vector<2x7x32xf32>, vector<2x1x7xf32> -> vector<2x1x7xf32>
    "tpu.trace_stop"() : () -> ()
    %247 = arith.addf %246, %10 : vector<2x1x7xf32>
    %cst_93 = arith.constant dense<0xFF800000> : vector<2x1xf32>
    %248 = vector.multi_reduction <maximumf>, %247, %cst_93 [2] : vector<2x1x7xf32> to vector<2x1xf32>
    %249 = vector.shape_cast %248 : vector<2x1xf32> to vector<2x1x1xf32>
    %250 = vector.broadcast %249 : vector<2x1x1xf32> to vector<2x1x7xf32>
    %251 = arith.subf %247, %250 : vector<2x1x7xf32>
    %252 = math.exp %251 : vector<2x1x7xf32>
    %cst_94 = arith.constant dense<0.000000e+00> : vector<2x1xf32>
    %253 = vector.multi_reduction <add>, %252, %cst_94 [2] : vector<2x1x7xf32> to vector<2x1xf32>
    %254 = vector.shape_cast %253 : vector<2x1xf32> to vector<2x1x1xf32>
    %255 = tpu.reciprocal %254 {approx = true} : vector<2x1x1xf32> -> vector<2x1x1xf32>
    %256 = vector.broadcast %255 : vector<2x1x1xf32> to vector<2x1x7xf32>
    %257 = arith.mulf %252, %256 : vector<2x1x7xf32>
    "tpu.trace_start"() <{level = 10 : i32, message = "bqs,bsk->bqk"}> : () -> ()
    %cst_95 = arith.constant dense<0.000000e+00> : vector<2x1x32xf32>
    %258 = tpu.matmul %257, %6, %cst_95 {dimension_numbers = #tpu.dot_dimension_numbers<[2], [1], [1], [2], [0, 0, 0, 1, 1, 2], [0], [0]>} : vector<2x1x7xf32>, vector<2x7x32xf32>, vector<2x1x32xf32> -> vector<2x1x32xf32>
    "tpu.trace_stop"() : () -> ()
    %259 = vector.shape_cast %258 : vector<2x1x32xf32> to vector<2x32xf32>
    %260 = vector.shape_cast %257 : vector<2x1x7xf32> to vector<2x7xf32>
    %261 = vector.extract_strided_slice %230 {offsets = [0, 0], sizes = [2, 32], strides = [1, 1]} : vector<2x64xf32> to vector<2x32xf32>
    %262 = arith.addf %261, %244 : vector<2x32xf32>
    %263 = math.tanh %262 : vector<2x32xf32>
    %264 = vector.extract_strided_slice %230 {offsets = [0, 32], sizes = [2, 32], strides = [1, 1]} : vector<2x64xf32> to vector<2x32xf32>
    %265 = arith.addf %264, %259 : vector<2x32xf32>
    %266 = math.tanh %265 : vector<2x32xf32>
    %267 = arith.index_cast %c2_i32 : i32 to index
    %c0_96 = arith.constant 0 : index
    %c0_97 = arith.constant 0 : index
    %268 = vector.load %arg13[%267, %c0_96, %c0_97] : memref<5x2x32xf32, #tpu.memory_space<vmem>>, vector<1x2x32xf32>
    %269 = vector.shape_cast %268 : vector<1x2x32xf32> to vector<2x32xf32>
    %270 = vector.shape_cast %228 : vector<2x32xf32> to vector<1x2x32xf32>
    tpu.vector_store %arg13[%267, %c0_96, %c0_97], %270 {strides = array<i32>} : memref<5x2x32xf32, #tpu.memory_space<vmem>>, vector<1x2x32xf32>,
    %271 = arith.index_cast %c2_i32 : i32 to index
    %c0_98 = arith.constant 0 : index
    %c0_99 = arith.constant 0 : index
    %272 = vector.load %arg14[%271, %c0_98, %c0_99] : memref<5x2x32xf32, #tpu.memory_space<vmem>>, vector<1x2x32xf32>
    %273 = vector.shape_cast %272 : vector<1x2x32xf32> to vector<2x32xf32>
    %274 = vector.shape_cast %263 : vector<2x32xf32> to vector<1x2x32xf32>
    tpu.vector_store %arg14[%271, %c0_98, %c0_99], %274 {strides = array<i32>} : memref<5x2x32xf32, #tpu.memory_space<vmem>>, vector<1x2x32xf32>,
    %275 = arith.index_cast %c2_i32 : i32 to index
    %c0_100 = arith.constant 0 : index
    %c0_101 = arith.constant 0 : index
    %276 = vector.load %arg15[%275, %c0_100, %c0_101] : memref<5x2x32xf32, #tpu.memory_space<vmem>>, vector<1x2x32xf32>
    %277 = vector.shape_cast %276 : vector<1x2x32xf32> to vector<2x32xf32>
    %278 = vector.shape_cast %266 : vector<2x32xf32> to vector<1x2x32xf32>
    tpu.vector_store %arg15[%275, %c0_100, %c0_101], %278 {strides = array<i32>} : memref<5x2x32xf32, #tpu.memory_space<vmem>>, vector<1x2x32xf32>,
    %279 = arith.index_cast %c2_i32 : i32 to index
    %c0_102 = arith.constant 0 : index
    %c0_103 = arith.constant 0 : index
    %280 = vector.load %arg16[%279, %c0_102, %c0_103] : memref<5x2x10xf32, #tpu.memory_space<vmem>>, vector<1x2x10xf32>
    %281 = vector.shape_cast %280 : vector<1x2x10xf32> to vector<2x10xf32>
    %282 = vector.shape_cast %245 : vector<2x10xf32> to vector<1x2x10xf32>
    tpu.vector_store %arg16[%279, %c0_102, %c0_103], %282 {strides = array<i32>} : memref<5x2x10xf32, #tpu.memory_space<vmem>>, vector<1x2x10xf32>,
    %283 = arith.index_cast %c2_i32 : i32 to index
    %c0_104 = arith.constant 0 : index
    %c0_105 = arith.constant 0 : index
    %284 = vector.load %arg17[%283, %c0_104, %c0_105] : memref<5x2x7xf32, #tpu.memory_space<vmem>>, vector<1x2x7xf32>
    %285 = vector.shape_cast %284 : vector<1x2x7xf32> to vector<2x7xf32>
    %286 = vector.shape_cast %260 : vector<2x7xf32> to vector<1x2x7xf32>
    tpu.vector_store %arg17[%283, %c0_104, %c0_105], %286 {strides = array<i32>} : memref<5x2x7xf32, #tpu.memory_space<vmem>>, vector<1x2x7xf32>,
    %c3_i32 = arith.constant 3 : i32
    %287 = arith.index_cast %c3_i32 : i32 to index
    %c0_106 = arith.constant 0 : index
    %c0_107 = arith.constant 0 : index
    %288 = vector.load %arg1[%287, %c0_106, %c0_107] : memref<5x2x128xf32, #tpu.memory_space<vmem>>, vector<1x2x128xf32>
    %289 = vector.shape_cast %288 : vector<1x2x128xf32> to vector<2x128xf32>
    %cst_108 = arith.constant dense<0.000000e+00> : vector<2x128xf32>
    %290 = tpu.matmul %263, %11, %cst_108 {dimension_numbers = #tpu.dot_dimension_numbers<[1], [0], [0], [1], [0, 0, 1, 1], [], []>} : vector<2x32xf32>, vector<32x128xf32>, vector<2x128xf32> -> vector<2x128xf32>
    %291 = arith.addf %289, %290 : vector<2x128xf32>
    %cst_109 = arith.constant dense<0.000000e+00> : vector<2x128xf32>
    %292 = tpu.matmul %228, %12, %cst_109 {dimension_numbers = #tpu.dot_dimension_numbers<[1], [0], [0], [1], [0, 0, 1, 1], [], []>} : vector<2x32xf32>, vector<32x128xf32>, vector<2x128xf32> -> vector<2x128xf32>
    %293 = arith.addf %291, %292 : vector<2x128xf32>
    %294 = vector.extract_strided_slice %293 {offsets = [0, 0], sizes = [2, 32], strides = [1, 1]} : vector<2x128xf32> to vector<2x32xf32>
    %295 = arith.negf %294 : vector<2x32xf32>
    %296 = math.exp %295 : vector<2x32xf32>
    %cst_110 = arith.constant 1.000000e+00 : f32
    %297 = vector.broadcast %cst_110 : f32 to vector<2x32xf32>
    %298 = arith.addf %297, %296 : vector<2x32xf32>
    %299 = arith.divf %297, %298 : vector<2x32xf32>
    %300 = vector.extract_strided_slice %293 {offsets = [0, 32], sizes = [2, 32], strides = [1, 1]} : vector<2x128xf32> to vector<2x32xf32>
    %301 = arith.negf %300 : vector<2x32xf32>
    %302 = math.exp %301 : vector<2x32xf32>
    %cst_111 = arith.constant 1.000000e+00 : f32
    %303 = vector.broadcast %cst_111 : f32 to vector<2x32xf32>
    %304 = arith.addf %303, %302 : vector<2x32xf32>
    %305 = arith.divf %303, %304 : vector<2x32xf32>
    %306 = vector.extract_strided_slice %293 {offsets = [0, 64], sizes = [2, 32], strides = [1, 1]} : vector<2x128xf32> to vector<2x32xf32>
    %307 = math.tanh %306 : vector<2x32xf32>
    %308 = vector.extract_strided_slice %293 {offsets = [0, 96], sizes = [2, 32], strides = [1, 1]} : vector<2x128xf32> to vector<2x32xf32>
    %309 = arith.negf %308 : vector<2x32xf32>
    %310 = math.exp %309 : vector<2x32xf32>
    %cst_112 = arith.constant 1.000000e+00 : f32
    %311 = vector.broadcast %cst_112 : f32 to vector<2x32xf32>
    %312 = arith.addf %311, %310 : vector<2x32xf32>
    %313 = arith.divf %311, %312 : vector<2x32xf32>
    %314 = arith.mulf %305, %226 : vector<2x32xf32>
    %315 = arith.mulf %299, %307 : vector<2x32xf32>
    %316 = arith.addf %314, %315 : vector<2x32xf32>
    %317 = math.tanh %316 : vector<2x32xf32>
    %318 = arith.mulf %313, %317 : vector<2x32xf32>
    %319 = vector.shape_cast %318 : vector<2x32xf32> to vector<2x1x32xf32>
    %cst_113 = arith.constant dense<0.000000e+00> : vector<2x64xf32>
    %320 = tpu.matmul %318, %13, %cst_113 {dimension_numbers = #tpu.dot_dimension_numbers<[1], [0], [0], [1], [0, 0, 1, 1], [], []>} : vector<2x32xf32>, vector<32x64xf32>, vector<2x64xf32> -> vector<2x64xf32>
    "tpu.trace_start"() <{level = 10 : i32, message = "bqh,bsh->bqs"}> : () -> ()
    %cst_114 = arith.constant dense<0.000000e+00> : vector<2x1x10xf32>
    %321 = tpu.matmul %319, %3, %cst_114 {dimension_numbers = #tpu.dot_dimension_numbers<[2], [2], [1], [1], [0, 0, 0, 1, 1, 1], [0], [0]>} : vector<2x1x32xf32>, vector<2x10x32xf32>, vector<2x1x10xf32> -> vector<2x1x10xf32>
    "tpu.trace_stop"() : () -> ()
    %322 = arith.addf %321, %8 : vector<2x1x10xf32>
    %cst_115 = arith.constant dense<0xFF800000> : vector<2x1xf32>
    %323 = vector.multi_reduction <maximumf>, %322, %cst_115 [2] : vector<2x1x10xf32> to vector<2x1xf32>
    %324 = vector.shape_cast %323 : vector<2x1xf32> to vector<2x1x1xf32>
    %325 = vector.broadcast %324 : vector<2x1x1xf32> to vector<2x1x10xf32>
    %326 = arith.subf %322, %325 : vector<2x1x10xf32>
    %327 = math.exp %326 : vector<2x1x10xf32>
    %cst_116 = arith.constant dense<0.000000e+00> : vector<2x1xf32>
    %328 = vector.multi_reduction <add>, %327, %cst_116 [2] : vector<2x1x10xf32> to vector<2x1xf32>
    %329 = vector.shape_cast %328 : vector<2x1xf32> to vector<2x1x1xf32>
    %330 = tpu.reciprocal %329 {approx = true} : vector<2x1x1xf32> -> vector<2x1x1xf32>
    %331 = vector.broadcast %330 : vector<2x1x1xf32> to vector<2x1x10xf32>
    %332 = arith.mulf %327, %331 : vector<2x1x10xf32>
    "tpu.trace_start"() <{level = 10 : i32, message = "bqs,bsk->bqk"}> : () -> ()
    %cst_117 = arith.constant dense<0.000000e+00> : vector<2x1x32xf32>
    %333 = tpu.matmul %332, %4, %cst_117 {dimension_numbers = #tpu.dot_dimension_numbers<[2], [1], [1], [2], [0, 0, 0, 1, 1, 2], [0], [0]>} : vector<2x1x10xf32>, vector<2x10x32xf32>, vector<2x1x32xf32> -> vector<2x1x32xf32>
    "tpu.trace_stop"() : () -> ()
    %334 = vector.shape_cast %333 : vector<2x1x32xf32> to vector<2x32xf32>
    %335 = vector.shape_cast %332 : vector<2x1x10xf32> to vector<2x10xf32>
    "tpu.trace_start"() <{level = 10 : i32, message = "bqh,bsh->bqs"}> : () -> ()
    %cst_118 = arith.constant dense<0.000000e+00> : vector<2x1x7xf32>
    %336 = tpu.matmul %319, %5, %cst_118 {dimension_numbers = #tpu.dot_dimension_numbers<[2], [2], [1], [1], [0, 0, 0, 1, 1, 1], [0], [0]>} : vector<2x1x32xf32>, vector<2x7x32xf32>, vector<2x1x7xf32> -> vector<2x1x7xf32>
    "tpu.trace_stop"() : () -> ()
    %337 = arith.addf %336, %10 : vector<2x1x7xf32>
    %cst_119 = arith.constant dense<0xFF800000> : vector<2x1xf32>
    %338 = vector.multi_reduction <maximumf>, %337, %cst_119 [2] : vector<2x1x7xf32> to vector<2x1xf32>
    %339 = vector.shape_cast %338 : vector<2x1xf32> to vector<2x1x1xf32>
    %340 = vector.broadcast %339 : vector<2x1x1xf32> to vector<2x1x7xf32>
    %341 = arith.subf %337, %340 : vector<2x1x7xf32>
    %342 = math.exp %341 : vector<2x1x7xf32>
    %cst_120 = arith.constant dense<0.000000e+00> : vector<2x1xf32>
    %343 = vector.multi_reduction <add>, %342, %cst_120 [2] : vector<2x1x7xf32> to vector<2x1xf32>
    %344 = vector.shape_cast %343 : vector<2x1xf32> to vector<2x1x1xf32>
    %345 = tpu.reciprocal %344 {approx = true} : vector<2x1x1xf32> -> vector<2x1x1xf32>
    %346 = vector.broadcast %345 : vector<2x1x1xf32> to vector<2x1x7xf32>
    %347 = arith.mulf %342, %346 : vector<2x1x7xf32>
    "tpu.trace_start"() <{level = 10 : i32, message = "bqs,bsk->bqk"}> : () -> ()
    %cst_121 = arith.constant dense<0.000000e+00> : vector<2x1x32xf32>
    %348 = tpu.matmul %347, %6, %cst_121 {dimension_numbers = #tpu.dot_dimension_numbers<[2], [1], [1], [2], [0, 0, 0, 1, 1, 2], [0], [0]>} : vector<2x1x7xf32>, vector<2x7x32xf32>, vector<2x1x32xf32> -> vector<2x1x32xf32>
    "tpu.trace_stop"() : () -> ()
    %349 = vector.shape_cast %348 : vector<2x1x32xf32> to vector<2x32xf32>
    %350 = vector.shape_cast %347 : vector<2x1x7xf32> to vector<2x7xf32>
    %351 = vector.extract_strided_slice %320 {offsets = [0, 0], sizes = [2, 32], strides = [1, 1]} : vector<2x64xf32> to vector<2x32xf32>
    %352 = arith.addf %351, %334 : vector<2x32xf32>
    %353 = math.tanh %352 : vector<2x32xf32>
    %354 = vector.extract_strided_slice %320 {offsets = [0, 32], sizes = [2, 32], strides = [1, 1]} : vector<2x64xf32> to vector<2x32xf32>
    %355 = arith.addf %354, %349 : vector<2x32xf32>
    %356 = math.tanh %355 : vector<2x32xf32>
    %357 = arith.index_cast %c3_i32 : i32 to index
    %c0_122 = arith.constant 0 : index
    %c0_123 = arith.constant 0 : index
    %358 = vector.load %arg13[%357, %c0_122, %c0_123] : memref<5x2x32xf32, #tpu.memory_space<vmem>>, vector<1x2x32xf32>
    %359 = vector.shape_cast %358 : vector<1x2x32xf32> to vector<2x32xf32>
    %360 = vector.shape_cast %318 : vector<2x32xf32> to vector<1x2x32xf32>
    tpu.vector_store %arg13[%357, %c0_122, %c0_123], %360 {strides = array<i32>} : memref<5x2x32xf32, #tpu.memory_space<vmem>>, vector<1x2x32xf32>,
    %361 = arith.index_cast %c3_i32 : i32 to index
    %c0_124 = arith.constant 0 : index
    %c0_125 = arith.constant 0 : index
    %362 = vector.load %arg14[%361, %c0_124, %c0_125] : memref<5x2x32xf32, #tpu.memory_space<vmem>>, vector<1x2x32xf32>
    %363 = vector.shape_cast %362 : vector<1x2x32xf32> to vector<2x32xf32>
    %364 = vector.shape_cast %353 : vector<2x32xf32> to vector<1x2x32xf32>
    tpu.vector_store %arg14[%361, %c0_124, %c0_125], %364 {strides = array<i32>} : memref<5x2x32xf32, #tpu.memory_space<vmem>>, vector<1x2x32xf32>,
    %365 = arith.index_cast %c3_i32 : i32 to index
    %c0_126 = arith.constant 0 : index
    %c0_127 = arith.constant 0 : index
    %366 = vector.load %arg15[%365, %c0_126, %c0_127] : memref<5x2x32xf32, #tpu.memory_space<vmem>>, vector<1x2x32xf32>
    %367 = vector.shape_cast %366 : vector<1x2x32xf32> to vector<2x32xf32>
    %368 = vector.shape_cast %356 : vector<2x32xf32> to vector<1x2x32xf32>
    tpu.vector_store %arg15[%365, %c0_126, %c0_127], %368 {strides = array<i32>} : memref<5x2x32xf32, #tpu.memory_space<vmem>>, vector<1x2x32xf32>,
    %369 = arith.index_cast %c3_i32 : i32 to index
    %c0_128 = arith.constant 0 : index
    %c0_129 = arith.constant 0 : index
    %370 = vector.load %arg16[%369, %c0_128, %c0_129] : memref<5x2x10xf32, #tpu.memory_space<vmem>>, vector<1x2x10xf32>
    %371 = vector.shape_cast %370 : vector<1x2x10xf32> to vector<2x10xf32>
    %372 = vector.shape_cast %335 : vector<2x10xf32> to vector<1x2x10xf32>
    tpu.vector_store %arg16[%369, %c0_128, %c0_129], %372 {strides = array<i32>} : memref<5x2x10xf32, #tpu.memory_space<vmem>>, vector<1x2x10xf32>,
    %373 = arith.index_cast %c3_i32 : i32 to index
    %c0_130 = arith.constant 0 : index
    %c0_131 = arith.constant 0 : index
    %374 = vector.load %arg17[%373, %c0_130, %c0_131] : memref<5x2x7xf32, #tpu.memory_space<vmem>>, vector<1x2x7xf32>
    %375 = vector.shape_cast %374 : vector<1x2x7xf32> to vector<2x7xf32>
    %376 = vector.shape_cast %350 : vector<2x7xf32> to vector<1x2x7xf32>
    tpu.vector_store %arg17[%373, %c0_130, %c0_131], %376 {strides = array<i32>} : memref<5x2x7xf32, #tpu.memory_space<vmem>>, vector<1x2x7xf32>,
    %c4_i32 = arith.constant 4 : i32
    %377 = arith.index_cast %c4_i32 : i32 to index
    %c0_132 = arith.constant 0 : index
    %c0_133 = arith.constant 0 : index
    %378 = vector.load %arg1[%377, %c0_132, %c0_133] : memref<5x2x128xf32, #tpu.memory_space<vmem>>, vector<1x2x128xf32>
    %379 = vector.shape_cast %378 : vector<1x2x128xf32> to vector<2x128xf32>
    %cst_134 = arith.constant dense<0.000000e+00> : vector<2x128xf32>
    %380 = tpu.matmul %353, %11, %cst_134 {dimension_numbers = #tpu.dot_dimension_numbers<[1], [0], [0], [1], [0, 0, 1, 1], [], []>} : vector<2x32xf32>, vector<32x128xf32>, vector<2x128xf32> -> vector<2x128xf32>
    %381 = arith.addf %379, %380 : vector<2x128xf32>
    %cst_135 = arith.constant dense<0.000000e+00> : vector<2x128xf32>
    %382 = tpu.matmul %318, %12, %cst_135 {dimension_numbers = #tpu.dot_dimension_numbers<[1], [0], [0], [1], [0, 0, 1, 1], [], []>} : vector<2x32xf32>, vector<32x128xf32>, vector<2x128xf32> -> vector<2x128xf32>
    %383 = arith.addf %381, %382 : vector<2x128xf32>
    %384 = vector.extract_strided_slice %383 {offsets = [0, 0], sizes = [2, 32], strides = [1, 1]} : vector<2x128xf32> to vector<2x32xf32>
    %385 = arith.negf %384 : vector<2x32xf32>
    %386 = math.exp %385 : vector<2x32xf32>
    %cst_136 = arith.constant 1.000000e+00 : f32
    %387 = vector.broadcast %cst_136 : f32 to vector<2x32xf32>
    %388 = arith.addf %387, %386 : vector<2x32xf32>
    %389 = arith.divf %387, %388 : vector<2x32xf32>
    %390 = vector.extract_strided_slice %383 {offsets = [0, 32], sizes = [2, 32], strides = [1, 1]} : vector<2x128xf32> to vector<2x32xf32>
    %391 = arith.negf %390 : vector<2x32xf32>
    %392 = math.exp %391 : vector<2x32xf32>
    %cst_137 = arith.constant 1.000000e+00 : f32
    %393 = vector.broadcast %cst_137 : f32 to vector<2x32xf32>
    %394 = arith.addf %393, %392 : vector<2x32xf32>
    %395 = arith.divf %393, %394 : vector<2x32xf32>
    %396 = vector.extract_strided_slice %383 {offsets = [0, 64], sizes = [2, 32], strides = [1, 1]} : vector<2x128xf32> to vector<2x32xf32>
    %397 = math.tanh %396 : vector<2x32xf32>
    %398 = vector.extract_strided_slice %383 {offsets = [0, 96], sizes = [2, 32], strides = [1, 1]} : vector<2x128xf32> to vector<2x32xf32>
    %399 = arith.negf %398 : vector<2x32xf32>
    %400 = math.exp %399 : vector<2x32xf32>
    %cst_138 = arith.constant 1.000000e+00 : f32
    %401 = vector.broadcast %cst_138 : f32 to vector<2x32xf32>
    %402 = arith.addf %401, %400 : vector<2x32xf32>
    %403 = arith.divf %401, %402 : vector<2x32xf32>
    %404 = arith.mulf %395, %316 : vector<2x32xf32>
    %405 = arith.mulf %389, %397 : vector<2x32xf32>
    %406 = arith.addf %404, %405 : vector<2x32xf32>
    %407 = math.tanh %406 : vector<2x32xf32>
    %408 = arith.mulf %403, %407 : vector<2x32xf32>
    %409 = vector.shape_cast %408 : vector<2x32xf32> to vector<2x1x32xf32>
    %cst_139 = arith.constant dense<0.000000e+00> : vector<2x64xf32>
    %410 = tpu.matmul %408, %13, %cst_139 {dimension_numbers = #tpu.dot_dimension_numbers<[1], [0], [0], [1], [0, 0, 1, 1], [], []>} : vector<2x32xf32>, vector<32x64xf32>, vector<2x64xf32> -> vector<2x64xf32>
    "tpu.trace_start"() <{level = 10 : i32, message = "bqh,bsh->bqs"}> : () -> ()
    %cst_140 = arith.constant dense<0.000000e+00> : vector<2x1x10xf32>
    %411 = tpu.matmul %409, %3, %cst_140 {dimension_numbers = #tpu.dot_dimension_numbers<[2], [2], [1], [1], [0, 0, 0, 1, 1, 1], [0], [0]>} : vector<2x1x32xf32>, vector<2x10x32xf32>, vector<2x1x10xf32> -> vector<2x1x10xf32>
    "tpu.trace_stop"() : () -> ()
    %412 = arith.addf %411, %8 : vector<2x1x10xf32>
    %cst_141 = arith.constant dense<0xFF800000> : vector<2x1xf32>
    %413 = vector.multi_reduction <maximumf>, %412, %cst_141 [2] : vector<2x1x10xf32> to vector<2x1xf32>
    %414 = vector.shape_cast %413 : vector<2x1xf32> to vector<2x1x1xf32>
    %415 = vector.broadcast %414 : vector<2x1x1xf32> to vector<2x1x10xf32>
    %416 = arith.subf %412, %415 : vector<2x1x10xf32>
    %417 = math.exp %416 : vector<2x1x10xf32>
    %cst_142 = arith.constant dense<0.000000e+00> : vector<2x1xf32>
    %418 = vector.multi_reduction <add>, %417, %cst_142 [2] : vector<2x1x10xf32> to vector<2x1xf32>
    %419 = vector.shape_cast %418 : vector<2x1xf32> to vector<2x1x1xf32>
    %420 = tpu.reciprocal %419 {approx = true} : vector<2x1x1xf32> -> vector<2x1x1xf32>
    %421 = vector.broadcast %420 : vector<2x1x1xf32> to vector<2x1x10xf32>
    %422 = arith.mulf %417, %421 : vector<2x1x10xf32>
    "tpu.trace_start"() <{level = 10 : i32, message = "bqs,bsk->bqk"}> : () -> ()
    %cst_143 = arith.constant dense<0.000000e+00> : vector<2x1x32xf32>
    %423 = tpu.matmul %422, %4, %cst_143 {dimension_numbers = #tpu.dot_dimension_numbers<[2], [1], [1], [2], [0, 0, 0, 1, 1, 2], [0], [0]>} : vector<2x1x10xf32>, vector<2x10x32xf32>, vector<2x1x32xf32> -> vector<2x1x32xf32>
    "tpu.trace_stop"() : () -> ()
    %424 = vector.shape_cast %423 : vector<2x1x32xf32> to vector<2x32xf32>
    %425 = vector.shape_cast %422 : vector<2x1x10xf32> to vector<2x10xf32>
    "tpu.trace_start"() <{level = 10 : i32, message = "bqh,bsh->bqs"}> : () -> ()
    %cst_144 = arith.constant dense<0.000000e+00> : vector<2x1x7xf32>
    %426 = tpu.matmul %409, %5, %cst_144 {dimension_numbers = #tpu.dot_dimension_numbers<[2], [2], [1], [1], [0, 0, 0, 1, 1, 1], [0], [0]>} : vector<2x1x32xf32>, vector<2x7x32xf32>, vector<2x1x7xf32> -> vector<2x1x7xf32>
    "tpu.trace_stop"() : () -> ()
    %427 = arith.addf %426, %10 : vector<2x1x7xf32>
    %cst_145 = arith.constant dense<0xFF800000> : vector<2x1xf32>
    %428 = vector.multi_reduction <maximumf>, %427, %cst_145 [2] : vector<2x1x7xf32> to vector<2x1xf32>
    %429 = vector.shape_cast %428 : vector<2x1xf32> to vector<2x1x1xf32>
    %430 = vector.broadcast %429 : vector<2x1x1xf32> to vector<2x1x7xf32>
    %431 = arith.subf %427, %430 : vector<2x1x7xf32>
    %432 = math.exp %431 : vector<2x1x7xf32>
    %cst_146 = arith.constant dense<0.000000e+00> : vector<2x1xf32>
    %433 = vector.multi_reduction <add>, %432, %cst_146 [2] : vector<2x1x7xf32> to vector<2x1xf32>
    %434 = vector.shape_cast %433 : vector<2x1xf32> to vector<2x1x1xf32>
    %435 = tpu.reciprocal %434 {approx = true} : vector<2x1x1xf32> -> vector<2x1x1xf32>
    %436 = vector.broadcast %435 : vector<2x1x1xf32> to vector<2x1x7xf32>
    %437 = arith.mulf %432, %436 : vector<2x1x7xf32>
    "tpu.trace_start"() <{level = 10 : i32, message = "bqs,bsk->bqk"}> : () -> ()
    %cst_147 = arith.constant dense<0.000000e+00> : vector<2x1x32xf32>
    %438 = tpu.matmul %437, %6, %cst_147 {dimension_numbers = #tpu.dot_dimension_numbers<[2], [1], [1], [2], [0, 0, 0, 1, 1, 2], [0], [0]>} : vector<2x1x7xf32>, vector<2x7x32xf32>, vector<2x1x32xf32> -> vector<2x1x32xf32>
    "tpu.trace_stop"() : () -> ()
    %439 = vector.shape_cast %438 : vector<2x1x32xf32> to vector<2x32xf32>
    %440 = vector.shape_cast %437 : vector<2x1x7xf32> to vector<2x7xf32>
    %441 = vector.extract_strided_slice %410 {offsets = [0, 0], sizes = [2, 32], strides = [1, 1]} : vector<2x64xf32> to vector<2x32xf32>
    %442 = arith.addf %441, %424 : vector<2x32xf32>
    %443 = math.tanh %442 : vector<2x32xf32>
    %444 = vector.extract_strided_slice %410 {offsets = [0, 32], sizes = [2, 32], strides = [1, 1]} : vector<2x64xf32> to vector<2x32xf32>
    %445 = arith.addf %444, %439 : vector<2x32xf32>
    %446 = math.tanh %445 : vector<2x32xf32>
    %447 = arith.index_cast %c4_i32 : i32 to index
    %c0_148 = arith.constant 0 : index
    %c0_149 = arith.constant 0 : index
    %448 = vector.load %arg13[%447, %c0_148, %c0_149] : memref<5x2x32xf32, #tpu.memory_space<vmem>>, vector<1x2x32xf32>
    %449 = vector.shape_cast %448 : vector<1x2x32xf32> to vector<2x32xf32>
    %450 = vector.shape_cast %408 : vector<2x32xf32> to vector<1x2x32xf32>
    tpu.vector_store %arg13[%447, %c0_148, %c0_149], %450 {strides = array<i32>} : memref<5x2x32xf32, #tpu.memory_space<vmem>>, vector<1x2x32xf32>,
    %451 = arith.index_cast %c4_i32 : i32 to index
    %c0_150 = arith.constant 0 : index
    %c0_151 = arith.constant 0 : index
    %452 = vector.load %arg14[%451, %c0_150, %c0_151] : memref<5x2x32xf32, #tpu.memory_space<vmem>>, vector<1x2x32xf32>
    %453 = vector.shape_cast %452 : vector<1x2x32xf32> to vector<2x32xf32>
    %454 = vector.shape_cast %443 : vector<2x32xf32> to vector<1x2x32xf32>
    tpu.vector_store %arg14[%451, %c0_150, %c0_151], %454 {strides = array<i32>} : memref<5x2x32xf32, #tpu.memory_space<vmem>>, vector<1x2x32xf32>,
    %455 = arith.index_cast %c4_i32 : i32 to index
    %c0_152 = arith.constant 0 : index
    %c0_153 = arith.constant 0 : index
    %456 = vector.load %arg15[%455, %c0_152, %c0_153] : memref<5x2x32xf32, #tpu.memory_space<vmem>>, vector<1x2x32xf32>
    %457 = vector.shape_cast %456 : vector<1x2x32xf32> to vector<2x32xf32>
    %458 = vector.shape_cast %446 : vector<2x32xf32> to vector<1x2x32xf32>
    tpu.vector_store %arg15[%455, %c0_152, %c0_153], %458 {strides = array<i32>} : memref<5x2x32xf32, #tpu.memory_space<vmem>>, vector<1x2x32xf32>,
    %459 = arith.index_cast %c4_i32 : i32 to index
    %c0_154 = arith.constant 0 : index
    %c0_155 = arith.constant 0 : index
    %460 = vector.load %arg16[%459, %c0_154, %c0_155] : memref<5x2x10xf32, #tpu.memory_space<vmem>>, vector<1x2x10xf32>
    %461 = vector.shape_cast %460 : vector<1x2x10xf32> to vector<2x10xf32>
    %462 = vector.shape_cast %425 : vector<2x10xf32> to vector<1x2x10xf32>
    tpu.vector_store %arg16[%459, %c0_154, %c0_155], %462 {strides = array<i32>} : memref<5x2x10xf32, #tpu.memory_space<vmem>>, vector<1x2x10xf32>,
    %463 = arith.index_cast %c4_i32 : i32 to index
    %c0_156 = arith.constant 0 : index
    %c0_157 = arith.constant 0 : index
    %464 = vector.load %arg17[%463, %c0_156, %c0_157] : memref<5x2x7xf32, #tpu.memory_space<vmem>>, vector<1x2x7xf32>
    %465 = vector.shape_cast %464 : vector<1x2x7xf32> to vector<2x7xf32>
    %466 = vector.shape_cast %440 : vector<2x7xf32> to vector<1x2x7xf32>
    tpu.vector_store %arg17[%463, %c0_156, %c0_157], %466 {strides = array<i32>} : memref<5x2x7xf32, #tpu.memory_space<vmem>>, vector<1x2x7xf32>,
    %c5_i32 = arith.constant 5 : i32
    %c0_158 = arith.constant 0 : index
    %c0_159 = arith.constant 0 : index
    %467 = vector.load %arg20[%c0_158, %c0_159] : memref<2x32xf32, #tpu.memory_space<vmem>>, vector<2x32xf32>
    tpu.vector_store %arg20[%c0_158, %c0_159], %408 {strides = array<i32>} : memref<2x32xf32, #tpu.memory_space<vmem>>, vector<2x32xf32>,
    %c0_160 = arith.constant 0 : index
    %c0_161 = arith.constant 0 : index
    %468 = vector.load %arg21[%c0_160, %c0_161] : memref<2x32xf32, #tpu.memory_space<vmem>>, vector<2x32xf32>
    tpu.vector_store %arg21[%c0_160, %c0_161], %406 {strides = array<i32>} : memref<2x32xf32, #tpu.memory_space<vmem>>, vector<2x32xf32>,
    %c0_162 = arith.constant 0 : index
    %c0_163 = arith.constant 0 : index
    %469 = vector.load %arg22[%c0_162, %c0_163] : memref<2x32xf32, #tpu.memory_space<vmem>>, vector<2x32xf32>
    tpu.vector_store %arg22[%c0_162, %c0_163], %443 {strides = array<i32>} : memref<2x32xf32, #tpu.memory_space<vmem>>, vector<2x32xf32>,
    %c0_i32_164 = arith.constant 0 : i32
    %470 = arith.cmpi eq, %arg0, %c0_i32_164 : i32
    %471 = arith.extui %470 : i1 to i32
    %c0_i32_165 = arith.constant 0 : i32
    %472 = arith.cmpi ne, %471, %c0_i32_165 : i32
    scf.if %472 {
      %c0_166 = arith.constant 0 : index
      %c0_167 = arith.constant 0 : index
      %473 = vector.load %arg18[%c0_166, %c0_167] : memref<2x32xf32, #tpu.memory_space<vmem>>, vector<2x32xf32>
      tpu.vector_store %arg18[%c0_166, %c0_167], %408 {strides = array<i32>} : memref<2x32xf32, #tpu.memory_space<vmem>>, vector<2x32xf32>,
      %c0_168 = arith.constant 0 : index
      %c0_169 = arith.constant 0 : index
      %474 = vector.load %arg19[%c0_168, %c0_169] : memref<2x32xf32, #tpu.memory_space<vmem>>, vector<2x32xf32>
      tpu.vector_store %arg19[%c0_168, %c0_169], %406 {strides = array<i32>} : memref<2x32xf32, #tpu.memory_space<vmem>>, vector<2x32xf32>,
    } else {
    }
    return
  }
  func.func @transform_0(%arg0: i32) -> (i32, i32, i32) {
    %c0_i32 = arith.constant 0 : i32
    %c0_i32_0 = arith.constant 0 : i32
    %c0_i32_1 = arith.constant 0 : i32
    return %arg0, %c0_i32, %c0_i32_0 : i32, i32, i32
  }
  func.func @transform_1(%arg0: i32) -> (i32, i32, i32) {
    %c0_i32 = arith.constant 0 : i32
    %c0_i32_0 = arith.constant 0 : i32
    %c0_i32_1 = arith.constant 0 : i32
    %c0_i32_2 = arith.constant 0 : i32
    return %c0_i32, %c0_i32_0, %c0_i32_1 : i32, i32, i32
  }
  func.func @transform_2(%arg0: i32) -> (i32, i32, i32) {
    %c0_i32 = arith.constant 0 : i32
    %c0_i32_0 = arith.constant 0 : i32
    %c0_i32_1 = arith.constant 0 : i32
    %c0_i32_2 = arith.constant 0 : i32
    return %c0_i32, %c0_i32_0, %c0_i32_1 : i32, i32, i32
  }
  func.func @transform_3(%arg0: i32) -> (i32, i32, i32) {
    %c0_i32 = arith.constant 0 : i32
    %c0_i32_0 = arith.constant 0 : i32
    %c0_i32_1 = arith.constant 0 : i32
    %c0_i32_2 = arith.constant 0 : i32
    return %c0_i32, %c0_i32_0, %c0_i32_1 : i32, i32, i32
  }
  func.func @transform_4(%arg0: i32) -> (i32, i32, i32) {
    %c0_i32 = arith.constant 0 : i32
    %c0_i32_0 = arith.constant 0 : i32
    %c0_i32_1 = arith.constant 0 : i32
    %c0_i32_2 = arith.constant 0 : i32
    return %c0_i32, %c0_i32_0, %c0_i32_1 : i32, i32, i32
  }
  func.func @transform_5(%arg0: i32) -> (i32, i32) {
    %c0_i32 = arith.constant 0 : i32
    %c0_i32_0 = arith.constant 0 : i32
    %c0_i32_1 = arith.constant 0 : i32
    return %c0_i32, %c0_i32_0 : i32, i32
  }
  func.func @transform_6(%arg0: i32) -> (i32, i32) {
    %c0_i32 = arith.constant 0 : i32
    %c0_i32_0 = arith.constant 0 : i32
    %c0_i32_1 = arith.constant 0 : i32
    return %c0_i32, %c0_i32_0 : i32, i32
  }
  func.func @transform_7(%arg0: i32) -> (i32, i32) {
    %c0_i32 = arith.constant 0 : i32
    %c0_i32_0 = arith.constant 0 : i32
    %c0_i32_1 = arith.constant 0 : i32
    return %c0_i32, %c0_i32_0 : i32, i32
  }
  func.func @transform_8(%arg0: i32) -> (i32, i32) {
    %c0_i32 = arith.constant 0 : i32
    %c0_i32_0 = arith.constant 0 : i32
    %c0_i32_1 = arith.constant 0 : i32
    return %c0_i32, %c0_i32_0 : i32, i32
  }
  func.func @transform_9(%arg0: i32) -> (i32, i32) {
    %c0_i32 = arith.constant 0 : i32
    %c0_i32_0 = arith.constant 0 : i32
    %c0_i32_1 = arith.constant 0 : i32
    return %c0_i32, %c0_i32_0 : i32, i32
  }
  func.func @transform_10(%arg0: i32) -> (i32, i32) {
    %c0_i32 = arith.constant 0 : i32
    %c0_i32_0 = arith.constant 0 : i32
    %c0_i32_1 = arith.constant 0 : i32
    return %c0_i32, %c0_i32_0 : i32, i32
  }
  func.func @transform_11(%arg0: i32) -> (i32, i32) {
    %c0_i32 = arith.constant 0 : i32
    %c0_i32_0 = arith.constant 0 : i32
    %c0_i32_1 = arith.constant 0 : i32
    return %c0_i32, %c0_i32_0 : i32, i32
  }
  func.func @transform_12(%arg0: i32) -> (i32, i32, i32) {
    %c0_i32 = arith.constant 0 : i32
    %c0_i32_0 = arith.constant 0 : i32
    %c0_i32_1 = arith.constant 0 : i32
    return %arg0, %c0_i32, %c0_i32_0 : i32, i32, i32
  }
  func.func @transform_13(%arg0: i32) -> (i32, i32, i32) {
    %c0_i32 = arith.constant 0 : i32
    %c0_i32_0 = arith.constant 0 : i32
    %c0_i32_1 = arith.constant 0 : i32
    return %arg0, %c0_i32, %c0_i32_0 : i32, i32, i32
  }
  func.func @transform_14(%arg0: i32) -> (i32, i32, i32) {
    %c0_i32 = arith.constant 0 : i32
    %c0_i32_0 = arith.constant 0 : i32
    %c0_i32_1 = arith.constant 0 : i32
    return %arg0, %c0_i32, %c0_i32_0 : i32, i32, i32
  }
  func.func @transform_15(%arg0: i32) -> (i32, i32, i32) {
    %c0_i32 = arith.constant 0 : i32
    %c0_i32_0 = arith.constant 0 : i32
    %c0_i32_1 = arith.constant 0 : i32
    return %arg0, %c0_i32, %c0_i32_0 : i32, i32, i32
  }
  func.func @transform_16(%arg0: i32) -> (i32, i32, i32) {
    %c0_i32 = arith.constant 0 : i32
    %c0_i32_0 = arith.constant 0 : i32
    %c0_i32_1 = arith.constant 0 : i32
    return %arg0, %c0_i32, %c0_i32_0 : i32, i32, i32
  }
  func.func @transform_17(%arg0: i32) -> (i32, i32) {
    %c0_i32 = arith.constant 0 : i32
    %c0_i32_0 = arith.constant 0 : i32
    %c0_i32_1 = arith.constant 0 : i32
    return %c0_i32, %c0_i32_0 : i32, i32
  }
  func.func @transform_18(%arg0: i32) -> (i32, i32) {
    %c0_i32 = arith.constant 0 : i32
    %c0_i32_0 = arith.constant 0 : i32
    %c0_i32_1 = arith.constant 0 : i32
    return %c0_i32, %c0_i32_0 : i32, i32
  }
}

</mosaic_0001>

<llo_original>
// kernel: tpu_custom_call.1
$region0: #{tpu_custom_call.1}
  #allocation0 [shape = 'u32[]', space=smem, size = 0x4, offset = 0x4, fixed_abs, tag = 'smem constant byte address 0x4 - core index']
  #allocation1 [shape = 'u32[144,128]{1,0:T(1,128)}', space=vmem, size = 0x12000, scoped, tag = 'internal scratch']
  #allocation2 [shape = 'f32[2,32]{1,0:T(2,128)}', space=vmem, size = 0x400, scoped, tag = 'scratch operand']
  #allocation3 [shape = 'f32[2,32]{1,0:T(2,128)}', space=vmem, size = 0x400, scoped, tag = 'scratch operand']
  #allocation4 [shape = 'f32[2,32]{1,0:T(2,128)}', space=vmem, size = 0x400, scoped, tag = 'scratch operand']
  %s0 = inlined_call_operand.vmem [shape: f32[5,2,128], index: 0, kind: input, shape index: {}]
  %s1 = inlined_call_operand.vmem [shape: f32[2,10,32], index: 1, kind: input, shape index: {}]
  %s2 = inlined_call_operand.vmem [shape: f32[2,10,32], index: 2, kind: input, shape index: {}]
  %s3 = inlined_call_operand.vmem [shape: f32[2,7,32], index: 3, kind: input, shape index: {}]
  %s4 = inlined_call_operand.vmem [shape: f32[2,7,32], index: 4, kind: input, shape index: {}]
  %s5 = inlined_call_operand.vmem [shape: f32[2,10], index: 5, kind: input, shape index: {}]
  %s6 = inlined_call_operand.vmem [shape: f32[2,7], index: 6, kind: input, shape index: {}]
  %s7 = inlined_call_operand.vmem [shape: f32[2,32], index: 7, kind: input, shape index: {}]
  %s8 = inlined_call_operand.vmem [shape: f32[2,32], index: 8, kind: input, shape index: {}]
  %s9 = inlined_call_operand.vmem [shape: f32[32,128], index: 9, kind: input, shape index: {}]
  %s10 = inlined_call_operand.vmem [shape: f32[32,128], index: 10, kind: input, shape index: {}]
  %s11 = inlined_call_operand.vmem [shape: f32[32,64], index: 11, kind: input, shape index: {}]
  %s12 = inlined_call_operand.hbm [shape: f32[5,2,32], index: 12, kind: output, shape index: {0}]
  %s13 = inlined_call_operand.hbm [shape: f32[5,2,32], index: 13, kind: output, shape index: {1}]
  %s14 = inlined_call_operand.hbm [shape: f32[5,2,32], index: 14, kind: output, shape index: {2}]
  %s15 = inlined_call_operand.hbm [shape: f32[5,2,10], index: 15, kind: output, shape index: {3}]
  %s16 = inlined_call_operand.hbm [shape: f32[5,2,7], index: 16, kind: output, shape index: {4}]
  %s17 = inlined_call_operand.hbm [shape: f32[2,32], index: 17, kind: output, shape index: {5}]
  %s18 = inlined_call_operand.hbm [shape: f32[2,32], index: 18, kind: output, shape index: {6}]
  %19 = xla_tuple %s12, %s13, %s14, %s15, %s16, %s17, %s18
  %s20 = sld [smem:[#allocation0]]
  $region114: #{tpu_custom_call.1} parent=0
    _
  %s22 = ssub.s32 1, %s20
  %s23 = scalar_select 0, %s22, %s20
  $region1: #{tpu_custom_call.1} parent=0
    #allocation5 [shape = 'u8[5120]{0}', space=vmem, size = 0x1400, scoped, tag = 'output window, operand 0, single buffered']
    #allocation6 [shape = 's32[1]{0}', space=sflag, size = 0x4, scoped, tag = 'scoped memory for tpu_custom_call.1']
    #allocation7 [shape = 'u8[5120]{0}', space=vmem, size = 0x1400, scoped, tag = 'output window, operand 1, single buffered']
    #allocation8 [shape = 's32[1]{0}', space=sflag, size = 0x4, scoped, tag = 'scoped memory for tpu_custom_call.1']
    #allocation9 [shape = 'u8[5120]{0}', space=vmem, size = 0x1400, scoped, tag = 'output window, operand 2, single buffered']
    #allocation10 [shape = 'u8[5120]{0}', space=vmem, size = 0x1400, scoped, tag = 'output window, operand 3, single buffered']
    #allocation11 [shape = 's32[1]{0}', space=sflag, size = 0x4, scoped, tag = 'scoped memory for tpu_custom_call.1']
    #allocation12 [shape = 'u8[5120]{0}', space=vmem, size = 0x1400, scoped, tag = 'output window, operand 4, single buffered']
    #allocation13 [shape = 'u8[1024]{0}', space=vmem, size = 0x400, scoped, tag = 'output window, operand 5, single buffered']
    #allocation14 [shape = 's32[1]{0}', space=sflag, size = 0x4, scoped, tag = 'scoped memory for tpu_custom_call.1']
    #allocation15 [shape = 'u8[1024]{0}', space=vmem, size = 0x400, scoped, tag = 'output window, operand 6, single buffered']
    %24 = vsyncpa [#allocation6], 0
    %25 = vsyncpa [#allocation8], 0
    %26 = vsyncpa [#allocation11], 0
    %27 = vsyncpa [#allocation14], 0
    // Predicated region
    $region2: #{tpu_custom_call.1} parent=1 // pred_check
      _
    $region3: #{tpu_custom_call.1} parent=1 // pred_check_branch
      %29 = sbr.rel (0) target = $region5
    $region4: #{tpu_custom_call.1} parent=1 // pred_region
      _
    $region5: #{tpu_custom_call.1} parent=1 // pred_fallthru
      _
    // Predicated region
    $region6: #{tpu_custom_call.1} parent=1 // pred_check
      _
    $region7: #{tpu_custom_call.1} parent=1 // pred_check_branch
      %31 = sbr.rel (0) target = $region9
    $region8: #{tpu_custom_call.1} parent=1 // pred_region
      _
    $region9: #{tpu_custom_call.1} parent=1 // pred_fallthru
      _
    // Predicated region
    $region10: #{tpu_custom_call.1} parent=1 // pred_check
      _
    $region11: #{tpu_custom_call.1} parent=1 // pred_check_branch
      %33 = sbr.rel (0) target = $region13
    $region12: #{tpu_custom_call.1} parent=1 // pred_region
      _
    $region13: #{tpu_custom_call.1} parent=1 // pred_fallthru
      _
    // Predicated region
    $region14: #{tpu_custom_call.1} parent=1 // pred_check
      _
    $region15: #{tpu_custom_call.1} parent=1 // pred_check_branch
      %35 = sbr.rel (0) target = $region17
    $region16: #{tpu_custom_call.1} parent=1 // pred_region
      _
    $region17: #{tpu_custom_call.1} parent=1 // pred_fallthru
      _
    // Predicated region
    $region18: #{tpu_custom_call.1} parent=1 // pred_check
      _
    $region19: #{tpu_custom_call.1} parent=1 // pred_check_branch
      %37 = sbr.rel (0) target = $region21
    $region20: #{tpu_custom_call.1} parent=1 // pred_region
      _
    $region21: #{tpu_custom_call.1} parent=1 // pred_fallthru
      _
    // Predicated region
    $region22: #{tpu_custom_call.1} parent=1 // pred_check
      _
    $region23: #{tpu_custom_call.1} parent=1 // pred_check_branch
      %39 = sbr.rel (0) target = $region25
    $region24: #{tpu_custom_call.1} parent=1 // pred_region
      _
    $region25: #{tpu_custom_call.1} parent=1 // pred_fallthru
      _
    // Predicated region
    $region26: #{tpu_custom_call.1} parent=1 // pred_check
      _
    $region27: #{tpu_custom_call.1} parent=1 // pred_check_branch
      %41 = sbr.rel (0) target = $region29
    $region28: #{tpu_custom_call.1} parent=1 // pred_region
      _
    $region29: #{tpu_custom_call.1} parent=1 // pred_fallthru
      _
    // Predicated region
    $region30: #{tpu_custom_call.1} parent=1 // pred_check
      _
    $region31: #{tpu_custom_call.1} parent=1 // pred_check_branch
      %43 = sbr.rel (0) target = $region33
    $region32: #{tpu_custom_call.1} parent=1 // pred_region
      _
    $region33: #{tpu_custom_call.1} parent=1 // pred_fallthru
      _
    // Predicated region
    $region34: #{tpu_custom_call.1} parent=1 // pred_check
      _
    $region35: #{tpu_custom_call.1} parent=1 // pred_check_branch
      %45 = sbr.rel (0) target = $region37
    $region36: #{tpu_custom_call.1} parent=1 // pred_region
      _
    $region37: #{tpu_custom_call.1} parent=1 // pred_fallthru
      _
    // Predicated region
    $region38: #{tpu_custom_call.1} parent=1 // pred_check
      _
    $region39: #{tpu_custom_call.1} parent=1 // pred_check_branch
      %47 = sbr.rel (0) target = $region41
    $region40: #{tpu_custom_call.1} parent=1 // pred_region
      _
    $region41: #{tpu_custom_call.1} parent=1 // pred_fallthru
      _
    // Predicated region
    $region42: #{tpu_custom_call.1} parent=1 // pred_check
      _
    $region43: #{tpu_custom_call.1} parent=1 // pred_check_branch
      %49 = sbr.rel (0) target = $region45
    $region44: #{tpu_custom_call.1} parent=1 // pred_region
      _
    $region45: #{tpu_custom_call.1} parent=1 // pred_fallthru
      _
    // Predicated region
    $region46: #{tpu_custom_call.1} parent=1 // pred_check
      _
    $region47: #{tpu_custom_call.1} parent=1 // pred_check_branch
      %51 = sbr.rel (0) target = $region49
    $region48: #{tpu_custom_call.1} parent=1 // pred_region
      _
    $region49: #{tpu_custom_call.1} parent=1 // pred_fallthru
      _
    %p52 = scmp.eq.s32.totalorder 0, 0
    // Predicated region
    $region50: #{tpu_custom_call.1} parent=1 // pred_check
      %p53 = pneg %p52
    $region51: #{tpu_custom_call.1} parent=1 // pred_check_branch
      %55 = sbr.rel (%p53) target = $region53
    $region52: #{tpu_custom_call.1} parent=1 // pred_region
      %v56 = vld [vmem:[%s7] sm:$0x3]
      %vm57 = vcmask 254976
      %58 = vst.msk [vmem:[#allocation2] sm:$0x3] %vm57, %v56
      %v59 = vld [vmem:[%s8] sm:$0x3]
      %60 = vst.msk [vmem:[#allocation3] sm:$0x3] %vm57, %v59
      %61 = vst.msk [vmem:[#allocation4] sm:$0x3] %vm57, 0.0
    $region53: #{tpu_custom_call.1} parent=1 // pred_fallthru
      _
    %v62 = vld [vmem:[%s1] sm:$0xff]
    %v63 = vld [vmem:[%s1 + $0x8] sm:$0x3]
    %v64 = vld [vmem:[%s1 + $0x10] sm:$0xff]
    %v65 = vld [vmem:[%s1 + $0x18] sm:$0x3]
    %v66 = vld [vmem:[%s2] sm:$0xff]
    %v67 = vld [vmem:[%s2 + $0x8] sm:$0x3]
    %v68 = vld [vmem:[%s2 + $0x10] sm:$0xff]
    %v69 = vld [vmem:[%s2 + $0x18] sm:$0x3]
    %v70 = vld [vmem:[%s3] sm:$0x7f]
    %v71 = vld [vmem:[%s3 + $0x8] sm:$0x7f]
    %v72 = vld [vmem:[%s4] sm:$0x7f]
    %v73 = vld [vmem:[%s4 + $0x8] sm:$0x7f]
    %v74 = vld [vmem:[%s5] sm:$0x3]
    %v77 = vunpack.c.l.s4 1966171168
    %v78 = vunpack.c.0.s8 %v77
    %v79 = vlaneseq
    %v80 = vshrl.u32 %v79, 7
    %v81 = vsub.s32 %v78, %v80
    %v82 = vrot.slane %v74, %v81
    %v83 = vcombine.high %v82, %v82
    %v85 = vunpack.c.l.s4 1966171168
    %v86 = vunpack.c.0.s8 %v85
    %v87 = vlaneseq
    %v88 = vshrl.u32 %v87, 7
    %v89 = vsub.s32 %v86, %v88
    %v90 = vrot.slane %v82, %v89
    %v92 = vunpack.c.l.s4 1966171168
    %v93 = vunpack.c.0.s8 %v92
    %v94 = vlaneseq
    %v95 = vshrl.u32 %v94, 7
    %v96 = vsub.s32 %v93, %v95
    %v97 = vrot.slane %v83, %v96
    %v100 = vld [vmem:[%s6] sm:$0x3]
    %v103 = vunpack.c.l.s4 1966171168
    %v104 = vunpack.c.0.s8 %v103
    %v105 = vlaneseq
    %v106 = vshrl.u32 %v105, 7
    %v107 = vsub.s32 %v104, %v106
    %v108 = vrot.slane %v100, %v107
    %v109 = vcombine.high %v108, %v108
    %v111 = vunpack.c.l.s4 1966171168
    %v112 = vunpack.c.0.s8 %v111
    %v113 = vlaneseq
    %v114 = vshrl.u32 %v113, 7
    %v115 = vsub.s32 %v112, %v114
    %v116 = vrot.slane %v108, %v115
    %v118 = vunpack.c.l.s4 1966171168
    %v119 = vunpack.c.0.s8 %v118
    %v120 = vlaneseq
    %v121 = vshrl.u32 %v120, 7
    %v122 = vsub.s32 %v119, %v121
    %v123 = vrot.slane %v109, %v122
    %v126 = vld [vmem:[%s9] sm:$0xff]
    %v127 = vld [vmem:[%s9 + $0x8] sm:$0xff]
    %v128 = vld [vmem:[%s9 + $0x10] sm:$0xff]
    %v129 = vld [vmem:[%s9 + $0x18] sm:$0xff]
    %v130 = vld [vmem:[%s10] sm:$0xff]
    %v131 = vld [vmem:[%s10 + $0x8] sm:$0xff]
    %v132 = vld [vmem:[%s10 + $0x10] sm:$0xff]
    %v133 = vld [vmem:[%s10 + $0x18] sm:$0xff]
    %v134 = vld [vmem:[%s11] sm:$0xff]
    %v135 = vld [vmem:[%s11 + $0x8] sm:$0xff]
    %v136 = vld [vmem:[%s11 + $0x10] sm:$0xff]
    %v137 = vld [vmem:[%s11 + $0x18] sm:$0xff]
    %v138 = vld [vmem:[#allocation2] sm:$0x3]
    %v139 = vld [vmem:[#allocation3] sm:$0x3]
    %v140 = vld [vmem:[#allocation4] sm:$0x3]
    %v141 = vld [vmem:[%s0] sm:$0x3]
    %vm142 = vcmask 261120
    %v144 = vsel %vm142, %v140, 0
    %146 = vmatprep.subr.mxu0 0.0
    %147 = vmatpush1.msra.mxu0 0.0
    %148 = vmatprep.subr.mxu0 0.0
    %149 = vmatpush1.msra.mxu0 0.0
    %150 = vmatprep.subr.mxu0 0.0
    %151 = vmatpush1.msra.mxu0 0.0
    %152 = vmatprep.subr.mxu0 0.0
    %153 = vmatpush1.msra.mxu0 0.0
    %154 = vmatprep.subr.mxu0 0.0
    %155 = vmatpush1.msra.mxu0 0.0
    %156 = vmatprep.subr.mxu0 0.0
    %157 = vmatpush1.msra.mxu0 0.0
    %158 = vmatprep.subr.mxu0 0.0
    %159 = vmatpush1.msra.mxu0 0.0
    %160 = vmatprep.subr.mxu0 0.0
    %161 = vmatpush1.msra.mxu0 0.0
    %162 = vmatprep.subr.mxu0 0.0
    %163 = vmatpush1.msra.mxu0 0.0
    %164 = vmatprep.subr.mxu0 0.0
    %165 = vmatpush1.msra.mxu0 0.0
    %166 = vmatprep.subr.mxu0 0.0
    %167 = vmatpush1.msra.mxu0 0.0
    %168 = vmatprep.subr.mxu0 0.0
    %169 = vmatpush1.msra.mxu0 0.0
    %170 = vmatprep.subr.mxu0 0.0
    %171 = vmatpush1.msra.mxu0 %v129
    %172 = vmatprep.subr.mxu0 0.0
    %173 = vmatpush1.msra.mxu0 %v128
    %174 = vmatprep.subr.mxu0 0.0
    %175 = vmatpush1.msra.mxu0 %v127
    %176 = vmatprep.subr.mxu0 0.0
    %177 = vmatpush1.msra.mxu0 %v126
    %178 = vmatprep.subr.mxu0 0.0
    %179 = vmatpush2.msra.mxu0 0.0
    %180 = vmatprep.subr.mxu0 0.0
    %181 = vmatpush2.msra.mxu0 0.0
    %182 = vmatprep.subr.mxu0 0.0
    %183 = vmatpush2.msra.mxu0 0.0
    %184 = vmatprep.subr.mxu0 0.0
    %185 = vmatpush2.msra.mxu0 0.0
    %186 = vmatprep.subr.mxu0 0.0
    %187 = vmatpush2.msra.mxu0 0.0
    %188 = vmatprep.subr.mxu0 0.0
    %189 = vmatpush2.msra.mxu0 0.0
    %190 = vmatprep.subr.mxu0 0.0
    %191 = vmatpush2.msra.mxu0 0.0
    %192 = vmatprep.subr.mxu0 0.0
    %193 = vmatpush2.msra.mxu0 0.0
    %194 = vmatprep.subr.mxu0 0.0
    %195 = vmatpush2.msra.mxu0 0.0
    %196 = vmatprep.subr.mxu0 0.0
    %197 = vmatpush2.msra.mxu0 0.0
    %198 = vmatprep.subr.mxu0 0.0
    %199 = vmatpush2.msra.mxu0 0.0
    %200 = vmatprep.subr.mxu0 0.0
    %201 = vmatpush2.msra.mxu0 0.0
    %202 = vmatprep.subr.mxu0 0.0
    %203 = vmatpush2.msra.mxu0 0.0
    %204 = vmatprep.subr.mxu0 0.0
    %205 = vmatpush2.msra.mxu0 0.0
    %206 = vmatprep.subr.mxu0 0.0
    %207 = vmatpush2.msra.mxu0 0.0
    %208 = vmatprep.subr.mxu0 0.0
    %209 = vmatpush2.msra.mxu0 0.0
    %210 = vmatprep.mubr.f32.mxu0 0.0
    %211 = vmatmul.mubr.f32.gmra.mxu0 %v144
    %v212 = vpop.f32.mrf.mxu0
    %v213 = vadd.f32 0.0, %v212
    %v214 = vpop.f32.mrf.mxu0
    %215 = vdwg.mxu0
    %v216 = vadd.f32 %v141, %v213
    %v218 = vsel %vm142, %v138, 0
    %220 = vmatprep.subr.mxu0 0.0
    %221 = vmatpush1.msra.mxu0 0.0
    %222 = vmatprep.subr.mxu0 0.0
    %223 = vmatpush1.msra.mxu0 0.0
    %224 = vmatprep.subr.mxu0 0.0
    %225 = vmatpush1.msra.mxu0 0.0
    %226 = vmatprep.subr.mxu0 0.0
    %227 = vmatpush1.msra.mxu0 0.0
    %228 = vmatprep.subr.mxu0 0.0
    %229 = vmatpush1.msra.mxu0 0.0
    %230 = vmatprep.subr.mxu0 0.0
    %231 = vmatpush1.msra.mxu0 0.0
    %232 = vmatprep.subr.mxu0 0.0
    %233 = vmatpush1.msra.mxu0 0.0
    %234 = vmatprep.subr.mxu0 0.0
    %235 = vmatpush1.msra.mxu0 0.0
    %236 = vmatprep.subr.mxu0 0.0
    %237 = vmatpush1.msra.mxu0 0.0
    %238 = vmatprep.subr.mxu0 0.0
    %239 = vmatpush1.msra.mxu0 0.0
    %240 = vmatprep.subr.mxu0 0.0
    %241 = vmatpush1.msra.mxu0 0.0
    %242 = vmatprep.subr.mxu0 0.0
    %243 = vmatpush1.msra.mxu0 0.0
    %244 = vmatprep.subr.mxu0 0.0
    %245 = vmatpush1.msra.mxu0 %v133
    %246 = vmatprep.subr.mxu0 0.0
    %247 = vmatpush1.msra.mxu0 %v132
    %248 = vmatprep.subr.mxu0 0.0
    %249 = vmatpush1.msra.mxu0 %v131
    %250 = vmatprep.subr.mxu0 0.0
    %251 = vmatpush1.msra.mxu0 %v130
    %252 = vmatprep.subr.mxu0 0.0
    %253 = vmatpush2.msra.mxu0 0.0
    %254 = vmatprep.subr.mxu0 0.0
    %255 = vmatpush2.msra.mxu0 0.0
    %256 = vmatprep.subr.mxu0 0.0
    %257 = vmatpush2.msra.mxu0 0.0
    %258 = vmatprep.subr.mxu0 0.0
    %259 = vmatpush2.msra.mxu0 0.0
    %260 = vmatprep.subr.mxu0 0.0
    %261 = vmatpush2.msra.mxu0 0.0
    %262 = vmatprep.subr.mxu0 0.0
    %263 = vmatpush2.msra.mxu0 0.0
    %264 = vmatprep.subr.mxu0 0.0
    %265 = vmatpush2.msra.mxu0 0.0
    %266 = vmatprep.subr.mxu0 0.0
    %267 = vmatpush2.msra.mxu0 0.0
    %268 = vmatprep.subr.mxu0 0.0
    %269 = vmatpush2.msra.mxu0 0.0
    %270 = vmatprep.subr.mxu0 0.0
    %271 = vmatpush2.msra.mxu0 0.0
    %272 = vmatprep.subr.mxu0 0.0
    %273 = vmatpush2.msra.mxu0 0.0
    %274 = vmatprep.subr.mxu0 0.0
    %275 = vmatpush2.msra.mxu0 0.0
    %276 = vmatprep.subr.mxu0 0.0
    %277 = vmatpush2.msra.mxu0 0.0
    %278 = vmatprep.subr.mxu0 0.0
    %279 = vmatpush2.msra.mxu0 0.0
    %280 = vmatprep.subr.mxu0 0.0
    %281 = vmatpush2.msra.mxu0 0.0
    %282 = vmatprep.subr.mxu0 0.0
    %283 = vmatpush2.msra.mxu0 0.0
    %284 = vmatprep.mubr.f32.mxu0 0.0
    %285 = vmatmul.mubr.f32.gmra.mxu0 %v218
    %v286 = vpop.f32.mrf.mxu0
    %v287 = vadd.f32 0.0, %v286
    %v288 = vpop.f32.mrf.mxu0
    %289 = vdwg.mxu0
    %v290 = vadd.f32 %v216, %v287
    %v291 = vxor.u32 %v290, 2147483648
    %v292 = vmul.f32 %v291, 1.442695
    %v293 = vpow.pop %v292
    %v294 = vadd.f32 %v293, 1.0
    %v295 = vrcp.pop %v294
    %v296 = vmul.f32 1.0, %v295
    %v297 = vtanh.pop %v290
    %299 = vrot.lane.b32.xlu0 %v139, 32
    %v300 = vpop.permute.xlu0 %299
    %v302 = vmul.f32 %v296, %v300
    %304 = vrot.lane.b32.xlu0 %v297, 64
    %v305 = vpop.permute.xlu0 %304
    %v307 = vmul.f32 %v296, %v305
    %309 = vrot.lane.b32.xlu0 %v307, 32
    %v310 = vpop.permute.xlu0 %309
    %v312 = vadd.f32 %v302, %v310
    %v313 = vtanh.pop %v312
    %315 = vrot.lane.b32.xlu0 %v313, 64
    %v316 = vpop.permute.xlu0 %315
    %v318 = vmul.f32 %v296, %v316
    %v321 = vunpack.c.l.s4 1966171168
    %v322 = vunpack.c.0.s8 %v321
    %v323 = vlaneseq
    %v324 = vshrl.u32 %v323, 7
    %v325 = vsub.s32 %v322, %v324
    %v326 = vrot.slane %v318, %v325
    %v327 = vcombine.high %v326, %v326
    %v329 = vunpack.c.l.s4 1966171168
    %v330 = vunpack.c.0.s8 %v329
    %v331 = vlaneseq
    %v332 = vshrl.u32 %v331, 7
    %v333 = vsub.s32 %v330, %v332
    %v334 = vrot.slane %v326, %v333
    %v336 = vunpack.c.l.s4 1966171168
    %v337 = vunpack.c.0.s8 %v336
    %v338 = vlaneseq
    %v339 = vshrl.u32 %v338, 7
    %v340 = vsub.s32 %v337, %v339
    %v341 = vrot.slane %v327, %v340
    %342 = vrot.lane.b32.xlu0 %v318, 32
    %v343 = vpop.permute.xlu0 %342
    %v344 = vsel %vm142, %v343, 0
    %346 = vmatprep.subr.mxu0 0.0
    %347 = vmatpush1.msra.mxu0 0.0
    %348 = vmatprep.subr.mxu0 0.0
    %349 = vmatpush1.msra.mxu0 0.0
    %350 = vmatprep.subr.mxu0 0.0
    %351 = vmatpush1.msra.mxu0 0.0
    %352 = vmatprep.subr.mxu0 0.0
    %353 = vmatpush1.msra.mxu0 0.0
    %354 = vmatprep.subr.mxu0 0.0
    %355 = vmatpush1.msra.mxu0 0.0
    %356 = vmatprep.subr.mxu0 0.0
    %357 = vmatpush1.msra.mxu0 0.0
    %358 = vmatprep.subr.mxu0 0.0
    %359 = vmatpush1.msra.mxu0 0.0
    %360 = vmatprep.subr.mxu0 0.0
    %361 = vmatpush1.msra.mxu0 0.0
    %362 = vmatprep.subr.mxu0 0.0
    %363 = vmatpush1.msra.mxu0 0.0
    %364 = vmatprep.subr.mxu0 0.0
    %365 = vmatpush1.msra.mxu0 0.0
    %366 = vmatprep.subr.mxu0 0.0
    %367 = vmatpush1.msra.mxu0 0.0
    %368 = vmatprep.subr.mxu0 0.0
    %369 = vmatpush1.msra.mxu0 0.0
    %370 = vmatprep.subr.mxu0 0.0
    %371 = vmatpush1.msra.mxu0 %v137
    %372 = vmatprep.subr.mxu0 0.0
    %373 = vmatpush1.msra.mxu0 %v136
    %374 = vmatprep.subr.mxu0 0.0
    %375 = vmatpush1.msra.mxu0 %v135
    %376 = vmatprep.subr.mxu0 0.0
    %377 = vmatpush1.msra.mxu0 %v134
    %378 = vmatprep.subr.mxu0 0.0
    %379 = vmatpush2.msra.mxu0 0.0
    %380 = vmatprep.subr.mxu0 0.0
    %381 = vmatpush2.msra.mxu0 0.0
    %382 = vmatprep.subr.mxu0 0.0
    %383 = vmatpush2.msra.mxu0 0.0
    %384 = vmatprep.subr.mxu0 0.0
    %385 = vmatpush2.msra.mxu0 0.0
    %386 = vmatprep.subr.mxu0 0.0
    %387 = vmatpush2.msra.mxu0 0.0
    %388 = vmatprep.subr.mxu0 0.0
    %389 = vmatpush2.msra.mxu0 0.0
    %390 = vmatprep.subr.mxu0 0.0
    %391 = vmatpush2.msra.mxu0 0.0
    %392 = vmatprep.subr.mxu0 0.0
    %393 = vmatpush2.msra.mxu0 0.0
    %394 = vmatprep.subr.mxu0 0.0
    %395 = vmatpush2.msra.mxu0 0.0
    %396 = vmatprep.subr.mxu0 0.0
    %397 = vmatpush2.msra.mxu0 0.0
    %398 = vmatprep.subr.mxu0 0.0
    %399 = vmatpush2.msra.mxu0 0.0
    %400 = vmatprep.subr.mxu0 0.0
    %401 = vmatpush2.msra.mxu0 0.0
    %402 = vmatprep.subr.mxu0 0.0
    %403 = vmatpush2.msra.mxu0 0.0
    %404 = vmatprep.subr.mxu0 0.0
    %405 = vmatpush2.msra.mxu0 0.0
    %406 = vmatprep.subr.mxu0 0.0
    %407 = vmatpush2.msra.mxu0 0.0
    %408 = vmatprep.subr.mxu0 0.0
    %409 = vmatpush2.msra.mxu0 0.0
    %410 = vmatprep.mubr.f32.mxu0 0.0
    %411 = vmatmul.mubr.f32.gmra.mxu0 %v344
    %v412 = vpop.f32.mrf.mxu0
    %v413 = vadd.f32 0.0, %v412
    %v414 = vpop.f32.mrf.mxu0
    %415 = vdwg.mxu0
    %v416 = vlaneseq
    %v417 = vshrl.u32 %v416, 7
    %v418 = vsub.s32 0, %v417
    %v419 = vrot.slane %v334, %v418
    %420 = vrot.lane.b32.xlu0 %v419, 32
    %v421 = vpop.permute.xlu0 %420
    %v422 = vsel %vm142, %v421, 0
    %v425 = vsel %vm142, %v62, 0
    %v428 = vsel %vm142, %v63, 0
    %430 = vmatprep.subr.mxu0 0.0
    %431 = vmatpush1.xpose.msra.mxu0 0.0
    %432 = vmatprep.subr.mxu0 0.0
    %433 = vmatpush1.xpose.msra.mxu0 0.0
    %434 = vmatprep.subr.mxu0 0.0
    %435 = vmatpush1.xpose.msra.mxu0 0.0
    %436 = vmatprep.subr.mxu0 0.0
    %437 = vmatpush1.xpose.msra.mxu0 0.0
    %438 = vmatprep.subr.mxu0 0.0
    %439 = vmatpush1.xpose.msra.mxu0 0.0
    %440 = vmatprep.subr.mxu0 0.0
    %441 = vmatpush1.xpose.msra.mxu0 0.0
    %442 = vmatprep.subr.mxu0 0.0
    %443 = vmatpush1.xpose.msra.mxu0 0.0
    %444 = vmatprep.subr.mxu0 0.0
    %445 = vmatpush1.xpose.msra.mxu0 0.0
    %446 = vmatprep.subr.mxu0 0.0
    %447 = vmatpush1.xpose.msra.mxu0 0.0
    %448 = vmatprep.subr.mxu0 0.0
    %449 = vmatpush1.xpose.msra.mxu0 0.0
    %450 = vmatprep.subr.mxu0 0.0
    %451 = vmatpush1.xpose.msra.mxu0 0.0
    %452 = vmatprep.subr.mxu0 0.0
    %453 = vmatpush1.xpose.msra.mxu0 0.0
    %454 = vmatprep.subr.mxu0 0.0
    %455 = vmatpush1.xpose.msra.mxu0 0.0
    %456 = vmatprep.subr.mxu0 0.0
    %457 = vmatpush1.xpose.msra.mxu0 0.0
    %458 = vmatprep.subr.mxu0 0.0
    %459 = vmatpush1.xpose.msra.mxu0 %v428
    %460 = vmatprep.subr.mxu0 0.0
    %461 = vmatpush1.xpose.msra.mxu0 %v425
    %462 = vmatprep.subr.mxu0 0.0
    %463 = vmatpush2.xpose.msra.mxu0 0.0
    %464 = vmatprep.subr.mxu0 0.0
    %465 = vmatpush2.xpose.msra.mxu0 0.0
    %466 = vmatprep.subr.mxu0 0.0
    %467 = vmatpush2.xpose.msra.mxu0 0.0
    %468 = vmatprep.subr.mxu0 0.0
    %469 = vmatpush2.xpose.msra.mxu0 0.0
    %470 = vmatprep.subr.mxu0 0.0
    %471 = vmatpush2.xpose.msra.mxu0 0.0
    %472 = vmatprep.subr.mxu0 0.0
    %473 = vmatpush2.xpose.msra.mxu0 0.0
    %474 = vmatprep.subr.mxu0 0.0
    %475 = vmatpush2.xpose.msra.mxu0 0.0
    %476 = vmatprep.subr.mxu0 0.0
    %477 = vmatpush2.xpose.msra.mxu0 0.0
    %478 = vmatprep.subr.mxu0 0.0
    %479 = vmatpush2.xpose.msra.mxu0 0.0
    %480 = vmatprep.subr.mxu0 0.0
    %481 = vmatpush2.xpose.msra.mxu0 0.0
    %482 = vmatprep.subr.mxu0 0.0
    %483 = vmatpush2.xpose.msra.mxu0 0.0
    %484 = vmatprep.subr.mxu0 0.0
    %485 = vmatpush2.xpose.msra.mxu0 0.0
    %486 = vmatprep.subr.mxu0 0.0
    %487 = vmatpush2.xpose.msra.mxu0 0.0
    %488 = vmatprep.subr.mxu0 0.0
    %489 = vmatpush2.xpose.msra.mxu0 0.0
    %490 = vmatprep.subr.mxu0 0.0
    %491 = vmatpush2.xpose.msra.mxu0 0.0
    %492 = vmatprep.subr.mxu0 0.0
    %493 = vmatpush2.xpose.msra.mxu0 0.0
    %494 = vmatprep.mubr.f32.mxu0 0.0
    %495 = vmatmul.mubr.f32.gmra.mxu0 %v422
    %v496 = vpop.f32.mrf.mxu0
    %v497 = vadd.f32 %v90, %v496
    %v498 = vpop.f32.mrf.mxu0
    %499 = vdwg.mxu0
    %v500 = vlaneseq
    %v501 = vshrl.u32 %v500, 7
    %v502 = vsub.s32 0, %v501
    %v503 = vrot.slane %v341, %v502
    %504 = vrot.lane.b32.xlu0 %v503, 32
    %v505 = vpop.permute.xlu0 %504
    %v506 = vsel %vm142, %v505, 0
    %v509 = vsel %vm142, %v64, 0
    %v512 = vsel %vm142, %v65, 0
    %514 = vmatprep.subr.mxu0 0.0
    %515 = vmatpush1.xpose.msra.mxu0 0.0
    %516 = vmatprep.subr.mxu0 0.0
    %517 = vmatpush1.xpose.msra.mxu0 0.0
    %518 = vmatprep.subr.mxu0 0.0
    %519 = vmatpush1.xpose.msra.mxu0 0.0
    %520 = vmatprep.subr.mxu0 0.0
    %521 = vmatpush1.xpose.msra.mxu0 0.0
    %522 = vmatprep.subr.mxu0 0.0
    %523 = vmatpush1.xpose.msra.mxu0 0.0
    %524 = vmatprep.subr.mxu0 0.0
    %525 = vmatpush1.xpose.msra.mxu0 0.0
    %526 = vmatprep.subr.mxu0 0.0
    %527 = vmatpush1.xpose.msra.mxu0 0.0
    %528 = vmatprep.subr.mxu0 0.0
    %529 = vmatpush1.xpose.msra.mxu0 0.0
    %530 = vmatprep.subr.mxu0 0.0
    %531 = vmatpush1.xpose.msra.mxu0 0.0
    %532 = vmatprep.subr.mxu0 0.0
    %533 = vmatpush1.xpose.msra.mxu0 0.0
    %534 = vmatprep.subr.mxu0 0.0
    %535 = vmatpush1.xpose.msra.mxu0 0.0
    %536 = vmatprep.subr.mxu0 0.0
    %537 = vmatpush1.xpose.msra.mxu0 0.0
    %538 = vmatprep.subr.mxu0 0.0
    %539 = vmatpush1.xpose.msra.mxu0 0.0
    %540 = vmatprep.subr.mxu0 0.0
    %541 = vmatpush1.xpose.msra.mxu0 0.0
    %542 = vmatprep.subr.mxu0 0.0
    %543 = vmatpush1.xpose.msra.mxu0 %v512
    %544 = vmatprep.subr.mxu0 0.0
    %545 = vmatpush1.xpose.msra.mxu0 %v509
    %546 = vmatprep.subr.mxu0 0.0
    %547 = vmatpush2.xpose.msra.mxu0 0.0
    %548 = vmatprep.subr.mxu0 0.0
    %549 = vmatpush2.xpose.msra.mxu0 0.0
    %550 = vmatprep.subr.mxu0 0.0
    %551 = vmatpush2.xpose.msra.mxu0 0.0
    %552 = vmatprep.subr.mxu0 0.0
    %553 = vmatpush2.xpose.msra.mxu0 0.0
    %554 = vmatprep.subr.mxu0 0.0
    %555 = vmatpush2.xpose.msra.mxu0 0.0
    %556 = vmatprep.subr.mxu0 0.0
    %557 = vmatpush2.xpose.msra.mxu0 0.0
    %558 = vmatprep.subr.mxu0 0.0
    %559 = vmatpush2.xpose.msra.mxu0 0.0
    %560 = vmatprep.subr.mxu0 0.0
    %561 = vmatpush2.xpose.msra.mxu0 0.0
    %562 = vmatprep.subr.mxu0 0.0
    %563 = vmatpush2.xpose.msra.mxu0 0.0
    %564 = vmatprep.subr.mxu0 0.0
    %565 = vmatpush2.xpose.msra.mxu0 0.0
    %566 = vmatprep.subr.mxu0 0.0
    %567 = vmatpush2.xpose.msra.mxu0 0.0
    %568 = vmatprep.subr.mxu0 0.0
    %569 = vmatpush2.xpose.msra.mxu0 0.0
    %570 = vmatprep.subr.mxu0 0.0
    %571 = vmatpush2.xpose.msra.mxu0 0.0
    %572 = vmatprep.subr.mxu0 0.0
    %573 = vmatpush2.xpose.msra.mxu0 0.0
    %574 = vmatprep.subr.mxu0 0.0
    %575 = vmatpush2.xpose.msra.mxu0 0.0
    %576 = vmatprep.subr.mxu0 0.0
    %577 = vmatpush2.xpose.msra.mxu0 0.0
    %578 = vmatprep.mubr.f32.mxu0 0.0
    %579 = vmatmul.mubr.f32.gmra.mxu0 %v506
    %v580 = vpop.f32.mrf.mxu0
    %v581 = vadd.f32 %v97, %v580
    %v582 = vpop.f32.mrf.mxu0
    %583 = vdwg.mxu0
    %vm584 = vcmask 73728
    %v585 = vsel %vm584, %v497, -inf
    %586 = vmax.xlane.f32.xlu0 %v585
    %v587 = vpop.xlane.xlu0 %586
    %v588 = vsel %vm584, %v581, -inf
    %589 = vmax.xlane.f32.xlu0 %v588
    %v590 = vpop.xlane.xlu0 %589
    %v591 = vsub.f32 %v497, %v587
    %v592 = vsub.f32 %v581, %v590
    %v593 = vmul.f32 %v591, 1.442695
    %v594 = vpow.pop %v593
    %v595 = vmul.f32 %v592, 1.442695
    %v596 = vpow.pop %v595
    %v597 = vsel %vm584, %v594, 0.0
    %598 = vadd.xlane.f32.xlu0 %v597
    %v599 = vpop.xlane.xlu0 %598
    %v600 = vsel %vm584, %v596, 0.0
    %601 = vadd.xlane.f32.xlu0 %v600
    %v602 = vpop.xlane.xlu0 %601
    %v603 = vrcp.pop %v599
    %v604 = vrcp.pop %v602
    %v605 = vmul.f32 %v594, %v603
    %v606 = vmul.f32 %v596, %v604
    %vm607 = vcmask 80896
    %v609 = vsel %vm607, %v605, 0
    %vm611 = vcmask 1041408
    %v613 = vsel %vm611, %v67, 0
    %615 = vmatprep.subr.mxu0 0.0
    %616 = vmatpush1.msra.mxu0 0.0
    %617 = vmatprep.subr.mxu0 0.0
    %618 = vmatpush1.msra.mxu0 0.0
    %619 = vmatprep.subr.mxu0 0.0
    %620 = vmatpush1.msra.mxu0 0.0
    %621 = vmatprep.subr.mxu0 0.0
    %622 = vmatpush1.msra.mxu0 0.0
    %623 = vmatprep.subr.mxu0 0.0
    %624 = vmatpush1.msra.mxu0 0.0
    %625 = vmatprep.subr.mxu0 0.0
    %626 = vmatpush1.msra.mxu0 0.0
    %627 = vmatprep.subr.mxu0 0.0
    %628 = vmatpush1.msra.mxu0 0.0
    %629 = vmatprep.subr.mxu0 0.0
    %630 = vmatpush1.msra.mxu0 0.0
    %631 = vmatprep.subr.mxu0 0.0
    %632 = vmatpush1.msra.mxu0 0.0
    %633 = vmatprep.subr.mxu0 0.0
    %634 = vmatpush1.msra.mxu0 0.0
    %635 = vmatprep.subr.mxu0 0.0
    %636 = vmatpush1.msra.mxu0 0.0
    %637 = vmatprep.subr.mxu0 0.0
    %638 = vmatpush1.msra.mxu0 0.0
    %639 = vmatprep.subr.mxu0 0.0
    %640 = vmatpush1.msra.mxu0 0.0
    %641 = vmatprep.subr.mxu0 0.0
    %642 = vmatpush1.msra.mxu0 0.0
    %643 = vmatprep.subr.mxu0 0.0
    %644 = vmatpush1.msra.mxu0 %v613
    %645 = vmatprep.subr.mxu0 0.0
    %646 = vmatpush1.msra.mxu0 %v66
    %647 = vmatprep.subr.mxu0 0.0
    %648 = vmatpush2.msra.mxu0 0.0
    %649 = vmatprep.subr.mxu0 0.0
    %650 = vmatpush2.msra.mxu0 0.0
    %651 = vmatprep.subr.mxu0 0.0
    %652 = vmatpush2.msra.mxu0 0.0
    %653 = vmatprep.subr.mxu0 0.0
    %654 = vmatpush2.msra.mxu0 0.0
    %655 = vmatprep.subr.mxu0 0.0
    %656 = vmatpush2.msra.mxu0 0.0
    %657 = vmatprep.subr.mxu0 0.0
    %658 = vmatpush2.msra.mxu0 0.0
    %659 = vmatprep.subr.mxu0 0.0
    %660 = vmatpush2.msra.mxu0 0.0
    %661 = vmatprep.subr.mxu0 0.0
    %662 = vmatpush2.msra.mxu0 0.0
    %663 = vmatprep.subr.mxu0 0.0
    %664 = vmatpush2.msra.mxu0 0.0
    %665 = vmatprep.subr.mxu0 0.0
    %666 = vmatpush2.msra.mxu0 0.0
    %667 = vmatprep.subr.mxu0 0.0
    %668 = vmatpush2.msra.mxu0 0.0
    %669 = vmatprep.subr.mxu0 0.0
    %670 = vmatpush2.msra.mxu0 0.0
    %671 = vmatprep.subr.mxu0 0.0
    %672 = vmatpush2.msra.mxu0 0.0
    %673 = vmatprep.subr.mxu0 0.0
    %674 = vmatpush2.msra.mxu0 0.0
    %675 = vmatprep.subr.mxu0 0.0
    %676 = vmatpush2.msra.mxu0 0.0
    %677 = vmatprep.subr.mxu0 0.0
    %678 = vmatpush2.msra.mxu0 0.0
    %679 = vmatprep.mubr.f32.mxu0 0.0
    %680 = vmatmul.mubr.f32.gmra.mxu0 %v609
    %v681 = vpop.f32.mrf.mxu0
    %v682 = vadd.f32 0.0, %v681
    %v683 = vpop.f32.mrf.mxu0
    %684 = vdwg.mxu0
    %v686 = vsel %vm607, %v606, 0
    %v689 = vsel %vm611, %v69, 0
    %691 = vmatprep.subr.mxu0 0.0
    %692 = vmatpush1.msra.mxu0 0.0
    %693 = vmatprep.subr.mxu0 0.0
    %694 = vmatpush1.msra.mxu0 0.0
    %695 = vmatprep.subr.mxu0 0.0
    %696 = vmatpush1.msra.mxu0 0.0
    %697 = vmatprep.subr.mxu0 0.0
    %698 = vmatpush1.msra.mxu0 0.0
    %699 = vmatprep.subr.mxu0 0.0
    %700 = vmatpush1.msra.mxu0 0.0
    %701 = vmatprep.subr.mxu0 0.0
    %702 = vmatpush1.msra.mxu0 0.0
    %703 = vmatprep.subr.mxu0 0.0
    %704 = vmatpush1.msra.mxu0 0.0
    %705 = vmatprep.subr.mxu0 0.0
    %706 = vmatpush1.msra.mxu0 0.0
    %707 = vmatprep.subr.mxu0 0.0
    %708 = vmatpush1.msra.mxu0 0.0
    %709 = vmatprep.subr.mxu0 0.0
    %710 = vmatpush1.msra.mxu0 0.0
    %711 = vmatprep.subr.mxu0 0.0
    %712 = vmatpush1.msra.mxu0 0.0
    %713 = vmatprep.subr.mxu0 0.0
    %714 = vmatpush1.msra.mxu0 0.0
    %715 = vmatprep.subr.mxu0 0.0
    %716 = vmatpush1.msra.mxu0 0.0
    %717 = vmatprep.subr.mxu0 0.0
    %718 = vmatpush1.msra.mxu0 0.0
    %719 = vmatprep.subr.mxu0 0.0
    %720 = vmatpush1.msra.mxu0 %v689
    %721 = vmatprep.subr.mxu0 0.0
    %722 = vmatpush1.msra.mxu0 %v68
    %723 = vmatprep.subr.mxu0 0.0
    %724 = vmatpush2.msra.mxu0 0.0
    %725 = vmatprep.subr.mxu0 0.0
    %726 = vmatpush2.msra.mxu0 0.0
    %727 = vmatprep.subr.mxu0 0.0
    %728 = vmatpush2.msra.mxu0 0.0
    %729 = vmatprep.subr.mxu0 0.0
    %730 = vmatpush2.msra.mxu0 0.0
    %731 = vmatprep.subr.mxu0 0.0
    %732 = vmatpush2.msra.mxu0 0.0
    %733 = vmatprep.subr.mxu0 0.0
    %734 = vmatpush2.msra.mxu0 0.0
    %735 = vmatprep.subr.mxu0 0.0
    %736 = vmatpush2.msra.mxu0 0.0
    %737 = vmatprep.subr.mxu0 0.0
    %738 = vmatpush2.msra.mxu0 0.0
    %739 = vmatprep.subr.mxu0 0.0
    %740 = vmatpush2.msra.mxu0 0.0
    %741 = vmatprep.subr.mxu0 0.0
    %742 = vmatpush2.msra.mxu0 0.0
    %743 = vmatprep.subr.mxu0 0.0
    %744 = vmatpush2.msra.mxu0 0.0
    %745 = vmatprep.subr.mxu0 0.0
    %746 = vmatpush2.msra.mxu0 0.0
    %747 = vmatprep.subr.mxu0 0.0
    %748 = vmatpush2.msra.mxu0 0.0
    %749 = vmatprep.subr.mxu0 0.0
    %750 = vmatpush2.msra.mxu0 0.0
    %751 = vmatprep.subr.mxu0 0.0
    %752 = vmatpush2.msra.mxu0 0.0
    %753 = vmatprep.subr.mxu0 0.0
    %754 = vmatpush2.msra.mxu0 0.0
    %755 = vmatprep.mubr.f32.mxu0 0.0
    %756 = vmatmul.mubr.f32.gmra.mxu0 %v686
    %v757 = vpop.f32.mrf.mxu0
    %v758 = vadd.f32 0.0, %v757
    %v759 = vpop.f32.mrf.mxu0
    %760 = vdwg.mxu0
    %v762 = vsel %vm142, %v70, 0
    %764 = vmatprep.subr.mxu0 0.0
    %765 = vmatpush1.xpose.msra.mxu0 0.0
    %766 = vmatprep.subr.mxu0 0.0
    %767 = vmatpush1.xpose.msra.mxu0 0.0
    %768 = vmatprep.subr.mxu0 0.0
    %769 = vmatpush1.xpose.msra.mxu0 0.0
    %770 = vmatprep.subr.mxu0 0.0
    %771 = vmatpush1.xpose.msra.mxu0 0.0
    %772 = vmatprep.subr.mxu0 0.0
    %773 = vmatpush1.xpose.msra.mxu0 0.0
    %774 = vmatprep.subr.mxu0 0.0
    %775 = vmatpush1.xpose.msra.mxu0 0.0
    %776 = vmatprep.subr.mxu0 0.0
    %777 = vmatpush1.xpose.msra.mxu0 0.0
    %778 = vmatprep.subr.mxu0 0.0
    %779 = vmatpush1.xpose.msra.mxu0 0.0
    %780 = vmatprep.subr.mxu0 0.0
    %781 = vmatpush1.xpose.msra.mxu0 0.0
    %782 = vmatprep.subr.mxu0 0.0
    %783 = vmatpush1.xpose.msra.mxu0 0.0
    %784 = vmatprep.subr.mxu0 0.0
    %785 = vmatpush1.xpose.msra.mxu0 0.0
    %786 = vmatprep.subr.mxu0 0.0
    %787 = vmatpush1.xpose.msra.mxu0 0.0
    %788 = vmatprep.subr.mxu0 0.0
    %789 = vmatpush1.xpose.msra.mxu0 0.0
    %790 = vmatprep.subr.mxu0 0.0
    %791 = vmatpush1.xpose.msra.mxu0 0.0
    %792 = vmatprep.subr.mxu0 0.0
    %793 = vmatpush1.xpose.msra.mxu0 0.0
    %794 = vmatprep.subr.mxu0 0.0
    %795 = vmatpush1.xpose.msra.mxu0 %v762
    %796 = vmatprep.subr.mxu0 0.0
    %797 = vmatpush2.xpose.msra.mxu0 0.0
    %798 = vmatprep.subr.mxu0 0.0
    %799 = vmatpush2.xpose.msra.mxu0 0.0
    %800 = vmatprep.subr.mxu0 0.0
    %801 = vmatpush2.xpose.msra.mxu0 0.0
    %802 = vmatprep.subr.mxu0 0.0
    %803 = vmatpush2.xpose.msra.mxu0 0.0
    %804 = vmatprep.subr.mxu0 0.0
    %805 = vmatpush2.xpose.msra.mxu0 0.0
    %806 = vmatprep.subr.mxu0 0.0
    %807 = vmatpush2.xpose.msra.mxu0 0.0
    %808 = vmatprep.subr.mxu0 0.0
    %809 = vmatpush2.xpose.msra.mxu0 0.0
    %810 = vmatprep.subr.mxu0 0.0
    %811 = vmatpush2.xpose.msra.mxu0 0.0
    %812 = vmatprep.subr.mxu0 0.0
    %813 = vmatpush2.xpose.msra.mxu0 0.0
    %814 = vmatprep.subr.mxu0 0.0
    %815 = vmatpush2.xpose.msra.mxu0 0.0
    %816 = vmatprep.subr.mxu0 0.0
    %817 = vmatpush2.xpose.msra.mxu0 0.0
    %818 = vmatprep.subr.mxu0 0.0
    %819 = vmatpush2.xpose.msra.mxu0 0.0
    %820 = vmatprep.subr.mxu0 0.0
    %821 = vmatpush2.xpose.msra.mxu0 0.0
    %822 = vmatprep.subr.mxu0 0.0
    %823 = vmatpush2.xpose.msra.mxu0 0.0
    %824 = vmatprep.subr.mxu0 0.0
    %825 = vmatpush2.xpose.msra.mxu0 0.0
    %826 = vmatprep.subr.mxu0 0.0
    %827 = vmatpush2.xpose.msra.mxu0 0.0
    %828 = vmatprep.mubr.f32.mxu0 0.0
    %829 = vmatmul.mubr.f32.gmra.mxu0 %v422
    %v830 = vpop.f32.mrf.mxu0
    %v831 = vadd.f32 %v116, %v830
    %v832 = vpop.f32.mrf.mxu0
    %833 = vdwg.mxu0
    %v835 = vsel %vm142, %v71, 0
    %837 = vmatprep.subr.mxu0 0.0
    %838 = vmatpush1.xpose.msra.mxu0 0.0
    %839 = vmatprep.subr.mxu0 0.0
    %840 = vmatpush1.xpose.msra.mxu0 0.0
    %841 = vmatprep.subr.mxu0 0.0
    %842 = vmatpush1.xpose.msra.mxu0 0.0
    %843 = vmatprep.subr.mxu0 0.0
    %844 = vmatpush1.xpose.msra.mxu0 0.0
    %845 = vmatprep.subr.mxu0 0.0
    %846 = vmatpush1.xpose.msra.mxu0 0.0
    %847 = vmatprep.subr.mxu0 0.0
    %848 = vmatpush1.xpose.msra.mxu0 0.0
    %849 = vmatprep.subr.mxu0 0.0
    %850 = vmatpush1.xpose.msra.mxu0 0.0
    %851 = vmatprep.subr.mxu0 0.0
    %852 = vmatpush1.xpose.msra.mxu0 0.0
    %853 = vmatprep.subr.mxu0 0.0
    %854 = vmatpush1.xpose.msra.mxu0 0.0
    %855 = vmatprep.subr.mxu0 0.0
    %856 = vmatpush1.xpose.msra.mxu0 0.0
    %857 = vmatprep.subr.mxu0 0.0
    %858 = vmatpush1.xpose.msra.mxu0 0.0
    %859 = vmatprep.subr.mxu0 0.0
    %860 = vmatpush1.xpose.msra.mxu0 0.0
    %861 = vmatprep.subr.mxu0 0.0
    %862 = vmatpush1.xpose.msra.mxu0 0.0
    %863 = vmatprep.subr.mxu0 0.0
    %864 = vmatpush1.xpose.msra.mxu0 0.0
    %865 = vmatprep.subr.mxu0 0.0
    %866 = vmatpush1.xpose.msra.mxu0 0.0
    %867 = vmatprep.subr.mxu0 0.0
    %868 = vmatpush1.xpose.msra.mxu0 %v835
    %869 = vmatprep.subr.mxu0 0.0
    %870 = vmatpush2.xpose.msra.mxu0 0.0
    %871 = vmatprep.subr.mxu0 0.0
    %872 = vmatpush2.xpose.msra.mxu0 0.0
    %873 = vmatprep.subr.mxu0 0.0
    %874 = vmatpush2.xpose.msra.mxu0 0.0
    %875 = vmatprep.subr.mxu0 0.0
    %876 = vmatpush2.xpose.msra.mxu0 0.0
    %877 = vmatprep.subr.mxu0 0.0
    %878 = vmatpush2.xpose.msra.mxu0 0.0
    %879 = vmatprep.subr.mxu0 0.0
    %880 = vmatpush2.xpose.msra.mxu0 0.0
    %881 = vmatprep.subr.mxu0 0.0
    %882 = vmatpush2.xpose.msra.mxu0 0.0
    %883 = vmatprep.subr.mxu0 0.0
    %884 = vmatpush2.xpose.msra.mxu0 0.0
    %885 = vmatprep.subr.mxu0 0.0
    %886 = vmatpush2.xpose.msra.mxu0 0.0
    %887 = vmatprep.subr.mxu0 0.0
    %888 = vmatpush2.xpose.msra.mxu0 0.0
    %889 = vmatprep.subr.mxu0 0.0
    %890 = vmatpush2.xpose.msra.mxu0 0.0
    %891 = vmatprep.subr.mxu0 0.0
    %892 = vmatpush2.xpose.msra.mxu0 0.0
    %893 = vmatprep.subr.mxu0 0.0
    %894 = vmatpush2.xpose.msra.mxu0 0.0
    %895 = vmatprep.subr.mxu0 0.0
    %896 = vmatpush2.xpose.msra.mxu0 0.0
    %897 = vmatprep.subr.mxu0 0.0
    %898 = vmatpush2.xpose.msra.mxu0 0.0
    %899 = vmatprep.subr.mxu0 0.0
    %900 = vmatpush2.xpose.msra.mxu0 0.0
    %901 = vmatprep.mubr.f32.mxu0 0.0
    %902 = vmatmul.mubr.f32.gmra.mxu0 %v506
    %v903 = vpop.f32.mrf.mxu0
    %v904 = vadd.f32 %v123, %v903
    %v905 = vpop.f32.mrf.mxu0
    %906 = vdwg.mxu0
    %vm907 = vcmask 49152
    %v908 = vsel %vm907, %v831, -inf
    %909 = vmax.xlane.f32.xlu0 %v908
    %v910 = vpop.xlane.xlu0 %909
    %v911 = vsel %vm907, %v904, -inf
    %912 = vmax.xlane.f32.xlu0 %v911
    %v913 = vpop.xlane.xlu0 %912
    %v914 = vsub.f32 %v831, %v910
    %v915 = vsub.f32 %v904, %v913
    %v916 = vmul.f32 %v914, 1.442695
    %v917 = vpow.pop %v916
    %v918 = vmul.f32 %v915, 1.442695
    %v919 = vpow.pop %v918
    %v920 = vsel %vm907, %v917, 0.0
    %921 = vadd.xlane.f32.xlu0 %v920
    %v922 = vpop.xlane.xlu0 %921
    %v923 = vsel %vm907, %v919, 0.0
    %924 = vadd.xlane.f32.xlu0 %v923
    %v925 = vpop.xlane.xlu0 %924
    %v926 = vrcp.pop %v922
    %v927 = vrcp.pop %v925
    %v928 = vmul.f32 %v917, %v926
    %v929 = vmul.f32 %v919, %v927
    %vm930 = vcmask 56320
    %v932 = vsel %vm930, %v928, 0
    %vm934 = vcmask 1046528
    %v936 = vsel %vm934, %v72, 0
    %938 = vmatprep.subr.mxu0 0.0
    %939 = vmatpush1.msra.mxu0 0.0
    %940 = vmatprep.subr.mxu0 0.0
    %941 = vmatpush1.msra.mxu0 0.0
    %942 = vmatprep.subr.mxu0 0.0
    %943 = vmatpush1.msra.mxu0 0.0
    %944 = vmatprep.subr.mxu0 0.0
    %945 = vmatpush1.msra.mxu0 0.0
    %946 = vmatprep.subr.mxu0 0.0
    %947 = vmatpush1.msra.mxu0 0.0
    %948 = vmatprep.subr.mxu0 0.0
    %949 = vmatpush1.msra.mxu0 0.0
    %950 = vmatprep.subr.mxu0 0.0
    %951 = vmatpush1.msra.mxu0 0.0
    %952 = vmatprep.subr.mxu0 0.0
    %953 = vmatpush1.msra.mxu0 0.0
    %954 = vmatprep.subr.mxu0 0.0
    %955 = vmatpush1.msra.mxu0 0.0
    %956 = vmatprep.subr.mxu0 0.0
    %957 = vmatpush1.msra.mxu0 0.0
    %958 = vmatprep.subr.mxu0 0.0
    %959 = vmatpush1.msra.mxu0 0.0
    %960 = vmatprep.subr.mxu0 0.0
    %961 = vmatpush1.msra.mxu0 0.0
    %962 = vmatprep.subr.mxu0 0.0
    %963 = vmatpush1.msra.mxu0 0.0
    %964 = vmatprep.subr.mxu0 0.0
    %965 = vmatpush1.msra.mxu0 0.0
    %966 = vmatprep.subr.mxu0 0.0
    %967 = vmatpush1.msra.mxu0 0.0
    %968 = vmatprep.subr.mxu0 0.0
    %969 = vmatpush1.msra.mxu0 %v936
    %970 = vmatprep.subr.mxu0 0.0
    %971 = vmatpush2.msra.mxu0 0.0
    %972 = vmatprep.subr.mxu0 0.0
    %973 = vmatpush2.msra.mxu0 0.0
    %974 = vmatprep.subr.mxu0 0.0
    %975 = vmatpush2.msra.mxu0 0.0
    %976 = vmatprep.subr.mxu0 0.0
    %977 = vmatpush2.msra.mxu0 0.0
    %978 = vmatprep.subr.mxu0 0.0
    %979 = vmatpush2.msra.mxu0 0.0
    %980 = vmatprep.subr.mxu0 0.0
    %981 = vmatpush2.msra.mxu0 0.0
    %982 = vmatprep.subr.mxu0 0.0
    %983 = vmatpush2.msra.mxu0 0.0
    %984 = vmatprep.subr.mxu0 0.0
    %985 = vmatpush2.msra.mxu0 0.0
    %986 = vmatprep.subr.mxu0 0.0
    %987 = vmatpush2.msra.mxu0 0.0
    %988 = vmatprep.subr.mxu0 0.0
    %989 = vmatpush2.msra.mxu0 0.0
    %990 = vmatprep.subr.mxu0 0.0
    %991 = vmatpush2.msra.mxu0 0.0
    %992 = vmatprep.subr.mxu0 0.0
    %993 = vmatpush2.msra.mxu0 0.0
    %994 = vmatprep.subr.mxu0 0.0
    %995 = vmatpush2.msra.mxu0 0.0
    %996 = vmatprep.subr.mxu0 0.0
    %997 = vmatpush2.msra.mxu0 0.0
    %998 = vmatprep.subr.mxu0 0.0
    %999 = vmatpush2.msra.mxu0 0.0
    %1000 = vmatprep.subr.mxu0 0.0
    %1001 = vmatpush2.msra.mxu0 0.0
    %1002 = vmatprep.mubr.f32.mxu0 0.0
    %1003 = vmatmul.mubr.f32.gmra.mxu0 %v932
    %v1004 = vpop.f32.mrf.mxu0
    %v1005 = vadd.f32 0.0, %v1004
    %v1006 = vpop.f32.mrf.mxu0
    %1007 = vdwg.mxu0
    %v1009 = vsel %vm930, %v929, 0
    %v1012 = vsel %vm934, %v73, 0
    %1014 = vmatprep.subr.mxu0 0.0
    %1015 = vmatpush1.msra.mxu0 0.0
    %1016 = vmatprep.subr.mxu0 0.0
    %1017 = vmatpush1.msra.mxu0 0.0
    %1018 = vmatprep.subr.mxu0 0.0
    %1019 = vmatpush1.msra.mxu0 0.0
    %1020 = vmatprep.subr.mxu0 0.0
    %1021 = vmatpush1.msra.mxu0 0.0
    %1022 = vmatprep.subr.mxu0 0.0
    %1023 = vmatpush1.msra.mxu0 0.0
    %1024 = vmatprep.subr.mxu0 0.0
    %1025 = vmatpush1.msra.mxu0 0.0
    %1026 = vmatprep.subr.mxu0 0.0
    %1027 = vmatpush1.msra.mxu0 0.0
    %1028 = vmatprep.subr.mxu0 0.0
    %1029 = vmatpush1.msra.mxu0 0.0
    %1030 = vmatprep.subr.mxu0 0.0
    %1031 = vmatpush1.msra.mxu0 0.0
    %1032 = vmatprep.subr.mxu0 0.0
    %1033 = vmatpush1.msra.mxu0 0.0
    %1034 = vmatprep.subr.mxu0 0.0
    %1035 = vmatpush1.msra.mxu0 0.0
    %1036 = vmatprep.subr.mxu0 0.0
    %1037 = vmatpush1.msra.mxu0 0.0
    %1038 = vmatprep.subr.mxu0 0.0
    %1039 = vmatpush1.msra.mxu0 0.0
    %1040 = vmatprep.subr.mxu0 0.0
    %1041 = vmatpush1.msra.mxu0 0.0
    %1042 = vmatprep.subr.mxu0 0.0
    %1043 = vmatpush1.msra.mxu0 0.0
    %1044 = vmatprep.subr.mxu0 0.0
    %1045 = vmatpush1.msra.mxu0 %v1012
    %1046 = vmatprep.subr.mxu0 0.0
    %1047 = vmatpush2.msra.mxu0 0.0
    %1048 = vmatprep.subr.mxu0 0.0
    %1049 = vmatpush2.msra.mxu0 0.0
    %1050 = vmatprep.subr.mxu0 0.0
    %1051 = vmatpush2.msra.mxu0 0.0
    %1052 = vmatprep.subr.mxu0 0.0
    %1053 = vmatpush2.msra.mxu0 0.0
    %1054 = vmatprep.subr.mxu0 0.0
    %1055 = vmatpush2.msra.mxu0 0.0
    %1056 = vmatprep.subr.mxu0 0.0
    %1057 = vmatpush2.msra.mxu0 0.0
    %1058 = vmatprep.subr.mxu0 0.0
    %1059 = vmatpush2.msra.mxu0 0.0
    %1060 = vmatprep.subr.mxu0 0.0
    %1061 = vmatpush2.msra.mxu0 0.0
    %1062 = vmatprep.subr.mxu0 0.0
    %1063 = vmatpush2.msra.mxu0 0.0
    %1064 = vmatprep.subr.mxu0 0.0
    %1065 = vmatpush2.msra.mxu0 0.0
    %1066 = vmatprep.subr.mxu0 0.0
    %1067 = vmatpush2.msra.mxu0 0.0
    %1068 = vmatprep.subr.mxu0 0.0
    %1069 = vmatpush2.msra.mxu0 0.0
    %1070 = vmatprep.subr.mxu0 0.0
    %1071 = vmatpush2.msra.mxu0 0.0
    %1072 = vmatprep.subr.mxu0 0.0
    %1073 = vmatpush2.msra.mxu0 0.0
    %1074 = vmatprep.subr.mxu0 0.0
    %1075 = vmatpush2.msra.mxu0 0.0
    %1076 = vmatprep.subr.mxu0 0.0
    %1077 = vmatpush2.msra.mxu0 0.0
    %1078 = vmatprep.mubr.f32.mxu0 0.0
    %1079 = vmatmul.mubr.f32.gmra.mxu0 %v1009
    %v1080 = vpop.f32.mrf.mxu0
    %v1081 = vadd.f32 0.0, %v1080
    %v1082 = vpop.f32.mrf.mxu0
    %1083 = vdwg.mxu0
    %v1086 = vrot.slane %v758, 7
    %vm1087 = vcmask 1041409
    %v1088 = vsel %vm1087, %v1086, %v682
    %v1090 = vadd.f32 %v413, %v1088
    %v1091 = vtanh.pop %v1090
    %v1094 = vrot.slane %v1081, 7
    %v1095 = vsel %vm1087, %v1094, %v1005
    %1096 = vrot.lane.b32.xlu0 %v1095, 32
    %v1097 = vpop.permute.xlu0 %1096
    %v1099 = vadd.f32 %v413, %v1097
    %v1100 = vtanh.pop %v1099
    %vm1102 = vcmask 254976
    %1103 = vst.msk [vmem:[#allocation5] sm:$0x3] %vm1102, %v343
    %1104 = vst.msk [vmem:[#allocation7] sm:$0x3] %vm1102, %v1091
    %1106 = vrot.lane.b32.xlu0 %v1100, 96
    %v1107 = vpop.permute.xlu0 %1106
    %1109 = vst.msk [vmem:[#allocation9] sm:$0x3] %vm1102, %v1107
    %v1110 = vrot.slane %v606, 7
    %v1111 = vsel %vm1087, %v1110, %v605
    %vm1113 = vcmask 74752
    %1114 = vst.msk [vmem:[#allocation10] sm:$0x3] %vm1113, %v1111
    %v1115 = vrot.slane %v929, 7
    %v1116 = vsel %vm1087, %v1115, %v928
    %vm1118 = vcmask 50176
    %1119 = vst.msk [vmem:[#allocation12] sm:$0x3] %vm1118, %v1116
    %s1120 = scalar_lea.vmem %s0, 2
    %v1121 = vld [vmem:[%s1120] sm:$0x3]
    %v1123 = vsel %vm142, %v1091, 0
    %1125 = vmatprep.subr.mxu0 0.0
    %1126 = vmatpush1.msra.mxu0 0.0
    %1127 = vmatprep.subr.mxu0 0.0
    %1128 = vmatpush1.msra.mxu0 0.0
    %1129 = vmatprep.subr.mxu0 0.0
    %1130 = vmatpush1.msra.mxu0 0.0
    %1131 = vmatprep.subr.mxu0 0.0
    %1132 = vmatpush1.msra.mxu0 0.0
    %1133 = vmatprep.subr.mxu0 0.0
    %1134 = vmatpush1.msra.mxu0 0.0
    %1135 = vmatprep.subr.mxu0 0.0
    %1136 = vmatpush1.msra.mxu0 0.0
    %1137 = vmatprep.subr.mxu0 0.0
    %1138 = vmatpush1.msra.mxu0 0.0
    %1139 = vmatprep.subr.mxu0 0.0
    %1140 = vmatpush1.msra.mxu0 0.0
    %1141 = vmatprep.subr.mxu0 0.0
    %1142 = vmatpush1.msra.mxu0 0.0
    %1143 = vmatprep.subr.mxu0 0.0
    %1144 = vmatpush1.msra.mxu0 0.0
    %1145 = vmatprep.subr.mxu0 0.0
    %1146 = vmatpush1.msra.mxu0 0.0
    %1147 = vmatprep.subr.mxu0 0.0
    %1148 = vmatpush1.msra.mxu0 0.0
    %1149 = vmatprep.subr.mxu0 0.0
    %1150 = vmatpush1.msra.mxu0 %v129
    %1151 = vmatprep.subr.mxu0 0.0
    %1152 = vmatpush1.msra.mxu0 %v128
    %1153 = vmatprep.subr.mxu0 0.0
    %1154 = vmatpush1.msra.mxu0 %v127
    %1155 = vmatprep.subr.mxu0 0.0
    %1156 = vmatpush1.msra.mxu0 %v126
    %1157 = vmatprep.subr.mxu0 0.0
    %1158 = vmatpush2.msra.mxu0 0.0
    %1159 = vmatprep.subr.mxu0 0.0
    %1160 = vmatpush2.msra.mxu0 0.0
    %1161 = vmatprep.subr.mxu0 0.0
    %1162 = vmatpush2.msra.mxu0 0.0
    %1163 = vmatprep.subr.mxu0 0.0
    %1164 = vmatpush2.msra.mxu0 0.0
    %1165 = vmatprep.subr.mxu0 0.0
    %1166 = vmatpush2.msra.mxu0 0.0
    %1167 = vmatprep.subr.mxu0 0.0
    %1168 = vmatpush2.msra.mxu0 0.0
    %1169 = vmatprep.subr.mxu0 0.0
    %1170 = vmatpush2.msra.mxu0 0.0
    %1171 = vmatprep.subr.mxu0 0.0
    %1172 = vmatpush2.msra.mxu0 0.0
    %1173 = vmatprep.subr.mxu0 0.0
    %1174 = vmatpush2.msra.mxu0 0.0
    %1175 = vmatprep.subr.mxu0 0.0
    %1176 = vmatpush2.msra.mxu0 0.0
    %1177 = vmatprep.subr.mxu0 0.0
    %1178 = vmatpush2.msra.mxu0 0.0
    %1179 = vmatprep.subr.mxu0 0.0
    %1180 = vmatpush2.msra.mxu0 0.0
    %1181 = vmatprep.subr.mxu0 0.0
    %1182 = vmatpush2.msra.mxu0 0.0
    %1183 = vmatprep.subr.mxu0 0.0
    %1184 = vmatpush2.msra.mxu0 0.0
    %1185 = vmatprep.subr.mxu0 0.0
    %1186 = vmatpush2.msra.mxu0 0.0
    %1187 = vmatprep.subr.mxu0 0.0
    %1188 = vmatpush2.msra.mxu0 0.0
    %1189 = vmatprep.mubr.f32.mxu0 0.0
    %1190 = vmatmul.mubr.f32.gmra.mxu0 %v1123
    %v1191 = vpop.f32.mrf.mxu0
    %v1192 = vadd.f32 0.0, %v1191
    %v1193 = vpop.f32.mrf.mxu0
    %1194 = vdwg.mxu0
    %v1195 = vadd.f32 %v1121, %v1192
    %1196 = vmatprep.subr.mxu0 0.0
    %1197 = vmatpush1.msra.mxu0 0.0
    %1198 = vmatprep.subr.mxu0 0.0
    %1199 = vmatpush1.msra.mxu0 0.0
    %1200 = vmatprep.subr.mxu0 0.0
    %1201 = vmatpush1.msra.mxu0 0.0
    %1202 = vmatprep.subr.mxu0 0.0
    %1203 = vmatpush1.msra.mxu0 0.0
    %1204 = vmatprep.subr.mxu0 0.0
    %1205 = vmatpush1.msra.mxu0 0.0
    %1206 = vmatprep.subr.mxu0 0.0
    %1207 = vmatpush1.msra.mxu0 0.0
    %1208 = vmatprep.subr.mxu0 0.0
    %1209 = vmatpush1.msra.mxu0 0.0
    %1210 = vmatprep.subr.mxu0 0.0
    %1211 = vmatpush1.msra.mxu0 0.0
    %1212 = vmatprep.subr.mxu0 0.0
    %1213 = vmatpush1.msra.mxu0 0.0
    %1214 = vmatprep.subr.mxu0 0.0
    %1215 = vmatpush1.msra.mxu0 0.0
    %1216 = vmatprep.subr.mxu0 0.0
    %1217 = vmatpush1.msra.mxu0 0.0
    %1218 = vmatprep.subr.mxu0 0.0
    %1219 = vmatpush1.msra.mxu0 0.0
    %1220 = vmatprep.subr.mxu0 0.0
    %1221 = vmatpush1.msra.mxu0 %v133
    %1222 = vmatprep.subr.mxu0 0.0
    %1223 = vmatpush1.msra.mxu0 %v132
    %1224 = vmatprep.subr.mxu0 0.0
    %1225 = vmatpush1.msra.mxu0 %v131
    %1226 = vmatprep.subr.mxu0 0.0
    %1227 = vmatpush1.msra.mxu0 %v130
    %1228 = vmatprep.subr.mxu0 0.0
    %1229 = vmatpush2.msra.mxu0 0.0
    %1230 = vmatprep.subr.mxu0 0.0
    %1231 = vmatpush2.msra.mxu0 0.0
    %1232 = vmatprep.subr.mxu0 0.0
    %1233 = vmatpush2.msra.mxu0 0.0
    %1234 = vmatprep.subr.mxu0 0.0
    %1235 = vmatpush2.msra.mxu0 0.0
    %1236 = vmatprep.subr.mxu0 0.0
    %1237 = vmatpush2.msra.mxu0 0.0
    %1238 = vmatprep.subr.mxu0 0.0
    %1239 = vmatpush2.msra.mxu0 0.0
    %1240 = vmatprep.subr.mxu0 0.0
    %1241 = vmatpush2.msra.mxu0 0.0
    %1242 = vmatprep.subr.mxu0 0.0
    %1243 = vmatpush2.msra.mxu0 0.0
    %1244 = vmatprep.subr.mxu0 0.0
    %1245 = vmatpush2.msra.mxu0 0.0
    %1246 = vmatprep.subr.mxu0 0.0
    %1247 = vmatpush2.msra.mxu0 0.0
    %1248 = vmatprep.subr.mxu0 0.0
    %1249 = vmatpush2.msra.mxu0 0.0
    %1250 = vmatprep.subr.mxu0 0.0
    %1251 = vmatpush2.msra.mxu0 0.0
    %1252 = vmatprep.subr.mxu0 0.0
    %1253 = vmatpush2.msra.mxu0 0.0
    %1254 = vmatprep.subr.mxu0 0.0
    %1255 = vmatpush2.msra.mxu0 0.0
    %1256 = vmatprep.subr.mxu0 0.0
    %1257 = vmatpush2.msra.mxu0 0.0
    %1258 = vmatprep.subr.mxu0 0.0
    %1259 = vmatpush2.msra.mxu0 0.0
    %1260 = vmatprep.mubr.f32.mxu0 0.0
    %1261 = vmatmul.mubr.f32.gmra.mxu0 %v344
    %v1262 = vpop.f32.mrf.mxu0
    %v1263 = vadd.f32 0.0, %v1262
    %v1264 = vpop.f32.mrf.mxu0
    %1265 = vdwg.mxu0
    %v1266 = vadd.f32 %v1195, %v1263
    %v1267 = vxor.u32 %v1266, 2147483648
    %v1268 = vmul.f32 %v1267, 1.442695
    %v1269 = vpow.pop %v1268
    %v1270 = vadd.f32 %v1269, 1.0
    %v1271 = vrcp.pop %v1270
    %v1272 = vmul.f32 1.0, %v1271
    %v1273 = vtanh.pop %v1266
    %v1274 = vmul.f32 %v1272, %v312
    %1276 = vrot.lane.b32.xlu0 %v1273, 64
    %v1277 = vpop.permute.xlu0 %1276
    %v1279 = vmul.f32 %v1272, %v1277
    %1281 = vrot.lane.b32.xlu0 %v1279, 32
    %v1282 = vpop.permute.xlu0 %1281
    %v1284 = vadd.f32 %v1274, %v1282
    %v1285 = vtanh.pop %v1284
    %1287 = vrot.lane.b32.xlu0 %v1285, 64
    %v1288 = vpop.permute.xlu0 %1287
    %v1290 = vmul.f32 %v1272, %v1288
    %v1293 = vunpack.c.l.s4 1966171168
    %v1294 = vunpack.c.0.s8 %v1293
    %v1295 = vlaneseq
    %v1296 = vshrl.u32 %v1295, 7
    %v1297 = vsub.s32 %v1294, %v1296
    %v1298 = vrot.slane %v1290, %v1297
    %v1299 = vcombine.high %v1298, %v1298
    %v1301 = vunpack.c.l.s4 1966171168
    %v1302 = vunpack.c.0.s8 %v1301
    %v1303 = vlaneseq
    %v1304 = vshrl.u32 %v1303, 7
    %v1305 = vsub.s32 %v1302, %v1304
    %v1306 = vrot.slane %v1298, %v1305
    %v1308 = vunpack.c.l.s4 1966171168
    %v1309 = vunpack.c.0.s8 %v1308
    %v1310 = vlaneseq
    %v1311 = vshrl.u32 %v1310, 7
    %v1312 = vsub.s32 %v1309, %v1311
    %v1313 = vrot.slane %v1299, %v1312
    %1314 = vrot.lane.b32.xlu0 %v1290, 32
    %v1315 = vpop.permute.xlu0 %1314
    %v1316 = vsel %vm142, %v1315, 0
    %1318 = vmatprep.subr.mxu0 0.0
    %1319 = vmatpush1.msra.mxu0 0.0
    %1320 = vmatprep.subr.mxu0 0.0
    %1321 = vmatpush1.msra.mxu0 0.0
    %1322 = vmatprep.subr.mxu0 0.0
    %1323 = vmatpush1.msra.mxu0 0.0
    %1324 = vmatprep.subr.mxu0 0.0
    %1325 = vmatpush1.msra.mxu0 0.0
    %1326 = vmatprep.subr.mxu0 0.0
    %1327 = vmatpush1.msra.mxu0 0.0
    %1328 = vmatprep.subr.mxu0 0.0
    %1329 = vmatpush1.msra.mxu0 0.0
    %1330 = vmatprep.subr.mxu0 0.0
    %1331 = vmatpush1.msra.mxu0 0.0
    %1332 = vmatprep.subr.mxu0 0.0
    %1333 = vmatpush1.msra.mxu0 0.0
    %1334 = vmatprep.subr.mxu0 0.0
    %1335 = vmatpush1.msra.mxu0 0.0
    %1336 = vmatprep.subr.mxu0 0.0
    %1337 = vmatpush1.msra.mxu0 0.0
    %1338 = vmatprep.subr.mxu0 0.0
    %1339 = vmatpush1.msra.mxu0 0.0
    %1340 = vmatprep.subr.mxu0 0.0
    %1341 = vmatpush1.msra.mxu0 0.0
    %1342 = vmatprep.subr.mxu0 0.0
    %1343 = vmatpush1.msra.mxu0 %v137
    %1344 = vmatprep.subr.mxu0 0.0
    %1345 = vmatpush1.msra.mxu0 %v136
    %1346 = vmatprep.subr.mxu0 0.0
    %1347 = vmatpush1.msra.mxu0 %v135
    %1348 = vmatprep.subr.mxu0 0.0
    %1349 = vmatpush1.msra.mxu0 %v134
    %1350 = vmatprep.subr.mxu0 0.0
    %1351 = vmatpush2.msra.mxu0 0.0
    %1352 = vmatprep.subr.mxu0 0.0
    %1353 = vmatpush2.msra.mxu0 0.0
    %1354 = vmatprep.subr.mxu0 0.0
    %1355 = vmatpush2.msra.mxu0 0.0
    %1356 = vmatprep.subr.mxu0 0.0
    %1357 = vmatpush2.msra.mxu0 0.0
    %1358 = vmatprep.subr.mxu0 0.0
    %1359 = vmatpush2.msra.mxu0 0.0
    %1360 = vmatprep.subr.mxu0 0.0
    %1361 = vmatpush2.msra.mxu0 0.0
    %1362 = vmatprep.subr.mxu0 0.0
    %1363 = vmatpush2.msra.mxu0 0.0
    %1364 = vmatprep.subr.mxu0 0.0
    %1365 = vmatpush2.msra.mxu0 0.0
    %1366 = vmatprep.subr.mxu0 0.0
    %1367 = vmatpush2.msra.mxu0 0.0
    %1368 = vmatprep.subr.mxu0 0.0
    %1369 = vmatpush2.msra.mxu0 0.0
    %1370 = vmatprep.subr.mxu0 0.0
    %1371 = vmatpush2.msra.mxu0 0.0
    %1372 = vmatprep.subr.mxu0 0.0
    %1373 = vmatpush2.msra.mxu0 0.0
    %1374 = vmatprep.subr.mxu0 0.0
    %1375 = vmatpush2.msra.mxu0 0.0
    %1376 = vmatprep.subr.mxu0 0.0
    %1377 = vmatpush2.msra.mxu0 0.0
    %1378 = vmatprep.subr.mxu0 0.0
    %1379 = vmatpush2.msra.mxu0 0.0
    %1380 = vmatprep.subr.mxu0 0.0
    %1381 = vmatpush2.msra.mxu0 0.0
    %1382 = vmatprep.mubr.f32.mxu0 0.0
    %1383 = vmatmul.mubr.f32.gmra.mxu0 %v1316
    %v1384 = vpop.f32.mrf.mxu0
    %v1385 = vadd.f32 0.0, %v1384
    %v1386 = vpop.f32.mrf.mxu0
    %1387 = vdwg.mxu0
    %v1388 = vlaneseq
    %v1389 = vshrl.u32 %v1388, 7
    %v1390 = vsub.s32 0, %v1389
    %v1391 = vrot.slane %v1306, %v1390
    %1392 = vrot.lane.b32.xlu0 %v1391, 32
    %v1393 = vpop.permute.xlu0 %1392
    %v1394 = vsel %vm142, %v1393, 0
    %1396 = vmatprep.subr.mxu0 0.0
    %1397 = vmatpush1.xpose.msra.mxu0 0.0
    %1398 = vmatprep.subr.mxu0 0.0
    %1399 = vmatpush1.xpose.msra.mxu0 0.0
    %1400 = vmatprep.subr.mxu0 0.0
    %1401 = vmatpush1.xpose.msra.mxu0 0.0
    %1402 = vmatprep.subr.mxu0 0.0
    %1403 = vmatpush1.xpose.msra.mxu0 0.0
    %1404 = vmatprep.subr.mxu0 0.0
    %1405 = vmatpush1.xpose.msra.mxu0 0.0
    %1406 = vmatprep.subr.mxu0 0.0
    %1407 = vmatpush1.xpose.msra.mxu0 0.0
    %1408 = vmatprep.subr.mxu0 0.0
    %1409 = vmatpush1.xpose.msra.mxu0 0.0
    %1410 = vmatprep.subr.mxu0 0.0
    %1411 = vmatpush1.xpose.msra.mxu0 0.0
    %1412 = vmatprep.subr.mxu0 0.0
    %1413 = vmatpush1.xpose.msra.mxu0 0.0
    %1414 = vmatprep.subr.mxu0 0.0
    %1415 = vmatpush1.xpose.msra.mxu0 0.0
    %1416 = vmatprep.subr.mxu0 0.0
    %1417 = vmatpush1.xpose.msra.mxu0 0.0
    %1418 = vmatprep.subr.mxu0 0.0
    %1419 = vmatpush1.xpose.msra.mxu0 0.0
    %1420 = vmatprep.subr.mxu0 0.0
    %1421 = vmatpush1.xpose.msra.mxu0 0.0
    %1422 = vmatprep.subr.mxu0 0.0
    %1423 = vmatpush1.xpose.msra.mxu0 0.0
    %1424 = vmatprep.subr.mxu0 0.0
    %1425 = vmatpush1.xpose.msra.mxu0 %v428
    %1426 = vmatprep.subr.mxu0 0.0
    %1427 = vmatpush1.xpose.msra.mxu0 %v425
    %1428 = vmatprep.subr.mxu0 0.0
    %1429 = vmatpush2.xpose.msra.mxu0 0.0
    %1430 = vmatprep.subr.mxu0 0.0
    %1431 = vmatpush2.xpose.msra.mxu0 0.0
    %1432 = vmatprep.subr.mxu0 0.0
    %1433 = vmatpush2.xpose.msra.mxu0 0.0
    %1434 = vmatprep.subr.mxu0 0.0
    %1435 = vmatpush2.xpose.msra.mxu0 0.0
    %1436 = vmatprep.subr.mxu0 0.0
    %1437 = vmatpush2.xpose.msra.mxu0 0.0
    %1438 = vmatprep.subr.mxu0 0.0
    %1439 = vmatpush2.xpose.msra.mxu0 0.0
    %1440 = vmatprep.subr.mxu0 0.0
    %1441 = vmatpush2.xpose.msra.mxu0 0.0
    %1442 = vmatprep.subr.mxu0 0.0
    %1443 = vmatpush2.xpose.msra.mxu0 0.0
    %1444 = vmatprep.subr.mxu0 0.0
    %1445 = vmatpush2.xpose.msra.mxu0 0.0
    %1446 = vmatprep.subr.mxu0 0.0
    %1447 = vmatpush2.xpose.msra.mxu0 0.0
    %1448 = vmatprep.subr.mxu0 0.0
    %1449 = vmatpush2.xpose.msra.mxu0 0.0
    %1450 = vmatprep.subr.mxu0 0.0
    %1451 = vmatpush2.xpose.msra.mxu0 0.0
    %1452 = vmatprep.subr.mxu0 0.0
    %1453 = vmatpush2.xpose.msra.mxu0 0.0
    %1454 = vmatprep.subr.mxu0 0.0
    %1455 = vmatpush2.xpose.msra.mxu0 0.0
    %1456 = vmatprep.subr.mxu0 0.0
    %1457 = vmatpush2.xpose.msra.mxu0 0.0
    %1458 = vmatprep.subr.mxu0 0.0
    %1459 = vmatpush2.xpose.msra.mxu0 0.0
    %1460 = vmatprep.mubr.f32.mxu0 0.0
    %1461 = vmatmul.mubr.f32.gmra.mxu0 %v1394
    %v1462 = vpop.f32.mrf.mxu0
    %v1463 = vadd.f32 %v90, %v1462
    %v1464 = vpop.f32.mrf.mxu0
    %1465 = vdwg.mxu0
    %v1466 = vlaneseq
    %v1467 = vshrl.u32 %v1466, 7
    %v1468 = vsub.s32 0, %v1467
    %v1469 = vrot.slane %v1313, %v1468
    %1470 = vrot.lane.b32.xlu0 %v1469, 32
    %v1471 = vpop.permute.xlu0 %1470
    %v1472 = vsel %vm142, %v1471, 0
    %1474 = vmatprep.subr.mxu0 0.0
    %1475 = vmatpush1.xpose.msra.mxu0 0.0
    %1476 = vmatprep.subr.mxu0 0.0
    %1477 = vmatpush1.xpose.msra.mxu0 0.0
    %1478 = vmatprep.subr.mxu0 0.0
    %1479 = vmatpush1.xpose.msra.mxu0 0.0
    %1480 = vmatprep.subr.mxu0 0.0
    %1481 = vmatpush1.xpose.msra.mxu0 0.0
    %1482 = vmatprep.subr.mxu0 0.0
    %1483 = vmatpush1.xpose.msra.mxu0 0.0
    %1484 = vmatprep.subr.mxu0 0.0
    %1485 = vmatpush1.xpose.msra.mxu0 0.0
    %1486 = vmatprep.subr.mxu0 0.0
    %1487 = vmatpush1.xpose.msra.mxu0 0.0
    %1488 = vmatprep.subr.mxu0 0.0
    %1489 = vmatpush1.xpose.msra.mxu0 0.0
    %1490 = vmatprep.subr.mxu0 0.0
    %1491 = vmatpush1.xpose.msra.mxu0 0.0
    %1492 = vmatprep.subr.mxu0 0.0
    %1493 = vmatpush1.xpose.msra.mxu0 0.0
    %1494 = vmatprep.subr.mxu0 0.0
    %1495 = vmatpush1.xpose.msra.mxu0 0.0
    %1496 = vmatprep.subr.mxu0 0.0
    %1497 = vmatpush1.xpose.msra.mxu0 0.0
    %1498 = vmatprep.subr.mxu0 0.0
    %1499 = vmatpush1.xpose.msra.mxu0 0.0
    %1500 = vmatprep.subr.mxu0 0.0
    %1501 = vmatpush1.xpose.msra.mxu0 0.0
    %1502 = vmatprep.subr.mxu0 0.0
    %1503 = vmatpush1.xpose.msra.mxu0 %v512
    %1504 = vmatprep.subr.mxu0 0.0
    %1505 = vmatpush1.xpose.msra.mxu0 %v509
    %1506 = vmatprep.subr.mxu0 0.0
    %1507 = vmatpush2.xpose.msra.mxu0 0.0
    %1508 = vmatprep.subr.mxu0 0.0
    %1509 = vmatpush2.xpose.msra.mxu0 0.0
    %1510 = vmatprep.subr.mxu0 0.0
    %1511 = vmatpush2.xpose.msra.mxu0 0.0
    %1512 = vmatprep.subr.mxu0 0.0
    %1513 = vmatpush2.xpose.msra.mxu0 0.0
    %1514 = vmatprep.subr.mxu0 0.0
    %1515 = vmatpush2.xpose.msra.mxu0 0.0
    %1516 = vmatprep.subr.mxu0 0.0
    %1517 = vmatpush2.xpose.msra.mxu0 0.0
    %1518 = vmatprep.subr.mxu0 0.0
    %1519 = vmatpush2.xpose.msra.mxu0 0.0
    %1520 = vmatprep.subr.mxu0 0.0
    %1521 = vmatpush2.xpose.msra.mxu0 0.0
    %1522 = vmatprep.subr.mxu0 0.0
    %1523 = vmatpush2.xpose.msra.mxu0 0.0
    %1524 = vmatprep.subr.mxu0 0.0
    %1525 = vmatpush2.xpose.msra.mxu0 0.0
    %1526 = vmatprep.subr.mxu0 0.0
    %1527 = vmatpush2.xpose.msra.mxu0 0.0
    %1528 = vmatprep.subr.mxu0 0.0
    %1529 = vmatpush2.xpose.msra.mxu0 0.0
    %1530 = vmatprep.subr.mxu0 0.0
    %1531 = vmatpush2.xpose.msra.mxu0 0.0
    %1532 = vmatprep.subr.mxu0 0.0
    %1533 = vmatpush2.xpose.msra.mxu0 0.0
    %1534 = vmatprep.subr.mxu0 0.0
    %1535 = vmatpush2.xpose.msra.mxu0 0.0
    %1536 = vmatprep.subr.mxu0 0.0
    %1537 = vmatpush2.xpose.msra.mxu0 0.0
    %1538 = vmatprep.mubr.f32.mxu0 0.0
    %1539 = vmatmul.mubr.f32.gmra.mxu0 %v1472
    %v1540 = vpop.f32.mrf.mxu0
    %v1541 = vadd.f32 %v97, %v1540
    %v1542 = vpop.f32.mrf.mxu0
    %1543 = vdwg.mxu0
    %v1544 = vsel %vm584, %v1463, -inf
    %1545 = vmax.xlane.f32.xlu0 %v1544
    %v1546 = vpop.xlane.xlu0 %1545
    %v1547 = vsel %vm584, %v1541, -inf
    %1548 = vmax.xlane.f32.xlu0 %v1547
    %v1549 = vpop.xlane.xlu0 %1548
    %v1550 = vsub.f32 %v1463, %v1546
    %v1551 = vsub.f32 %v1541, %v1549
    %v1552 = vmul.f32 %v1550, 1.442695
    %v1553 = vpow.pop %v1552
    %v1554 = vmul.f32 %v1551, 1.442695
    %v1555 = vpow.pop %v1554
    %v1556 = vsel %vm584, %v1553, 0.0
    %1557 = vadd.xlane.f32.xlu0 %v1556
    %v1558 = vpop.xlane.xlu0 %1557
    %v1559 = vsel %vm584, %v1555, 0.0
    %1560 = vadd.xlane.f32.xlu0 %v1559
    %v1561 = vpop.xlane.xlu0 %1560
    %v1562 = vrcp.pop %v1558
    %v1563 = vrcp.pop %v1561
    %v1564 = vmul.f32 %v1553, %v1562
    %v1565 = vmul.f32 %v1555, %v1563
    %v1567 = vsel %vm607, %v1564, 0
    %1569 = vmatprep.subr.mxu0 0.0
    %1570 = vmatpush1.msra.mxu0 0.0
    %1571 = vmatprep.subr.mxu0 0.0
    %1572 = vmatpush1.msra.mxu0 0.0
    %1573 = vmatprep.subr.mxu0 0.0
    %1574 = vmatpush1.msra.mxu0 0.0
    %1575 = vmatprep.subr.mxu0 0.0
    %1576 = vmatpush1.msra.mxu0 0.0
    %1577 = vmatprep.subr.mxu0 0.0
    %1578 = vmatpush1.msra.mxu0 0.0
    %1579 = vmatprep.subr.mxu0 0.0
    %1580 = vmatpush1.msra.mxu0 0.0
    %1581 = vmatprep.subr.mxu0 0.0
    %1582 = vmatpush1.msra.mxu0 0.0
    %1583 = vmatprep.subr.mxu0 0.0
    %1584 = vmatpush1.msra.mxu0 0.0
    %1585 = vmatprep.subr.mxu0 0.0
    %1586 = vmatpush1.msra.mxu0 0.0
    %1587 = vmatprep.subr.mxu0 0.0
    %1588 = vmatpush1.msra.mxu0 0.0
    %1589 = vmatprep.subr.mxu0 0.0
    %1590 = vmatpush1.msra.mxu0 0.0
    %1591 = vmatprep.subr.mxu0 0.0
    %1592 = vmatpush1.msra.mxu0 0.0
    %1593 = vmatprep.subr.mxu0 0.0
    %1594 = vmatpush1.msra.mxu0 0.0
    %1595 = vmatprep.subr.mxu0 0.0
    %1596 = vmatpush1.msra.mxu0 0.0
    %1597 = vmatprep.subr.mxu0 0.0
    %1598 = vmatpush1.msra.mxu0 %v613
    %1599 = vmatprep.subr.mxu0 0.0
    %1600 = vmatpush1.msra.mxu0 %v66
    %1601 = vmatprep.subr.mxu0 0.0
    %1602 = vmatpush2.msra.mxu0 0.0
    %1603 = vmatprep.subr.mxu0 0.0
    %1604 = vmatpush2.msra.mxu0 0.0
    %1605 = vmatprep.subr.mxu0 0.0
    %1606 = vmatpush2.msra.mxu0 0.0
    %1607 = vmatprep.subr.mxu0 0.0
    %1608 = vmatpush2.msra.mxu0 0.0
    %1609 = vmatprep.subr.mxu0 0.0
    %1610 = vmatpush2.msra.mxu0 0.0
    %1611 = vmatprep.subr.mxu0 0.0
    %1612 = vmatpush2.msra.mxu0 0.0
    %1613 = vmatprep.subr.mxu0 0.0
    %1614 = vmatpush2.msra.mxu0 0.0
    %1615 = vmatprep.subr.mxu0 0.0
    %1616 = vmatpush2.msra.mxu0 0.0
    %1617 = vmatprep.subr.mxu0 0.0
    %1618 = vmatpush2.msra.mxu0 0.0
    %1619 = vmatprep.subr.mxu0 0.0
    %1620 = vmatpush2.msra.mxu0 0.0
    %1621 = vmatprep.subr.mxu0 0.0
    %1622 = vmatpush2.msra.mxu0 0.0
    %1623 = vmatprep.subr.mxu0 0.0
    %1624 = vmatpush2.msra.mxu0 0.0
    %1625 = vmatprep.subr.mxu0 0.0
    %1626 = vmatpush2.msra.mxu0 0.0
    %1627 = vmatprep.subr.mxu0 0.0
    %1628 = vmatpush2.msra.mxu0 0.0
    %1629 = vmatprep.subr.mxu0 0.0
    %1630 = vmatpush2.msra.mxu0 0.0
    %1631 = vmatprep.subr.mxu0 0.0
    %1632 = vmatpush2.msra.mxu0 0.0
    %1633 = vmatprep.mubr.f32.mxu0 0.0
    %1634 = vmatmul.mubr.f32.gmra.mxu0 %v1567
    %v1635 = vpop.f32.mrf.mxu0
    %v1636 = vadd.f32 0.0, %v1635
    %v1637 = vpop.f32.mrf.mxu0
    %1638 = vdwg.mxu0
    %v1640 = vsel %vm607, %v1565, 0
    %1642 = vmatprep.subr.mxu0 0.0
    %1643 = vmatpush1.msra.mxu0 0.0
    %1644 = vmatprep.subr.mxu0 0.0
    %1645 = vmatpush1.msra.mxu0 0.0
    %1646 = vmatprep.subr.mxu0 0.0
    %1647 = vmatpush1.msra.mxu0 0.0
    %1648 = vmatprep.subr.mxu0 0.0
    %1649 = vmatpush1.msra.mxu0 0.0
    %1650 = vmatprep.subr.mxu0 0.0
    %1651 = vmatpush1.msra.mxu0 0.0
    %1652 = vmatprep.subr.mxu0 0.0
    %1653 = vmatpush1.msra.mxu0 0.0
    %1654 = vmatprep.subr.mxu0 0.0
    %1655 = vmatpush1.msra.mxu0 0.0
    %1656 = vmatprep.subr.mxu0 0.0
    %1657 = vmatpush1.msra.mxu0 0.0
    %1658 = vmatprep.subr.mxu0 0.0
    %1659 = vmatpush1.msra.mxu0 0.0
    %1660 = vmatprep.subr.mxu0 0.0
    %1661 = vmatpush1.msra.mxu0 0.0
    %1662 = vmatprep.subr.mxu0 0.0
    %1663 = vmatpush1.msra.mxu0 0.0
    %1664 = vmatprep.subr.mxu0 0.0
    %1665 = vmatpush1.msra.mxu0 0.0
    %1666 = vmatprep.subr.mxu0 0.0
    %1667 = vmatpush1.msra.mxu0 0.0
    %1668 = vmatprep.subr.mxu0 0.0
    %1669 = vmatpush1.msra.mxu0 0.0
    %1670 = vmatprep.subr.mxu0 0.0
    %1671 = vmatpush1.msra.mxu0 %v689
    %1672 = vmatprep.subr.mxu0 0.0
    %1673 = vmatpush1.msra.mxu0 %v68
    %1674 = vmatprep.subr.mxu0 0.0
    %1675 = vmatpush2.msra.mxu0 0.0
    %1676 = vmatprep.subr.mxu0 0.0
    %1677 = vmatpush2.msra.mxu0 0.0
    %1678 = vmatprep.subr.mxu0 0.0
    %1679 = vmatpush2.msra.mxu0 0.0
    %1680 = vmatprep.subr.mxu0 0.0
    %1681 = vmatpush2.msra.mxu0 0.0
    %1682 = vmatprep.subr.mxu0 0.0
    %1683 = vmatpush2.msra.mxu0 0.0
    %1684 = vmatprep.subr.mxu0 0.0
    %1685 = vmatpush2.msra.mxu0 0.0
    %1686 = vmatprep.subr.mxu0 0.0
    %1687 = vmatpush2.msra.mxu0 0.0
    %1688 = vmatprep.subr.mxu0 0.0
    %1689 = vmatpush2.msra.mxu0 0.0
    %1690 = vmatprep.subr.mxu0 0.0
    %1691 = vmatpush2.msra.mxu0 0.0
    %1692 = vmatprep.subr.mxu0 0.0
    %1693 = vmatpush2.msra.mxu0 0.0
    %1694 = vmatprep.subr.mxu0 0.0
    %1695 = vmatpush2.msra.mxu0 0.0
    %1696 = vmatprep.subr.mxu0 0.0
    %1697 = vmatpush2.msra.mxu0 0.0
    %1698 = vmatprep.subr.mxu0 0.0
    %1699 = vmatpush2.msra.mxu0 0.0
    %1700 = vmatprep.subr.mxu0 0.0
    %1701 = vmatpush2.msra.mxu0 0.0
    %1702 = vmatprep.subr.mxu0 0.0
    %1703 = vmatpush2.msra.mxu0 0.0
    %1704 = vmatprep.subr.mxu0 0.0
    %1705 = vmatpush2.msra.mxu0 0.0
    %1706 = vmatprep.mubr.f32.mxu0 0.0
    %1707 = vmatmul.mubr.f32.gmra.mxu0 %v1640
    %v1708 = vpop.f32.mrf.mxu0
    %v1709 = vadd.f32 0.0, %v1708
    %v1710 = vpop.f32.mrf.mxu0
    %1711 = vdwg.mxu0
    %1712 = vmatprep.subr.mxu0 0.0
    %1713 = vmatpush1.xpose.msra.mxu0 0.0
    %1714 = vmatprep.subr.mxu0 0.0
    %1715 = vmatpush1.xpose.msra.mxu0 0.0
    %1716 = vmatprep.subr.mxu0 0.0
    %1717 = vmatpush1.xpose.msra.mxu0 0.0
    %1718 = vmatprep.subr.mxu0 0.0
    %1719 = vmatpush1.xpose.msra.mxu0 0.0
    %1720 = vmatprep.subr.mxu0 0.0
    %1721 = vmatpush1.xpose.msra.mxu0 0.0
    %1722 = vmatprep.subr.mxu0 0.0
    %1723 = vmatpush1.xpose.msra.mxu0 0.0
    %1724 = vmatprep.subr.mxu0 0.0
    %1725 = vmatpush1.xpose.msra.mxu0 0.0
    %1726 = vmatprep.subr.mxu0 0.0
    %1727 = vmatpush1.xpose.msra.mxu0 0.0
    %1728 = vmatprep.subr.mxu0 0.0
    %1729 = vmatpush1.xpose.msra.mxu0 0.0
    %1730 = vmatprep.subr.mxu0 0.0
    %1731 = vmatpush1.xpose.msra.mxu0 0.0
    %1732 = vmatprep.subr.mxu0 0.0
    %1733 = vmatpush1.xpose.msra.mxu0 0.0
    %1734 = vmatprep.subr.mxu0 0.0
    %1735 = vmatpush1.xpose.msra.mxu0 0.0
    %1736 = vmatprep.subr.mxu0 0.0
    %1737 = vmatpush1.xpose.msra.mxu0 0.0
    %1738 = vmatprep.subr.mxu0 0.0
    %1739 = vmatpush1.xpose.msra.mxu0 0.0
    %1740 = vmatprep.subr.mxu0 0.0
    %1741 = vmatpush1.xpose.msra.mxu0 0.0
    %1742 = vmatprep.subr.mxu0 0.0
    %1743 = vmatpush1.xpose.msra.mxu0 %v762
    %1744 = vmatprep.subr.mxu0 0.0
    %1745 = vmatpush2.xpose.msra.mxu0 0.0
    %1746 = vmatprep.subr.mxu0 0.0
    %1747 = vmatpush2.xpose.msra.mxu0 0.0
    %1748 = vmatprep.subr.mxu0 0.0
    %1749 = vmatpush2.xpose.msra.mxu0 0.0
    %1750 = vmatprep.subr.mxu0 0.0
    %1751 = vmatpush2.xpose.msra.mxu0 0.0
    %1752 = vmatprep.subr.mxu0 0.0
    %1753 = vmatpush2.xpose.msra.mxu0 0.0
    %1754 = vmatprep.subr.mxu0 0.0
    %1755 = vmatpush2.xpose.msra.mxu0 0.0
    %1756 = vmatprep.subr.mxu0 0.0
    %1757 = vmatpush2.xpose.msra.mxu0 0.0
    %1758 = vmatprep.subr.mxu0 0.0
    %1759 = vmatpush2.xpose.msra.mxu0 0.0
    %1760 = vmatprep.subr.mxu0 0.0
    %1761 = vmatpush2.xpose.msra.mxu0 0.0
    %1762 = vmatprep.subr.mxu0 0.0
    %1763 = vmatpush2.xpose.msra.mxu0 0.0
    %1764 = vmatprep.subr.mxu0 0.0
    %1765 = vmatpush2.xpose.msra.mxu0 0.0
    %1766 = vmatprep.subr.mxu0 0.0
    %1767 = vmatpush2.xpose.msra.mxu0 0.0
    %1768 = vmatprep.subr.mxu0 0.0
    %1769 = vmatpush2.xpose.msra.mxu0 0.0
    %1770 = vmatprep.subr.mxu0 0.0
    %1771 = vmatpush2.xpose.msra.mxu0 0.0
    %1772 = vmatprep.subr.mxu0 0.0
    %1773 = vmatpush2.xpose.msra.mxu0 0.0
    %1774 = vmatprep.subr.mxu0 0.0
    %1775 = vmatpush2.xpose.msra.mxu0 0.0
    %1776 = vmatprep.mubr.f32.mxu0 0.0
    %1777 = vmatmul.mubr.f32.gmra.mxu0 %v1394
    %v1778 = vpop.f32.mrf.mxu0
    %v1779 = vadd.f32 %v116, %v1778
    %v1780 = vpop.f32.mrf.mxu0
    %1781 = vdwg.mxu0
    %1782 = vmatprep.subr.mxu0 0.0
    %1783 = vmatpush1.xpose.msra.mxu0 0.0
    %1784 = vmatprep.subr.mxu0 0.0
    %1785 = vmatpush1.xpose.msra.mxu0 0.0
    %1786 = vmatprep.subr.mxu0 0.0
    %1787 = vmatpush1.xpose.msra.mxu0 0.0
    %1788 = vmatprep.subr.mxu0 0.0
    %1789 = vmatpush1.xpose.msra.mxu0 0.0
    %1790 = vmatprep.subr.mxu0 0.0
    %1791 = vmatpush1.xpose.msra.mxu0 0.0
    %1792 = vmatprep.subr.mxu0 0.0
    %1793 = vmatpush1.xpose.msra.mxu0 0.0
    %1794 = vmatprep.subr.mxu0 0.0
    %1795 = vmatpush1.xpose.msra.mxu0 0.0
    %1796 = vmatprep.subr.mxu0 0.0
    %1797 = vmatpush1.xpose.msra.mxu0 0.0
    %1798 = vmatprep.subr.mxu0 0.0
    %1799 = vmatpush1.xpose.msra.mxu0 0.0
    %1800 = vmatprep.subr.mxu0 0.0
    %1801 = vmatpush1.xpose.msra.mxu0 0.0
    %1802 = vmatprep.subr.mxu0 0.0
    %1803 = vmatpush1.xpose.msra.mxu0 0.0
    %1804 = vmatprep.subr.mxu0 0.0
    %1805 = vmatpush1.xpose.msra.mxu0 0.0
    %1806 = vmatprep.subr.mxu0 0.0
    %1807 = vmatpush1.xpose.msra.mxu0 0.0
    %1808 = vmatprep.subr.mxu0 0.0
    %1809 = vmatpush1.xpose.msra.mxu0 0.0
    %1810 = vmatprep.subr.mxu0 0.0
    %1811 = vmatpush1.xpose.msra.mxu0 0.0
    %1812 = vmatprep.subr.mxu0 0.0
    %1813 = vmatpush1.xpose.msra.mxu0 %v835
    %1814 = vmatprep.subr.mxu0 0.0
    %1815 = vmatpush2.xpose.msra.mxu0 0.0
    %1816 = vmatprep.subr.mxu0 0.0
    %1817 = vmatpush2.xpose.msra.mxu0 0.0
    %1818 = vmatprep.subr.mxu0 0.0
    %1819 = vmatpush2.xpose.msra.mxu0 0.0
    %1820 = vmatprep.subr.mxu0 0.0
    %1821 = vmatpush2.xpose.msra.mxu0 0.0
    %1822 = vmatprep.subr.mxu0 0.0
    %1823 = vmatpush2.xpose.msra.mxu0 0.0
    %1824 = vmatprep.subr.mxu0 0.0
    %1825 = vmatpush2.xpose.msra.mxu0 0.0
    %1826 = vmatprep.subr.mxu0 0.0
    %1827 = vmatpush2.xpose.msra.mxu0 0.0
    %1828 = vmatprep.subr.mxu0 0.0
    %1829 = vmatpush2.xpose.msra.mxu0 0.0
    %1830 = vmatprep.subr.mxu0 0.0
    %1831 = vmatpush2.xpose.msra.mxu0 0.0
    %1832 = vmatprep.subr.mxu0 0.0
    %1833 = vmatpush2.xpose.msra.mxu0 0.0
    %1834 = vmatprep.subr.mxu0 0.0
    %1835 = vmatpush2.xpose.msra.mxu0 0.0
    %1836 = vmatprep.subr.mxu0 0.0
    %1837 = vmatpush2.xpose.msra.mxu0 0.0
    %1838 = vmatprep.subr.mxu0 0.0
    %1839 = vmatpush2.xpose.msra.mxu0 0.0
    %1840 = vmatprep.subr.mxu0 0.0
    %1841 = vmatpush2.xpose.msra.mxu0 0.0
    %1842 = vmatprep.subr.mxu0 0.0
    %1843 = vmatpush2.xpose.msra.mxu0 0.0
    %1844 = vmatprep.subr.mxu0 0.0
    %1845 = vmatpush2.xpose.msra.mxu0 0.0
    %1846 = vmatprep.mubr.f32.mxu0 0.0
    %1847 = vmatmul.mubr.f32.gmra.mxu0 %v1472
    %v1848 = vpop.f32.mrf.mxu0
    %v1849 = vadd.f32 %v123, %v1848
    %v1850 = vpop.f32.mrf.mxu0
    %1851 = vdwg.mxu0
    %v1852 = vsel %vm907, %v1779, -inf
    %1853 = vmax.xlane.f32.xlu0 %v1852
    %v1854 = vpop.xlane.xlu0 %1853
    %v1855 = vsel %vm907, %v1849, -inf
    %1856 = vmax.xlane.f32.xlu0 %v1855
    %v1857 = vpop.xlane.xlu0 %1856
    %v1858 = vsub.f32 %v1779, %v1854
    %v1859 = vsub.f32 %v1849, %v1857
    %v1860 = vmul.f32 %v1858, 1.442695
    %v1861 = vpow.pop %v1860
    %v1862 = vmul.f32 %v1859, 1.442695
    %v1863 = vpow.pop %v1862
    %v1864 = vsel %vm907, %v1861, 0.0
    %1865 = vadd.xlane.f32.xlu0 %v1864
    %v1866 = vpop.xlane.xlu0 %1865
    %v1867 = vsel %vm907, %v1863, 0.0
    %1868 = vadd.xlane.f32.xlu0 %v1867
    %v1869 = vpop.xlane.xlu0 %1868
    %v1870 = vrcp.pop %v1866
    %v1871 = vrcp.pop %v1869
    %v1872 = vmul.f32 %v1861, %v1870
    %v1873 = vmul.f32 %v1863, %v1871
    %v1875 = vsel %vm930, %v1872, 0
    %1877 = vmatprep.subr.mxu0 0.0
    %1878 = vmatpush1.msra.mxu0 0.0
    %1879 = vmatprep.subr.mxu0 0.0
    %1880 = vmatpush1.msra.mxu0 0.0
    %1881 = vmatprep.subr.mxu0 0.0
    %1882 = vmatpush1.msra.mxu0 0.0
    %1883 = vmatprep.subr.mxu0 0.0
    %1884 = vmatpush1.msra.mxu0 0.0
    %1885 = vmatprep.subr.mxu0 0.0
    %1886 = vmatpush1.msra.mxu0 0.0
    %1887 = vmatprep.subr.mxu0 0.0
    %1888 = vmatpush1.msra.mxu0 0.0
    %1889 = vmatprep.subr.mxu0 0.0
    %1890 = vmatpush1.msra.mxu0 0.0
    %1891 = vmatprep.subr.mxu0 0.0
    %1892 = vmatpush1.msra.mxu0 0.0
    %1893 = vmatprep.subr.mxu0 0.0
    %1894 = vmatpush1.msra.mxu0 0.0
    %1895 = vmatprep.subr.mxu0 0.0
    %1896 = vmatpush1.msra.mxu0 0.0
    %1897 = vmatprep.subr.mxu0 0.0
    %1898 = vmatpush1.msra.mxu0 0.0
    %1899 = vmatprep.subr.mxu0 0.0
    %1900 = vmatpush1.msra.mxu0 0.0
    %1901 = vmatprep.subr.mxu0 0.0
    %1902 = vmatpush1.msra.mxu0 0.0
    %1903 = vmatprep.subr.mxu0 0.0
    %1904 = vmatpush1.msra.mxu0 0.0
    %1905 = vmatprep.subr.mxu0 0.0
    %1906 = vmatpush1.msra.mxu0 0.0
    %1907 = vmatprep.subr.mxu0 0.0
    %1908 = vmatpush1.msra.mxu0 %v936
    %1909 = vmatprep.subr.mxu0 0.0
    %1910 = vmatpush2.msra.mxu0 0.0
    %1911 = vmatprep.subr.mxu0 0.0
    %1912 = vmatpush2.msra.mxu0 0.0
    %1913 = vmatprep.subr.mxu0 0.0
    %1914 = vmatpush2.msra.mxu0 0.0
    %1915 = vmatprep.subr.mxu0 0.0
    %1916 = vmatpush2.msra.mxu0 0.0
    %1917 = vmatprep.subr.mxu0 0.0
    %1918 = vmatpush2.msra.mxu0 0.0
    %1919 = vmatprep.subr.mxu0 0.0
    %1920 = vmatpush2.msra.mxu0 0.0
    %1921 = vmatprep.subr.mxu0 0.0
    %1922 = vmatpush2.msra.mxu0 0.0
    %1923 = vmatprep.subr.mxu0 0.0
    %1924 = vmatpush2.msra.mxu0 0.0
    %1925 = vmatprep.subr.mxu0 0.0
    %1926 = vmatpush2.msra.mxu0 0.0
    %1927 = vmatprep.subr.mxu0 0.0
    %1928 = vmatpush2.msra.mxu0 0.0
    %1929 = vmatprep.subr.mxu0 0.0
    %1930 = vmatpush2.msra.mxu0 0.0
    %1931 = vmatprep.subr.mxu0 0.0
    %1932 = vmatpush2.msra.mxu0 0.0
    %1933 = vmatprep.subr.mxu0 0.0
    %1934 = vmatpush2.msra.mxu0 0.0
    %1935 = vmatprep.subr.mxu0 0.0
    %1936 = vmatpush2.msra.mxu0 0.0
    %1937 = vmatprep.subr.mxu0 0.0
    %1938 = vmatpush2.msra.mxu0 0.0
    %1939 = vmatprep.subr.mxu0 0.0
    %1940 = vmatpush2.msra.mxu0 0.0
    %1941 = vmatprep.mubr.f32.mxu0 0.0
    %1942 = vmatmul.mubr.f32.gmra.mxu0 %v1875
    %v1943 = vpop.f32.mrf.mxu0
    %v1944 = vadd.f32 0.0, %v1943
    %v1945 = vpop.f32.mrf.mxu0
    %1946 = vdwg.mxu0
    %v1948 = vsel %vm930, %v1873, 0
    %1950 = vmatprep.subr.mxu0 0.0
    %1951 = vmatpush1.msra.mxu0 0.0
    %1952 = vmatprep.subr.mxu0 0.0
    %1953 = vmatpush1.msra.mxu0 0.0
    %1954 = vmatprep.subr.mxu0 0.0
    %1955 = vmatpush1.msra.mxu0 0.0
    %1956 = vmatprep.subr.mxu0 0.0
    %1957 = vmatpush1.msra.mxu0 0.0
    %1958 = vmatprep.subr.mxu0 0.0
    %1959 = vmatpush1.msra.mxu0 0.0
    %1960 = vmatprep.subr.mxu0 0.0
    %1961 = vmatpush1.msra.mxu0 0.0
    %1962 = vmatprep.subr.mxu0 0.0
    %1963 = vmatpush1.msra.mxu0 0.0
    %1964 = vmatprep.subr.mxu0 0.0
    %1965 = vmatpush1.msra.mxu0 0.0
    %1966 = vmatprep.subr.mxu0 0.0
    %1967 = vmatpush1.msra.mxu0 0.0
    %1968 = vmatprep.subr.mxu0 0.0
    %1969 = vmatpush1.msra.mxu0 0.0
    %1970 = vmatprep.subr.mxu0 0.0
    %1971 = vmatpush1.msra.mxu0 0.0
    %1972 = vmatprep.subr.mxu0 0.0
    %1973 = vmatpush1.msra.mxu0 0.0
    %1974 = vmatprep.subr.mxu0 0.0
    %1975 = vmatpush1.msra.mxu0 0.0
    %1976 = vmatprep.subr.mxu0 0.0
    %1977 = vmatpush1.msra.mxu0 0.0
    %1978 = vmatprep.subr.mxu0 0.0
    %1979 = vmatpush1.msra.mxu0 0.0
    %1980 = vmatprep.subr.mxu0 0.0
    %1981 = vmatpush1.msra.mxu0 %v1012
    %1982 = vmatprep.subr.mxu0 0.0
    %1983 = vmatpush2.msra.mxu0 0.0
    %1984 = vmatprep.subr.mxu0 0.0
    %1985 = vmatpush2.msra.mxu0 0.0
    %1986 = vmatprep.subr.mxu0 0.0
    %1987 = vmatpush2.msra.mxu0 0.0
    %1988 = vmatprep.subr.mxu0 0.0
    %1989 = vmatpush2.msra.mxu0 0.0
    %1990 = vmatprep.subr.mxu0 0.0
    %1991 = vmatpush2.msra.mxu0 0.0
    %1992 = vmatprep.subr.mxu0 0.0
    %1993 = vmatpush2.msra.mxu0 0.0
    %1994 = vmatprep.subr.mxu0 0.0
    %1995 = vmatpush2.msra.mxu0 0.0
    %1996 = vmatprep.subr.mxu0 0.0
    %1997 = vmatpush2.msra.mxu0 0.0
    %1998 = vmatprep.subr.mxu0 0.0
    %1999 = vmatpush2.msra.mxu0 0.0
    %2000 = vmatprep.subr.mxu0 0.0
    %2001 = vmatpush2.msra.mxu0 0.0
    %2002 = vmatprep.subr.mxu0 0.0
    %2003 = vmatpush2.msra.mxu0 0.0
    %2004 = vmatprep.subr.mxu0 0.0
    %2005 = vmatpush2.msra.mxu0 0.0
    %2006 = vmatprep.subr.mxu0 0.0
    %2007 = vmatpush2.msra.mxu0 0.0
    %2008 = vmatprep.subr.mxu0 0.0
    %2009 = vmatpush2.msra.mxu0 0.0
    %2010 = vmatprep.subr.mxu0 0.0
    %2011 = vmatpush2.msra.mxu0 0.0
    %2012 = vmatprep.subr.mxu0 0.0
    %2013 = vmatpush2.msra.mxu0 0.0
    %2014 = vmatprep.mubr.f32.mxu0 0.0
    %2015 = vmatmul.mubr.f32.gmra.mxu0 %v1948
    %v2016 = vpop.f32.mrf.mxu0
    %v2017 = vadd.f32 0.0, %v2016
    %v2018 = vpop.f32.mrf.mxu0
    %2019 = vdwg.mxu0
    %v2022 = vrot.slane %v1709, 7
    %v2023 = vsel %vm1087, %v2022, %v1636
    %v2025 = vadd.f32 %v1385, %v2023
    %v2026 = vtanh.pop %v2025
    %v2029 = vrot.slane %v2017, 7
    %v2030 = vsel %vm1087, %v2029, %v1944
    %2031 = vrot.lane.b32.xlu0 %v2030, 32
    %v2032 = vpop.permute.xlu0 %2031
    %v2034 = vadd.f32 %v1385, %v2032
    %v2035 = vtanh.pop %v2034
    %s2037 = scalar_lea.vmem [#allocation5], 2
    %2038 = vst.msk [vmem:[%s2037] sm:$0x3] %vm1102, %v1315
    %s2039 = scalar_lea.vmem [#allocation7], 2
    %2040 = vst.msk [vmem:[%s2039] sm:$0x3] %vm1102, %v2026
    %2042 = vrot.lane.b32.xlu0 %v2035, 96
    %v2043 = vpop.permute.xlu0 %2042
    %s2045 = scalar_lea.vmem [#allocation9], 2
    %2046 = vst.msk [vmem:[%s2045] sm:$0x3] %vm1102, %v2043
    %v2047 = vrot.slane %v1565, 7
    %v2048 = vsel %vm1087, %v2047, %v1564
    %s2050 = scalar_lea.vmem [#allocation10], 2
    %2051 = vst.msk [vmem:[%s2050] sm:$0x3] %vm1113, %v2048
    %v2052 = vrot.slane %v1873, 7
    %v2053 = vsel %vm1087, %v2052, %v1872
    %s2055 = scalar_lea.vmem [#allocation12], 2
    %2056 = vst.msk [vmem:[%s2055] sm:$0x3] %vm1118, %v2053
    %s2057 = scalar_lea.vmem %s0, 4
    %v2058 = vld [vmem:[%s2057] sm:$0x3]
    %v2060 = vsel %vm142, %v2026, 0
    %2062 = vmatprep.subr.mxu0 0.0
    %2063 = vmatpush1.msra.mxu0 0.0
    %2064 = vmatprep.subr.mxu0 0.0
    %2065 = vmatpush1.msra.mxu0 0.0
    %2066 = vmatprep.subr.mxu0 0.0
    %2067 = vmatpush1.msra.mxu0 0.0
    %2068 = vmatprep.subr.mxu0 0.0
    %2069 = vmatpush1.msra.mxu0 0.0
    %2070 = vmatprep.subr.mxu0 0.0
    %2071 = vmatpush1.msra.mxu0 0.0
    %2072 = vmatprep.subr.mxu0 0.0
    %2073 = vmatpush1.msra.mxu0 0.0
    %2074 = vmatprep.subr.mxu0 0.0
    %2075 = vmatpush1.msra.mxu0 0.0
    %2076 = vmatprep.subr.mxu0 0.0
    %2077 = vmatpush1.msra.mxu0 0.0
    %2078 = vmatprep.subr.mxu0 0.0
    %2079 = vmatpush1.msra.mxu0 0.0
    %2080 = vmatprep.subr.mxu0 0.0
    %2081 = vmatpush1.msra.mxu0 0.0
    %2082 = vmatprep.subr.mxu0 0.0
    %2083 = vmatpush1.msra.mxu0 0.0
    %2084 = vmatprep.subr.mxu0 0.0
    %2085 = vmatpush1.msra.mxu0 0.0
    %2086 = vmatprep.subr.mxu0 0.0
    %2087 = vmatpush1.msra.mxu0 %v129
    %2088 = vmatprep.subr.mxu0 0.0
    %2089 = vmatpush1.msra.mxu0 %v128
    %2090 = vmatprep.subr.mxu0 0.0
    %2091 = vmatpush1.msra.mxu0 %v127
    %2092 = vmatprep.subr.mxu0 0.0
    %2093 = vmatpush1.msra.mxu0 %v126
    %2094 = vmatprep.subr.mxu0 0.0
    %2095 = vmatpush2.msra.mxu0 0.0
    %2096 = vmatprep.subr.mxu0 0.0
    %2097 = vmatpush2.msra.mxu0 0.0
    %2098 = vmatprep.subr.mxu0 0.0
    %2099 = vmatpush2.msra.mxu0 0.0
    %2100 = vmatprep.subr.mxu0 0.0
    %2101 = vmatpush2.msra.mxu0 0.0
    %2102 = vmatprep.subr.mxu0 0.0
    %2103 = vmatpush2.msra.mxu0 0.0
    %2104 = vmatprep.subr.mxu0 0.0
    %2105 = vmatpush2.msra.mxu0 0.0
    %2106 = vmatprep.subr.mxu0 0.0
    %2107 = vmatpush2.msra.mxu0 0.0
    %2108 = vmatprep.subr.mxu0 0.0
    %2109 = vmatpush2.msra.mxu0 0.0
    %2110 = vmatprep.subr.mxu0 0.0
    %2111 = vmatpush2.msra.mxu0 0.0
    %2112 = vmatprep.subr.mxu0 0.0
    %2113 = vmatpush2.msra.mxu0 0.0
    %2114 = vmatprep.subr.mxu0 0.0
    %2115 = vmatpush2.msra.mxu0 0.0
    %2116 = vmatprep.subr.mxu0 0.0
    %2117 = vmatpush2.msra.mxu0 0.0
    %2118 = vmatprep.subr.mxu0 0.0
    %2119 = vmatpush2.msra.mxu0 0.0
    %2120 = vmatprep.subr.mxu0 0.0
    %2121 = vmatpush2.msra.mxu0 0.0
    %2122 = vmatprep.subr.mxu0 0.0
    %2123 = vmatpush2.msra.mxu0 0.0
    %2124 = vmatprep.subr.mxu0 0.0
    %2125 = vmatpush2.msra.mxu0 0.0
    %2126 = vmatprep.mubr.f32.mxu0 0.0
    %2127 = vmatmul.mubr.f32.gmra.mxu0 %v2060
    %v2128 = vpop.f32.mrf.mxu0
    %v2129 = vadd.f32 0.0, %v2128
    %v2130 = vpop.f32.mrf.mxu0
    %2131 = vdwg.mxu0
    %v2132 = vadd.f32 %v2058, %v2129
    %2133 = vmatprep.subr.mxu0 0.0
    %2134 = vmatpush1.msra.mxu0 0.0
    %2135 = vmatprep.subr.mxu0 0.0
    %2136 = vmatpush1.msra.mxu0 0.0
    %2137 = vmatprep.subr.mxu0 0.0
    %2138 = vmatpush1.msra.mxu0 0.0
    %2139 = vmatprep.subr.mxu0 0.0
    %2140 = vmatpush1.msra.mxu0 0.0
    %2141 = vmatprep.subr.mxu0 0.0
    %2142 = vmatpush1.msra.mxu0 0.0
    %2143 = vmatprep.subr.mxu0 0.0
    %2144 = vmatpush1.msra.mxu0 0.0
    %2145 = vmatprep.subr.mxu0 0.0
    %2146 = vmatpush1.msra.mxu0 0.0
    %2147 = vmatprep.subr.mxu0 0.0
    %2148 = vmatpush1.msra.mxu0 0.0
    %2149 = vmatprep.subr.mxu0 0.0
    %2150 = vmatpush1.msra.mxu0 0.0
    %2151 = vmatprep.subr.mxu0 0.0
    %2152 = vmatpush1.msra.mxu0 0.0
    %2153 = vmatprep.subr.mxu0 0.0
    %2154 = vmatpush1.msra.mxu0 0.0
    %2155 = vmatprep.subr.mxu0 0.0
    %2156 = vmatpush1.msra.mxu0 0.0
    %2157 = vmatprep.subr.mxu0 0.0
    %2158 = vmatpush1.msra.mxu0 %v133
    %2159 = vmatprep.subr.mxu0 0.0
    %2160 = vmatpush1.msra.mxu0 %v132
    %2161 = vmatprep.subr.mxu0 0.0
    %2162 = vmatpush1.msra.mxu0 %v131
    %2163 = vmatprep.subr.mxu0 0.0
    %2164 = vmatpush1.msra.mxu0 %v130
    %2165 = vmatprep.subr.mxu0 0.0
    %2166 = vmatpush2.msra.mxu0 0.0
    %2167 = vmatprep.subr.mxu0 0.0
    %2168 = vmatpush2.msra.mxu0 0.0
    %2169 = vmatprep.subr.mxu0 0.0
    %2170 = vmatpush2.msra.mxu0 0.0
    %2171 = vmatprep.subr.mxu0 0.0
    %2172 = vmatpush2.msra.mxu0 0.0
    %2173 = vmatprep.subr.mxu0 0.0
    %2174 = vmatpush2.msra.mxu0 0.0
    %2175 = vmatprep.subr.mxu0 0.0
    %2176 = vmatpush2.msra.mxu0 0.0
    %2177 = vmatprep.subr.mxu0 0.0
    %2178 = vmatpush2.msra.mxu0 0.0
    %2179 = vmatprep.subr.mxu0 0.0
    %2180 = vmatpush2.msra.mxu0 0.0
    %2181 = vmatprep.subr.mxu0 0.0
    %2182 = vmatpush2.msra.mxu0 0.0
    %2183 = vmatprep.subr.mxu0 0.0
    %2184 = vmatpush2.msra.mxu0 0.0
    %2185 = vmatprep.subr.mxu0 0.0
    %2186 = vmatpush2.msra.mxu0 0.0
    %2187 = vmatprep.subr.mxu0 0.0
    %2188 = vmatpush2.msra.mxu0 0.0
    %2189 = vmatprep.subr.mxu0 0.0
    %2190 = vmatpush2.msra.mxu0 0.0
    %2191 = vmatprep.subr.mxu0 0.0
    %2192 = vmatpush2.msra.mxu0 0.0
    %2193 = vmatprep.subr.mxu0 0.0
    %2194 = vmatpush2.msra.mxu0 0.0
    %2195 = vmatprep.subr.mxu0 0.0
    %2196 = vmatpush2.msra.mxu0 0.0
    %2197 = vmatprep.mubr.f32.mxu0 0.0
    %2198 = vmatmul.mubr.f32.gmra.mxu0 %v1316
    %v2199 = vpop.f32.mrf.mxu0
    %v2200 = vadd.f32 0.0, %v2199
    %v2201 = vpop.f32.mrf.mxu0
    %2202 = vdwg.mxu0
    %v2203 = vadd.f32 %v2132, %v2200
    %v2204 = vxor.u32 %v2203, 2147483648
    %v2205 = vmul.f32 %v2204, 1.442695
    %v2206 = vpow.pop %v2205
    %v2207 = vadd.f32 %v2206, 1.0
    %v2208 = vrcp.pop %v2207
    %v2209 = vmul.f32 1.0, %v2208
    %v2210 = vtanh.pop %v2203
    %v2211 = vmul.f32 %v2209, %v1284
    %2213 = vrot.lane.b32.xlu0 %v2210, 64
    %v2214 = vpop.permute.xlu0 %2213
    %v2216 = vmul.f32 %v2209, %v2214
    %2218 = vrot.lane.b32.xlu0 %v2216, 32
    %v2219 = vpop.permute.xlu0 %2218
    %v2221 = vadd.f32 %v2211, %v2219
    %v2222 = vtanh.pop %v2221
    %2224 = vrot.lane.b32.xlu0 %v2222, 64
    %v2225 = vpop.permute.xlu0 %2224
    %v2227 = vmul.f32 %v2209, %v2225
    %v2230 = vunpack.c.l.s4 1966171168
    %v2231 = vunpack.c.0.s8 %v2230
    %v2232 = vlaneseq
    %v2233 = vshrl.u32 %v2232, 7
    %v2234 = vsub.s32 %v2231, %v2233
    %v2235 = vrot.slane %v2227, %v2234
    %v2236 = vcombine.high %v2235, %v2235
    %v2238 = vunpack.c.l.s4 1966171168
    %v2239 = vunpack.c.0.s8 %v2238
    %v2240 = vlaneseq
    %v2241 = vshrl.u32 %v2240, 7
    %v2242 = vsub.s32 %v2239, %v2241
    %v2243 = vrot.slane %v2235, %v2242
    %v2245 = vunpack.c.l.s4 1966171168
    %v2246 = vunpack.c.0.s8 %v2245
    %v2247 = vlaneseq
    %v2248 = vshrl.u32 %v2247, 7
    %v2249 = vsub.s32 %v2246, %v2248
    %v2250 = vrot.slane %v2236, %v2249
    %2251 = vrot.lane.b32.xlu0 %v2227, 32
    %v2252 = vpop.permute.xlu0 %2251
    %v2253 = vsel %vm142, %v2252, 0
    %2255 = vmatprep.subr.mxu0 0.0
    %2256 = vmatpush1.msra.mxu0 0.0
    %2257 = vmatprep.subr.mxu0 0.0
    %2258 = vmatpush1.msra.mxu0 0.0
    %2259 = vmatprep.subr.mxu0 0.0
    %2260 = vmatpush1.msra.mxu0 0.0
    %2261 = vmatprep.subr.mxu0 0.0
    %2262 = vmatpush1.msra.mxu0 0.0
    %2263 = vmatprep.subr.mxu0 0.0
    %2264 = vmatpush1.msra.mxu0 0.0
    %2265 = vmatprep.subr.mxu0 0.0
    %2266 = vmatpush1.msra.mxu0 0.0
    %2267 = vmatprep.subr.mxu0 0.0
    %2268 = vmatpush1.msra.mxu0 0.0
    %2269 = vmatprep.subr.mxu0 0.0
    %2270 = vmatpush1.msra.mxu0 0.0
    %2271 = vmatprep.subr.mxu0 0.0
    %2272 = vmatpush1.msra.mxu0 0.0
    %2273 = vmatprep.subr.mxu0 0.0
    %2274 = vmatpush1.msra.mxu0 0.0
    %2275 = vmatprep.subr.mxu0 0.0
    %2276 = vmatpush1.msra.mxu0 0.0
    %2277 = vmatprep.subr.mxu0 0.0
    %2278 = vmatpush1.msra.mxu0 0.0
    %2279 = vmatprep.subr.mxu0 0.0
    %2280 = vmatpush1.msra.mxu0 %v137
    %2281 = vmatprep.subr.mxu0 0.0
    %2282 = vmatpush1.msra.mxu0 %v136
    %2283 = vmatprep.subr.mxu0 0.0
    %2284 = vmatpush1.msra.mxu0 %v135
    %2285 = vmatprep.subr.mxu0 0.0
    %2286 = vmatpush1.msra.mxu0 %v134
    %2287 = vmatprep.subr.mxu0 0.0
    %2288 = vmatpush2.msra.mxu0 0.0
    %2289 = vmatprep.subr.mxu0 0.0
    %2290 = vmatpush2.msra.mxu0 0.0
    %2291 = vmatprep.subr.mxu0 0.0
    %2292 = vmatpush2.msra.mxu0 0.0
    %2293 = vmatprep.subr.mxu0 0.0
    %2294 = vmatpush2.msra.mxu0 0.0
    %2295 = vmatprep.subr.mxu0 0.0
    %2296 = vmatpush2.msra.mxu0 0.0
    %2297 = vmatprep.subr.mxu0 0.0
    %2298 = vmatpush2.msra.mxu0 0.0
    %2299 = vmatprep.subr.mxu0 0.0
    %2300 = vmatpush2.msra.mxu0 0.0
    %2301 = vmatprep.subr.mxu0 0.0
    %2302 = vmatpush2.msra.mxu0 0.0
    %2303 = vmatprep.subr.mxu0 0.0
    %2304 = vmatpush2.msra.mxu0 0.0
    %2305 = vmatprep.subr.mxu0 0.0
    %2306 = vmatpush2.msra.mxu0 0.0
    %2307 = vmatprep.subr.mxu0 0.0
    %2308 = vmatpush2.msra.mxu0 0.0
    %2309 = vmatprep.subr.mxu0 0.0
    %2310 = vmatpush2.msra.mxu0 0.0
    %2311 = vmatprep.subr.mxu0 0.0
    %2312 = vmatpush2.msra.mxu0 0.0
    %2313 = vmatprep.subr.mxu0 0.0
    %2314 = vmatpush2.msra.mxu0 0.0
    %2315 = vmatprep.subr.mxu0 0.0
    %2316 = vmatpush2.msra.mxu0 0.0
    %2317 = vmatprep.subr.mxu0 0.0
    %2318 = vmatpush2.msra.mxu0 0.0
    %2319 = vmatprep.mubr.f32.mxu0 0.0
    %2320 = vmatmul.mubr.f32.gmra.mxu0 %v2253
    %v2321 = vpop.f32.mrf.mxu0
    %v2322 = vadd.f32 0.0, %v2321
    %v2323 = vpop.f32.mrf.mxu0
    %2324 = vdwg.mxu0
    %v2325 = vlaneseq
    %v2326 = vshrl.u32 %v2325, 7
    %v2327 = vsub.s32 0, %v2326
    %v2328 = vrot.slane %v2243, %v2327
    %2329 = vrot.lane.b32.xlu0 %v2328, 32
    %v2330 = vpop.permute.xlu0 %2329
    %v2331 = vsel %vm142, %v2330, 0
    %2333 = vmatprep.subr.mxu0 0.0
    %2334 = vmatpush1.xpose.msra.mxu0 0.0
    %2335 = vmatprep.subr.mxu0 0.0
    %2336 = vmatpush1.xpose.msra.mxu0 0.0
    %2337 = vmatprep.subr.mxu0 0.0
    %2338 = vmatpush1.xpose.msra.mxu0 0.0
    %2339 = vmatprep.subr.mxu0 0.0
    %2340 = vmatpush1.xpose.msra.mxu0 0.0
    %2341 = vmatprep.subr.mxu0 0.0
    %2342 = vmatpush1.xpose.msra.mxu0 0.0
    %2343 = vmatprep.subr.mxu0 0.0
    %2344 = vmatpush1.xpose.msra.mxu0 0.0
    %2345 = vmatprep.subr.mxu0 0.0
    %2346 = vmatpush1.xpose.msra.mxu0 0.0
    %2347 = vmatprep.subr.mxu0 0.0
    %2348 = vmatpush1.xpose.msra.mxu0 0.0
    %2349 = vmatprep.subr.mxu0 0.0
    %2350 = vmatpush1.xpose.msra.mxu0 0.0
    %2351 = vmatprep.subr.mxu0 0.0
    %2352 = vmatpush1.xpose.msra.mxu0 0.0
    %2353 = vmatprep.subr.mxu0 0.0
    %2354 = vmatpush1.xpose.msra.mxu0 0.0
    %2355 = vmatprep.subr.mxu0 0.0
    %2356 = vmatpush1.xpose.msra.mxu0 0.0
    %2357 = vmatprep.subr.mxu0 0.0
    %2358 = vmatpush1.xpose.msra.mxu0 0.0
    %2359 = vmatprep.subr.mxu0 0.0
    %2360 = vmatpush1.xpose.msra.mxu0 0.0
    %2361 = vmatprep.subr.mxu0 0.0
    %2362 = vmatpush1.xpose.msra.mxu0 %v428
    %2363 = vmatprep.subr.mxu0 0.0
    %2364 = vmatpush1.xpose.msra.mxu0 %v425
    %2365 = vmatprep.subr.mxu0 0.0
    %2366 = vmatpush2.xpose.msra.mxu0 0.0
    %2367 = vmatprep.subr.mxu0 0.0
    %2368 = vmatpush2.xpose.msra.mxu0 0.0
    %2369 = vmatprep.subr.mxu0 0.0
    %2370 = vmatpush2.xpose.msra.mxu0 0.0
    %2371 = vmatprep.subr.mxu0 0.0
    %2372 = vmatpush2.xpose.msra.mxu0 0.0
    %2373 = vmatprep.subr.mxu0 0.0
    %2374 = vmatpush2.xpose.msra.mxu0 0.0
    %2375 = vmatprep.subr.mxu0 0.0
    %2376 = vmatpush2.xpose.msra.mxu0 0.0
    %2377 = vmatprep.subr.mxu0 0.0
    %2378 = vmatpush2.xpose.msra.mxu0 0.0
    %2379 = vmatprep.subr.mxu0 0.0
    %2380 = vmatpush2.xpose.msra.mxu0 0.0
    %2381 = vmatprep.subr.mxu0 0.0
    %2382 = vmatpush2.xpose.msra.mxu0 0.0
    %2383 = vmatprep.subr.mxu0 0.0
    %2384 = vmatpush2.xpose.msra.mxu0 0.0
    %2385 = vmatprep.subr.mxu0 0.0
    %2386 = vmatpush2.xpose.msra.mxu0 0.0
    %2387 = vmatprep.subr.mxu0 0.0
    %2388 = vmatpush2.xpose.msra.mxu0 0.0
    %2389 = vmatprep.subr.mxu0 0.0
    %2390 = vmatpush2.xpose.msra.mxu0 0.0
    %2391 = vmatprep.subr.mxu0 0.0
    %2392 = vmatpush2.xpose.msra.mxu0 0.0
    %2393 = vmatprep.subr.mxu0 0.0
    %2394 = vmatpush2.xpose.msra.mxu0 0.0
    %2395 = vmatprep.subr.mxu0 0.0
    %2396 = vmatpush2.xpose.msra.mxu0 0.0
    %2397 = vmatprep.mubr.f32.mxu0 0.0
    %2398 = vmatmul.mubr.f32.gmra.mxu0 %v2331
    %v2399 = vpop.f32.mrf.mxu0
    %v2400 = vadd.f32 %v90, %v2399
    %v2401 = vpop.f32.mrf.mxu0
    %2402 = vdwg.mxu0
    %v2403 = vlaneseq
    %v2404 = vshrl.u32 %v2403, 7
    %v2405 = vsub.s32 0, %v2404
    %v2406 = vrot.slane %v2250, %v2405
    %2407 = vrot.lane.b32.xlu0 %v2406, 32
    %v2408 = vpop.permute.xlu0 %2407
    %v2409 = vsel %vm142, %v2408, 0
    %2411 = vmatprep.subr.mxu0 0.0
    %2412 = vmatpush1.xpose.msra.mxu0 0.0
    %2413 = vmatprep.subr.mxu0 0.0
    %2414 = vmatpush1.xpose.msra.mxu0 0.0
    %2415 = vmatprep.subr.mxu0 0.0
    %2416 = vmatpush1.xpose.msra.mxu0 0.0
    %2417 = vmatprep.subr.mxu0 0.0
    %2418 = vmatpush1.xpose.msra.mxu0 0.0
    %2419 = vmatprep.subr.mxu0 0.0
    %2420 = vmatpush1.xpose.msra.mxu0 0.0
    %2421 = vmatprep.subr.mxu0 0.0
    %2422 = vmatpush1.xpose.msra.mxu0 0.0
    %2423 = vmatprep.subr.mxu0 0.0
    %2424 = vmatpush1.xpose.msra.mxu0 0.0
    %2425 = vmatprep.subr.mxu0 0.0
    %2426 = vmatpush1.xpose.msra.mxu0 0.0
    %2427 = vmatprep.subr.mxu0 0.0
    %2428 = vmatpush1.xpose.msra.mxu0 0.0
    %2429 = vmatprep.subr.mxu0 0.0
    %2430 = vmatpush1.xpose.msra.mxu0 0.0
    %2431 = vmatprep.subr.mxu0 0.0
    %2432 = vmatpush1.xpose.msra.mxu0 0.0
    %2433 = vmatprep.subr.mxu0 0.0
    %2434 = vmatpush1.xpose.msra.mxu0 0.0
    %2435 = vmatprep.subr.mxu0 0.0
    %2436 = vmatpush1.xpose.msra.mxu0 0.0
    %2437 = vmatprep.subr.mxu0 0.0
    %2438 = vmatpush1.xpose.msra.mxu0 0.0
    %2439 = vmatprep.subr.mxu0 0.0
    %2440 = vmatpush1.xpose.msra.mxu0 %v512
    %2441 = vmatprep.subr.mxu0 0.0
    %2442 = vmatpush1.xpose.msra.mxu0 %v509
    %2443 = vmatprep.subr.mxu0 0.0
    %2444 = vmatpush2.xpose.msra.mxu0 0.0
    %2445 = vmatprep.subr.mxu0 0.0
    %2446 = vmatpush2.xpose.msra.mxu0 0.0
    %2447 = vmatprep.subr.mxu0 0.0
    %2448 = vmatpush2.xpose.msra.mxu0 0.0
    %2449 = vmatprep.subr.mxu0 0.0
    %2450 = vmatpush2.xpose.msra.mxu0 0.0
    %2451 = vmatprep.subr.mxu0 0.0
    %2452 = vmatpush2.xpose.msra.mxu0 0.0
    %2453 = vmatprep.subr.mxu0 0.0
    %2454 = vmatpush2.xpose.msra.mxu0 0.0
    %2455 = vmatprep.subr.mxu0 0.0
    %2456 = vmatpush2.xpose.msra.mxu0 0.0
    %2457 = vmatprep.subr.mxu0 0.0
    %2458 = vmatpush2.xpose.msra.mxu0 0.0
    %2459 = vmatprep.subr.mxu0 0.0
    %2460 = vmatpush2.xpose.msra.mxu0 0.0
    %2461 = vmatprep.subr.mxu0 0.0
    %2462 = vmatpush2.xpose.msra.mxu0 0.0
    %2463 = vmatprep.subr.mxu0 0.0
    %2464 = vmatpush2.xpose.msra.mxu0 0.0
    %2465 = vmatprep.subr.mxu0 0.0
    %2466 = vmatpush2.xpose.msra.mxu0 0.0
    %2467 = vmatprep.subr.mxu0 0.0
    %2468 = vmatpush2.xpose.msra.mxu0 0.0
    %2469 = vmatprep.subr.mxu0 0.0
    %2470 = vmatpush2.xpose.msra.mxu0 0.0
    %2471 = vmatprep.subr.mxu0 0.0
    %2472 = vmatpush2.xpose.msra.mxu0 0.0
    %2473 = vmatprep.subr.mxu0 0.0
    %2474 = vmatpush2.xpose.msra.mxu0 0.0
    %2475 = vmatprep.mubr.f32.mxu0 0.0
    %2476 = vmatmul.mubr.f32.gmra.mxu0 %v2409
    %v2477 = vpop.f32.mrf.mxu0
    %v2478 = vadd.f32 %v97, %v2477
    %v2479 = vpop.f32.mrf.mxu0
    %2480 = vdwg.mxu0
    %v2481 = vsel %vm584, %v2400, -inf
    %2482 = vmax.xlane.f32.xlu0 %v2481
    %v2483 = vpop.xlane.xlu0 %2482
    %v2484 = vsel %vm584, %v2478, -inf
    %2485 = vmax.xlane.f32.xlu0 %v2484
    %v2486 = vpop.xlane.xlu0 %2485
    %v2487 = vsub.f32 %v2400, %v2483
    %v2488 = vsub.f32 %v2478, %v2486
    %v2489 = vmul.f32 %v2487, 1.442695
    %v2490 = vpow.pop %v2489
    %v2491 = vmul.f32 %v2488, 1.442695
    %v2492 = vpow.pop %v2491
    %v2493 = vsel %vm584, %v2490, 0.0
    %2494 = vadd.xlane.f32.xlu0 %v2493
    %v2495 = vpop.xlane.xlu0 %2494
    %v2496 = vsel %vm584, %v2492, 0.0
    %2497 = vadd.xlane.f32.xlu0 %v2496
    %v2498 = vpop.xlane.xlu0 %2497
    %v2499 = vrcp.pop %v2495
    %v2500 = vrcp.pop %v2498
    %v2501 = vmul.f32 %v2490, %v2499
    %v2502 = vmul.f32 %v2492, %v2500
    %v2504 = vsel %vm607, %v2501, 0
    %2506 = vmatprep.subr.mxu0 0.0
    %2507 = vmatpush1.msra.mxu0 0.0
    %2508 = vmatprep.subr.mxu0 0.0
    %2509 = vmatpush1.msra.mxu0 0.0
    %2510 = vmatprep.subr.mxu0 0.0
    %2511 = vmatpush1.msra.mxu0 0.0
    %2512 = vmatprep.subr.mxu0 0.0
    %2513 = vmatpush1.msra.mxu0 0.0
    %2514 = vmatprep.subr.mxu0 0.0
    %2515 = vmatpush1.msra.mxu0 0.0
    %2516 = vmatprep.subr.mxu0 0.0
    %2517 = vmatpush1.msra.mxu0 0.0
    %2518 = vmatprep.subr.mxu0 0.0
    %2519 = vmatpush1.msra.mxu0 0.0
    %2520 = vmatprep.subr.mxu0 0.0
    %2521 = vmatpush1.msra.mxu0 0.0
    %2522 = vmatprep.subr.mxu0 0.0
    %2523 = vmatpush1.msra.mxu0 0.0
    %2524 = vmatprep.subr.mxu0 0.0
    %2525 = vmatpush1.msra.mxu0 0.0
    %2526 = vmatprep.subr.mxu0 0.0
    %2527 = vmatpush1.msra.mxu0 0.0
    %2528 = vmatprep.subr.mxu0 0.0
    %2529 = vmatpush1.msra.mxu0 0.0
    %2530 = vmatprep.subr.mxu0 0.0
    %2531 = vmatpush1.msra.mxu0 0.0
    %2532 = vmatprep.subr.mxu0 0.0
    %2533 = vmatpush1.msra.mxu0 0.0
    %2534 = vmatprep.subr.mxu0 0.0
    %2535 = vmatpush1.msra.mxu0 %v613
    %2536 = vmatprep.subr.mxu0 0.0
    %2537 = vmatpush1.msra.mxu0 %v66
    %2538 = vmatprep.subr.mxu0 0.0
    %2539 = vmatpush2.msra.mxu0 0.0
    %2540 = vmatprep.subr.mxu0 0.0
    %2541 = vmatpush2.msra.mxu0 0.0
    %2542 = vmatprep.subr.mxu0 0.0
    %2543 = vmatpush2.msra.mxu0 0.0
    %2544 = vmatprep.subr.mxu0 0.0
    %2545 = vmatpush2.msra.mxu0 0.0
    %2546 = vmatprep.subr.mxu0 0.0
    %2547 = vmatpush2.msra.mxu0 0.0
    %2548 = vmatprep.subr.mxu0 0.0
    %2549 = vmatpush2.msra.mxu0 0.0
    %2550 = vmatprep.subr.mxu0 0.0
    %2551 = vmatpush2.msra.mxu0 0.0
    %2552 = vmatprep.subr.mxu0 0.0
    %2553 = vmatpush2.msra.mxu0 0.0
    %2554 = vmatprep.subr.mxu0 0.0
    %2555 = vmatpush2.msra.mxu0 0.0
    %2556 = vmatprep.subr.mxu0 0.0
    %2557 = vmatpush2.msra.mxu0 0.0
    %2558 = vmatprep.subr.mxu0 0.0
    %2559 = vmatpush2.msra.mxu0 0.0
    %2560 = vmatprep.subr.mxu0 0.0
    %2561 = vmatpush2.msra.mxu0 0.0
    %2562 = vmatprep.subr.mxu0 0.0
    %2563 = vmatpush2.msra.mxu0 0.0
    %2564 = vmatprep.subr.mxu0 0.0
    %2565 = vmatpush2.msra.mxu0 0.0
    %2566 = vmatprep.subr.mxu0 0.0
    %2567 = vmatpush2.msra.mxu0 0.0
    %2568 = vmatprep.subr.mxu0 0.0
    %2569 = vmatpush2.msra.mxu0 0.0
    %2570 = vmatprep.mubr.f32.mxu0 0.0
    %2571 = vmatmul.mubr.f32.gmra.mxu0 %v2504
    %v2572 = vpop.f32.mrf.mxu0
    %v2573 = vadd.f32 0.0, %v2572
    %v2574 = vpop.f32.mrf.mxu0
    %2575 = vdwg.mxu0
    %v2577 = vsel %vm607, %v2502, 0
    %2579 = vmatprep.subr.mxu0 0.0
    %2580 = vmatpush1.msra.mxu0 0.0
    %2581 = vmatprep.subr.mxu0 0.0
    %2582 = vmatpush1.msra.mxu0 0.0
    %2583 = vmatprep.subr.mxu0 0.0
    %2584 = vmatpush1.msra.mxu0 0.0
    %2585 = vmatprep.subr.mxu0 0.0
    %2586 = vmatpush1.msra.mxu0 0.0
    %2587 = vmatprep.subr.mxu0 0.0
    %2588 = vmatpush1.msra.mxu0 0.0
    %2589 = vmatprep.subr.mxu0 0.0
    %2590 = vmatpush1.msra.mxu0 0.0
    %2591 = vmatprep.subr.mxu0 0.0
    %2592 = vmatpush1.msra.mxu0 0.0
    %2593 = vmatprep.subr.mxu0 0.0
    %2594 = vmatpush1.msra.mxu0 0.0
    %2595 = vmatprep.subr.mxu0 0.0
    %2596 = vmatpush1.msra.mxu0 0.0
    %2597 = vmatprep.subr.mxu0 0.0
    %2598 = vmatpush1.msra.mxu0 0.0
    %2599 = vmatprep.subr.mxu0 0.0
    %2600 = vmatpush1.msra.mxu0 0.0
    %2601 = vmatprep.subr.mxu0 0.0
    %2602 = vmatpush1.msra.mxu0 0.0
    %2603 = vmatprep.subr.mxu0 0.0
    %2604 = vmatpush1.msra.mxu0 0.0
    %2605 = vmatprep.subr.mxu0 0.0
    %2606 = vmatpush1.msra.mxu0 0.0
    %2607 = vmatprep.subr.mxu0 0.0
    %2608 = vmatpush1.msra.mxu0 %v689
    %2609 = vmatprep.subr.mxu0 0.0
    %2610 = vmatpush1.msra.mxu0 %v68
    %2611 = vmatprep.subr.mxu0 0.0
    %2612 = vmatpush2.msra.mxu0 0.0
    %2613 = vmatprep.subr.mxu0 0.0
    %2614 = vmatpush2.msra.mxu0 0.0
    %2615 = vmatprep.subr.mxu0 0.0
    %2616 = vmatpush2.msra.mxu0 0.0
    %2617 = vmatprep.subr.mxu0 0.0
    %2618 = vmatpush2.msra.mxu0 0.0
    %2619 = vmatprep.subr.mxu0 0.0
    %2620 = vmatpush2.msra.mxu0 0.0
    %2621 = vmatprep.subr.mxu0 0.0
    %2622 = vmatpush2.msra.mxu0 0.0
    %2623 = vmatprep.subr.mxu0 0.0
    %2624 = vmatpush2.msra.mxu0 0.0
    %2625 = vmatprep.subr.mxu0 0.0
    %2626 = vmatpush2.msra.mxu0 0.0
    %2627 = vmatprep.subr.mxu0 0.0
    %2628 = vmatpush2.msra.mxu0 0.0
    %2629 = vmatprep.subr.mxu0 0.0
    %2630 = vmatpush2.msra.mxu0 0.0
    %2631 = vmatprep.subr.mxu0 0.0
    %2632 = vmatpush2.msra.mxu0 0.0
    %2633 = vmatprep.subr.mxu0 0.0
    %2634 = vmatpush2.msra.mxu0 0.0
    %2635 = vmatprep.subr.mxu0 0.0
    %2636 = vmatpush2.msra.mxu0 0.0
    %2637 = vmatprep.subr.mxu0 0.0
    %2638 = vmatpush2.msra.mxu0 0.0
    %2639 = vmatprep.subr.mxu0 0.0
    %2640 = vmatpush2.msra.mxu0 0.0
    %2641 = vmatprep.subr.mxu0 0.0
    %2642 = vmatpush2.msra.mxu0 0.0
    %2643 = vmatprep.mubr.f32.mxu0 0.0
    %2644 = vmatmul.mubr.f32.gmra.mxu0 %v2577
    %v2645 = vpop.f32.mrf.mxu0
    %v2646 = vadd.f32 0.0, %v2645
    %v2647 = vpop.f32.mrf.mxu0
    %2648 = vdwg.mxu0
    %2649 = vmatprep.subr.mxu0 0.0
    %2650 = vmatpush1.xpose.msra.mxu0 0.0
    %2651 = vmatprep.subr.mxu0 0.0
    %2652 = vmatpush1.xpose.msra.mxu0 0.0
    %2653 = vmatprep.subr.mxu0 0.0
    %2654 = vmatpush1.xpose.msra.mxu0 0.0
    %2655 = vmatprep.subr.mxu0 0.0
    %2656 = vmatpush1.xpose.msra.mxu0 0.0
    %2657 = vmatprep.subr.mxu0 0.0
    %2658 = vmatpush1.xpose.msra.mxu0 0.0
    %2659 = vmatprep.subr.mxu0 0.0
    %2660 = vmatpush1.xpose.msra.mxu0 0.0
    %2661 = vmatprep.subr.mxu0 0.0
    %2662 = vmatpush1.xpose.msra.mxu0 0.0
    %2663 = vmatprep.subr.mxu0 0.0
    %2664 = vmatpush1.xpose.msra.mxu0 0.0
    %2665 = vmatprep.subr.mxu0 0.0
    %2666 = vmatpush1.xpose.msra.mxu0 0.0
    %2667 = vmatprep.subr.mxu0 0.0
    %2668 = vmatpush1.xpose.msra.mxu0 0.0
    %2669 = vmatprep.subr.mxu0 0.0
    %2670 = vmatpush1.xpose.msra.mxu0 0.0
    %2671 = vmatprep.subr.mxu0 0.0
    %2672 = vmatpush1.xpose.msra.mxu0 0.0
    %2673 = vmatprep.subr.mxu0 0.0
    %2674 = vmatpush1.xpose.msra.mxu0 0.0
    %2675 = vmatprep.subr.mxu0 0.0
    %2676 = vmatpush1.xpose.msra.mxu0 0.0
    %2677 = vmatprep.subr.mxu0 0.0
    %2678 = vmatpush1.xpose.msra.mxu0 0.0
    %2679 = vmatprep.subr.mxu0 0.0
    %2680 = vmatpush1.xpose.msra.mxu0 %v762
    %2681 = vmatprep.subr.mxu0 0.0
    %2682 = vmatpush2.xpose.msra.mxu0 0.0
    %2683 = vmatprep.subr.mxu0 0.0
    %2684 = vmatpush2.xpose.msra.mxu0 0.0
    %2685 = vmatprep.subr.mxu0 0.0
    %2686 = vmatpush2.xpose.msra.mxu0 0.0
    %2687 = vmatprep.subr.mxu0 0.0
    %2688 = vmatpush2.xpose.msra.mxu0 0.0
    %2689 = vmatprep.subr.mxu0 0.0
    %2690 = vmatpush2.xpose.msra.mxu0 0.0
    %2691 = vmatprep.subr.mxu0 0.0
    %2692 = vmatpush2.xpose.msra.mxu0 0.0
    %2693 = vmatprep.subr.mxu0 0.0
    %2694 = vmatpush2.xpose.msra.mxu0 0.0
    %2695 = vmatprep.subr.mxu0 0.0
    %2696 = vmatpush2.xpose.msra.mxu0 0.0
    %2697 = vmatprep.subr.mxu0 0.0
    %2698 = vmatpush2.xpose.msra.mxu0 0.0
    %2699 = vmatprep.subr.mxu0 0.0
    %2700 = vmatpush2.xpose.msra.mxu0 0.0
    %2701 = vmatprep.subr.mxu0 0.0
    %2702 = vmatpush2.xpose.msra.mxu0 0.0
    %2703 = vmatprep.subr.mxu0 0.0
    %2704 = vmatpush2.xpose.msra.mxu0 0.0
    %2705 = vmatprep.subr.mxu0 0.0
    %2706 = vmatpush2.xpose.msra.mxu0 0.0
    %2707 = vmatprep.subr.mxu0 0.0
    %2708 = vmatpush2.xpose.msra.mxu0 0.0
    %2709 = vmatprep.subr.mxu0 0.0
    %2710 = vmatpush2.xpose.msra.mxu0 0.0
    %2711 = vmatprep.subr.mxu0 0.0
    %2712 = vmatpush2.xpose.msra.mxu0 0.0
    %2713 = vmatprep.mubr.f32.mxu0 0.0
    %2714 = vmatmul.mubr.f32.gmra.mxu0 %v2331
    %v2715 = vpop.f32.mrf.mxu0
    %v2716 = vadd.f32 %v116, %v2715
    %v2717 = vpop.f32.mrf.mxu0
    %2718 = vdwg.mxu0
    %2719 = vmatprep.subr.mxu0 0.0
    %2720 = vmatpush1.xpose.msra.mxu0 0.0
    %2721 = vmatprep.subr.mxu0 0.0
    %2722 = vmatpush1.xpose.msra.mxu0 0.0
    %2723 = vmatprep.subr.mxu0 0.0
    %2724 = vmatpush1.xpose.msra.mxu0 0.0
    %2725 = vmatprep.subr.mxu0 0.0
    %2726 = vmatpush1.xpose.msra.mxu0 0.0
    %2727 = vmatprep.subr.mxu0 0.0
    %2728 = vmatpush1.xpose.msra.mxu0 0.0
    %2729 = vmatprep.subr.mxu0 0.0
    %2730 = vmatpush1.xpose.msra.mxu0 0.0
    %2731 = vmatprep.subr.mxu0 0.0
    %2732 = vmatpush1.xpose.msra.mxu0 0.0
    %2733 = vmatprep.subr.mxu0 0.0
    %2734 = vmatpush1.xpose.msra.mxu0 0.0
    %2735 = vmatprep.subr.mxu0 0.0
    %2736 = vmatpush1.xpose.msra.mxu0 0.0
    %2737 = vmatprep.subr.mxu0 0.0
    %2738 = vmatpush1.xpose.msra.mxu0 0.0
    %2739 = vmatprep.subr.mxu0 0.0
    %2740 = vmatpush1.xpose.msra.mxu0 0.0
    %2741 = vmatprep.subr.mxu0 0.0
    %2742 = vmatpush1.xpose.msra.mxu0 0.0
    %2743 = vmatprep.subr.mxu0 0.0
    %2744 = vmatpush1.xpose.msra.mxu0 0.0
    %2745 = vmatprep.subr.mxu0 0.0
    %2746 = vmatpush1.xpose.msra.mxu0 0.0
    %2747 = vmatprep.subr.mxu0 0.0
    %2748 = vmatpush1.xpose.msra.mxu0 0.0
    %2749 = vmatprep.subr.mxu0 0.0
    %2750 = vmatpush1.xpose.msra.mxu0 %v835
    %2751 = vmatprep.subr.mxu0 0.0
    %2752 = vmatpush2.xpose.msra.mxu0 0.0
    %2753 = vmatprep.subr.mxu0 0.0
    %2754 = vmatpush2.xpose.msra.mxu0 0.0
    %2755 = vmatprep.subr.mxu0 0.0
    %2756 = vmatpush2.xpose.msra.mxu0 0.0
    %2757 = vmatprep.subr.mxu0 0.0
    %2758 = vmatpush2.xpose.msra.mxu0 0.0
    %2759 = vmatprep.subr.mxu0 0.0
    %2760 = vmatpush2.xpose.msra.mxu0 0.0
    %2761 = vmatprep.subr.mxu0 0.0
    %2762 = vmatpush2.xpose.msra.mxu0 0.0
    %2763 = vmatprep.subr.mxu0 0.0
    %2764 = vmatpush2.xpose.msra.mxu0 0.0
    %2765 = vmatprep.subr.mxu0 0.0
    %2766 = vmatpush2.xpose.msra.mxu0 0.0
    %2767 = vmatprep.subr.mxu0 0.0
    %2768 = vmatpush2.xpose.msra.mxu0 0.0
    %2769 = vmatprep.subr.mxu0 0.0
    %2770 = vmatpush2.xpose.msra.mxu0 0.0
    %2771 = vmatprep.subr.mxu0 0.0
    %2772 = vmatpush2.xpose.msra.mxu0 0.0
    %2773 = vmatprep.subr.mxu0 0.0
    %2774 = vmatpush2.xpose.msra.mxu0 0.0
    %2775 = vmatprep.subr.mxu0 0.0
    %2776 = vmatpush2.xpose.msra.mxu0 0.0
    %2777 = vmatprep.subr.mxu0 0.0
    %2778 = vmatpush2.xpose.msra.mxu0 0.0
    %2779 = vmatprep.subr.mxu0 0.0
    %2780 = vmatpush2.xpose.msra.mxu0 0.0
    %2781 = vmatprep.subr.mxu0 0.0
    %2782 = vmatpush2.xpose.msra.mxu0 0.0
    %2783 = vmatprep.mubr.f32.mxu0 0.0
    %2784 = vmatmul.mubr.f32.gmra.mxu0 %v2409
    %v2785 = vpop.f32.mrf.mxu0
    %v2786 = vadd.f32 %v123, %v2785
    %v2787 = vpop.f32.mrf.mxu0
    %2788 = vdwg.mxu0
    %v2789 = vsel %vm907, %v2716, -inf
    %2790 = vmax.xlane.f32.xlu0 %v2789
    %v2791 = vpop.xlane.xlu0 %2790
    %v2792 = vsel %vm907, %v2786, -inf
    %2793 = vmax.xlane.f32.xlu0 %v2792
    %v2794 = vpop.xlane.xlu0 %2793
    %v2795 = vsub.f32 %v2716, %v2791
    %v2796 = vsub.f32 %v2786, %v2794
    %v2797 = vmul.f32 %v2795, 1.442695
    %v2798 = vpow.pop %v2797
    %v2799 = vmul.f32 %v2796, 1.442695
    %v2800 = vpow.pop %v2799
    %v2801 = vsel %vm907, %v2798, 0.0
    %2802 = vadd.xlane.f32.xlu0 %v2801
    %v2803 = vpop.xlane.xlu0 %2802
    %v2804 = vsel %vm907, %v2800, 0.0
    %2805 = vadd.xlane.f32.xlu0 %v2804
    %v2806 = vpop.xlane.xlu0 %2805
    %v2807 = vrcp.pop %v2803
    %v2808 = vrcp.pop %v2806
    %v2809 = vmul.f32 %v2798, %v2807
    %v2810 = vmul.f32 %v2800, %v2808
    %v2812 = vsel %vm930, %v2809, 0
    %2814 = vmatprep.subr.mxu0 0.0
    %2815 = vmatpush1.msra.mxu0 0.0
    %2816 = vmatprep.subr.mxu0 0.0
    %2817 = vmatpush1.msra.mxu0 0.0
    %2818 = vmatprep.subr.mxu0 0.0
    %2819 = vmatpush1.msra.mxu0 0.0
    %2820 = vmatprep.subr.mxu0 0.0
    %2821 = vmatpush1.msra.mxu0 0.0
    %2822 = vmatprep.subr.mxu0 0.0
    %2823 = vmatpush1.msra.mxu0 0.0
    %2824 = vmatprep.subr.mxu0 0.0
    %2825 = vmatpush1.msra.mxu0 0.0
    %2826 = vmatprep.subr.mxu0 0.0
    %2827 = vmatpush1.msra.mxu0 0.0
    %2828 = vmatprep.subr.mxu0 0.0
    %2829 = vmatpush1.msra.mxu0 0.0
    %2830 = vmatprep.subr.mxu0 0.0
    %2831 = vmatpush1.msra.mxu0 0.0
    %2832 = vmatprep.subr.mxu0 0.0
    %2833 = vmatpush1.msra.mxu0 0.0
    %2834 = vmatprep.subr.mxu0 0.0
    %2835 = vmatpush1.msra.mxu0 0.0
    %2836 = vmatprep.subr.mxu0 0.0
    %2837 = vmatpush1.msra.mxu0 0.0
    %2838 = vmatprep.subr.mxu0 0.0
    %2839 = vmatpush1.msra.mxu0 0.0
    %2840 = vmatprep.subr.mxu0 0.0
    %2841 = vmatpush1.msra.mxu0 0.0
    %2842 = vmatprep.subr.mxu0 0.0
    %2843 = vmatpush1.msra.mxu0 0.0
    %2844 = vmatprep.subr.mxu0 0.0
    %2845 = vmatpush1.msra.mxu0 %v936
    %2846 = vmatprep.subr.mxu0 0.0
    %2847 = vmatpush2.msra.mxu0 0.0
    %2848 = vmatprep.subr.mxu0 0.0
    %2849 = vmatpush2.msra.mxu0 0.0
    %2850 = vmatprep.subr.mxu0 0.0
    %2851 = vmatpush2.msra.mxu0 0.0
    %2852 = vmatprep.subr.mxu0 0.0
    %2853 = vmatpush2.msra.mxu0 0.0
    %2854 = vmatprep.subr.mxu0 0.0
    %2855 = vmatpush2.msra.mxu0 0.0
    %2856 = vmatprep.subr.mxu0 0.0
    %2857 = vmatpush2.msra.mxu0 0.0
    %2858 = vmatprep.subr.mxu0 0.0
    %2859 = vmatpush2.msra.mxu0 0.0
    %2860 = vmatprep.subr.mxu0 0.0
    %2861 = vmatpush2.msra.mxu0 0.0
    %2862 = vmatprep.subr.mxu0 0.0
    %2863 = vmatpush2.msra.mxu0 0.0
    %2864 = vmatprep.subr.mxu0 0.0
    %2865 = vmatpush2.msra.mxu0 0.0
    %2866 = vmatprep.subr.mxu0 0.0
    %2867 = vmatpush2.msra.mxu0 0.0
    %2868 = vmatprep.subr.mxu0 0.0
    %2869 = vmatpush2.msra.mxu0 0.0
    %2870 = vmatprep.subr.mxu0 0.0
    %2871 = vmatpush2.msra.mxu0 0.0
    %2872 = vmatprep.subr.mxu0 0.0
    %2873 = vmatpush2.msra.mxu0 0.0
    %2874 = vmatprep.subr.mxu0 0.0
    %2875 = vmatpush2.msra.mxu0 0.0
    %2876 = vmatprep.subr.mxu0 0.0
    %2877 = vmatpush2.msra.mxu0 0.0
    %2878 = vmatprep.mubr.f32.mxu0 0.0
    %2879 = vmatmul.mubr.f32.gmra.mxu0 %v2812
    %v2880 = vpop.f32.mrf.mxu0
    %v2881 = vadd.f32 0.0, %v2880
    %v2882 = vpop.f32.mrf.mxu0
    %2883 = vdwg.mxu0
    %v2885 = vsel %vm930, %v2810, 0
    %2887 = vmatprep.subr.mxu0 0.0
    %2888 = vmatpush1.msra.mxu0 0.0
    %2889 = vmatprep.subr.mxu0 0.0
    %2890 = vmatpush1.msra.mxu0 0.0
    %2891 = vmatprep.subr.mxu0 0.0
    %2892 = vmatpush1.msra.mxu0 0.0
    %2893 = vmatprep.subr.mxu0 0.0
    %2894 = vmatpush1.msra.mxu0 0.0
    %2895 = vmatprep.subr.mxu0 0.0
    %2896 = vmatpush1.msra.mxu0 0.0
    %2897 = vmatprep.subr.mxu0 0.0
    %2898 = vmatpush1.msra.mxu0 0.0
    %2899 = vmatprep.subr.mxu0 0.0
    %2900 = vmatpush1.msra.mxu0 0.0
    %2901 = vmatprep.subr.mxu0 0.0
    %2902 = vmatpush1.msra.mxu0 0.0
    %2903 = vmatprep.subr.mxu0 0.0
    %2904 = vmatpush1.msra.mxu0 0.0
    %2905 = vmatprep.subr.mxu0 0.0
    %2906 = vmatpush1.msra.mxu0 0.0
    %2907 = vmatprep.subr.mxu0 0.0
    %2908 = vmatpush1.msra.mxu0 0.0
    %2909 = vmatprep.subr.mxu0 0.0
    %2910 = vmatpush1.msra.mxu0 0.0
    %2911 = vmatprep.subr.mxu0 0.0
    %2912 = vmatpush1.msra.mxu0 0.0
    %2913 = vmatprep.subr.mxu0 0.0
    %2914 = vmatpush1.msra.mxu0 0.0
    %2915 = vmatprep.subr.mxu0 0.0
    %2916 = vmatpush1.msra.mxu0 0.0
    %2917 = vmatprep.subr.mxu0 0.0
    %2918 = vmatpush1.msra.mxu0 %v1012
    %2919 = vmatprep.subr.mxu0 0.0
    %2920 = vmatpush2.msra.mxu0 0.0
    %2921 = vmatprep.subr.mxu0 0.0
    %2922 = vmatpush2.msra.mxu0 0.0
    %2923 = vmatprep.subr.mxu0 0.0
    %2924 = vmatpush2.msra.mxu0 0.0
    %2925 = vmatprep.subr.mxu0 0.0
    %2926 = vmatpush2.msra.mxu0 0.0
    %2927 = vmatprep.subr.mxu0 0.0
    %2928 = vmatpush2.msra.mxu0 0.0
    %2929 = vmatprep.subr.mxu0 0.0
    %2930 = vmatpush2.msra.mxu0 0.0
    %2931 = vmatprep.subr.mxu0 0.0
    %2932 = vmatpush2.msra.mxu0 0.0
    %2933 = vmatprep.subr.mxu0 0.0
    %2934 = vmatpush2.msra.mxu0 0.0
    %2935 = vmatprep.subr.mxu0 0.0
    %2936 = vmatpush2.msra.mxu0 0.0
    %2937 = vmatprep.subr.mxu0 0.0
    %2938 = vmatpush2.msra.mxu0 0.0
    %2939 = vmatprep.subr.mxu0 0.0
    %2940 = vmatpush2.msra.mxu0 0.0
    %2941 = vmatprep.subr.mxu0 0.0
    %2942 = vmatpush2.msra.mxu0 0.0
    %2943 = vmatprep.subr.mxu0 0.0
    %2944 = vmatpush2.msra.mxu0 0.0
    %2945 = vmatprep.subr.mxu0 0.0
    %2946 = vmatpush2.msra.mxu0 0.0
    %2947 = vmatprep.subr.mxu0 0.0
    %2948 = vmatpush2.msra.mxu0 0.0
    %2949 = vmatprep.subr.mxu0 0.0
    %2950 = vmatpush2.msra.mxu0 0.0
    %2951 = vmatprep.mubr.f32.mxu0 0.0
    %2952 = vmatmul.mubr.f32.gmra.mxu0 %v2885
    %v2953 = vpop.f32.mrf.mxu0
    %v2954 = vadd.f32 0.0, %v2953
    %v2955 = vpop.f32.mrf.mxu0
    %2956 = vdwg.mxu0
    %v2959 = vrot.slane %v2646, 7
    %v2960 = vsel %vm1087, %v2959, %v2573
    %v2962 = vadd.f32 %v2322, %v2960
    %v2963 = vtanh.pop %v2962
    %v2966 = vrot.slane %v2954, 7
    %v2967 = vsel %vm1087, %v2966, %v2881
    %2968 = vrot.lane.b32.xlu0 %v2967, 32
    %v2969 = vpop.permute.xlu0 %2968
    %v2971 = vadd.f32 %v2322, %v2969
    %v2972 = vtanh.pop %v2971
    %s2974 = scalar_lea.vmem [#allocation5], 4
    %2975 = vst.msk [vmem:[%s2974] sm:$0x3] %vm1102, %v2252
    %s2976 = scalar_lea.vmem [#allocation7], 4
    %2977 = vst.msk [vmem:[%s2976] sm:$0x3] %vm1102, %v2963
    %2979 = vrot.lane.b32.xlu0 %v2972, 96
    %v2980 = vpop.permute.xlu0 %2979
    %s2982 = scalar_lea.vmem [#allocation9], 4
    %2983 = vst.msk [vmem:[%s2982] sm:$0x3] %vm1102, %v2980
    %v2984 = vrot.slane %v2502, 7
    %v2985 = vsel %vm1087, %v2984, %v2501
    %s2987 = scalar_lea.vmem [#allocation10], 4
    %2988 = vst.msk [vmem:[%s2987] sm:$0x3] %vm1113, %v2985
    %v2989 = vrot.slane %v2810, 7
    %v2990 = vsel %vm1087, %v2989, %v2809
    %s2992 = scalar_lea.vmem [#allocation12], 4
    %2993 = vst.msk [vmem:[%s2992] sm:$0x3] %vm1118, %v2990
    %s2994 = scalar_lea.vmem %s0, 6
    %v2995 = vld [vmem:[%s2994] sm:$0x3]
    %v2997 = vsel %vm142, %v2963, 0
    %2999 = vmatprep.subr.mxu0 0.0
    %3000 = vmatpush1.msra.mxu0 0.0
    %3001 = vmatprep.subr.mxu0 0.0
    %3002 = vmatpush1.msra.mxu0 0.0
    %3003 = vmatprep.subr.mxu0 0.0
    %3004 = vmatpush1.msra.mxu0 0.0
    %3005 = vmatprep.subr.mxu0 0.0
    %3006 = vmatpush1.msra.mxu0 0.0
    %3007 = vmatprep.subr.mxu0 0.0
    %3008 = vmatpush1.msra.mxu0 0.0
    %3009 = vmatprep.subr.mxu0 0.0
    %3010 = vmatpush1.msra.mxu0 0.0
    %3011 = vmatprep.subr.mxu0 0.0
    %3012 = vmatpush1.msra.mxu0 0.0
    %3013 = vmatprep.subr.mxu0 0.0
    %3014 = vmatpush1.msra.mxu0 0.0
    %3015 = vmatprep.subr.mxu0 0.0
    %3016 = vmatpush1.msra.mxu0 0.0
    %3017 = vmatprep.subr.mxu0 0.0
    %3018 = vmatpush1.msra.mxu0 0.0
    %3019 = vmatprep.subr.mxu0 0.0
    %3020 = vmatpush1.msra.mxu0 0.0
    %3021 = vmatprep.subr.mxu0 0.0
    %3022 = vmatpush1.msra.mxu0 0.0
    %3023 = vmatprep.subr.mxu0 0.0
    %3024 = vmatpush1.msra.mxu0 %v129
    %3025 = vmatprep.subr.mxu0 0.0
    %3026 = vmatpush1.msra.mxu0 %v128
    %3027 = vmatprep.subr.mxu0 0.0
    %3028 = vmatpush1.msra.mxu0 %v127
    %3029 = vmatprep.subr.mxu0 0.0
    %3030 = vmatpush1.msra.mxu0 %v126
    %3031 = vmatprep.subr.mxu0 0.0
    %3032 = vmatpush2.msra.mxu0 0.0
    %3033 = vmatprep.subr.mxu0 0.0
    %3034 = vmatpush2.msra.mxu0 0.0
    %3035 = vmatprep.subr.mxu0 0.0
    %3036 = vmatpush2.msra.mxu0 0.0
    %3037 = vmatprep.subr.mxu0 0.0
    %3038 = vmatpush2.msra.mxu0 0.0
    %3039 = vmatprep.subr.mxu0 0.0
    %3040 = vmatpush2.msra.mxu0 0.0
    %3041 = vmatprep.subr.mxu0 0.0
    %3042 = vmatpush2.msra.mxu0 0.0
    %3043 = vmatprep.subr.mxu0 0.0
    %3044 = vmatpush2.msra.mxu0 0.0
    %3045 = vmatprep.subr.mxu0 0.0
    %3046 = vmatpush2.msra.mxu0 0.0
    %3047 = vmatprep.subr.mxu0 0.0
    %3048 = vmatpush2.msra.mxu0 0.0
    %3049 = vmatprep.subr.mxu0 0.0
    %3050 = vmatpush2.msra.mxu0 0.0
    %3051 = vmatprep.subr.mxu0 0.0
    %3052 = vmatpush2.msra.mxu0 0.0
    %3053 = vmatprep.subr.mxu0 0.0
    %3054 = vmatpush2.msra.mxu0 0.0
    %3055 = vmatprep.subr.mxu0 0.0
    %3056 = vmatpush2.msra.mxu0 0.0
    %3057 = vmatprep.subr.mxu0 0.0
    %3058 = vmatpush2.msra.mxu0 0.0
    %3059 = vmatprep.subr.mxu0 0.0
    %3060 = vmatpush2.msra.mxu0 0.0
    %3061 = vmatprep.subr.mxu0 0.0
    %3062 = vmatpush2.msra.mxu0 0.0
    %3063 = vmatprep.mubr.f32.mxu0 0.0
    %3064 = vmatmul.mubr.f32.gmra.mxu0 %v2997
    %v3065 = vpop.f32.mrf.mxu0
    %v3066 = vadd.f32 0.0, %v3065
    %v3067 = vpop.f32.mrf.mxu0
    %3068 = vdwg.mxu0
    %v3069 = vadd.f32 %v2995, %v3066
    %3070 = vmatprep.subr.mxu0 0.0
    %3071 = vmatpush1.msra.mxu0 0.0
    %3072 = vmatprep.subr.mxu0 0.0
    %3073 = vmatpush1.msra.mxu0 0.0
    %3074 = vmatprep.subr.mxu0 0.0
    %3075 = vmatpush1.msra.mxu0 0.0
    %3076 = vmatprep.subr.mxu0 0.0
    %3077 = vmatpush1.msra.mxu0 0.0
    %3078 = vmatprep.subr.mxu0 0.0
    %3079 = vmatpush1.msra.mxu0 0.0
    %3080 = vmatprep.subr.mxu0 0.0
    %3081 = vmatpush1.msra.mxu0 0.0
    %3082 = vmatprep.subr.mxu0 0.0
    %3083 = vmatpush1.msra.mxu0 0.0
    %3084 = vmatprep.subr.mxu0 0.0
    %3085 = vmatpush1.msra.mxu0 0.0
    %3086 = vmatprep.subr.mxu0 0.0
    %3087 = vmatpush1.msra.mxu0 0.0
    %3088 = vmatprep.subr.mxu0 0.0
    %3089 = vmatpush1.msra.mxu0 0.0
    %3090 = vmatprep.subr.mxu0 0.0
    %3091 = vmatpush1.msra.mxu0 0.0
    %3092 = vmatprep.subr.mxu0 0.0
    %3093 = vmatpush1.msra.mxu0 0.0
    %3094 = vmatprep.subr.mxu0 0.0
    %3095 = vmatpush1.msra.mxu0 %v133
    %3096 = vmatprep.subr.mxu0 0.0
    %3097 = vmatpush1.msra.mxu0 %v132
    %3098 = vmatprep.subr.mxu0 0.0
    %3099 = vmatpush1.msra.mxu0 %v131
    %3100 = vmatprep.subr.mxu0 0.0
    %3101 = vmatpush1.msra.mxu0 %v130
    %3102 = vmatprep.subr.mxu0 0.0
    %3103 = vmatpush2.msra.mxu0 0.0
    %3104 = vmatprep.subr.mxu0 0.0
    %3105 = vmatpush2.msra.mxu0 0.0
    %3106 = vmatprep.subr.mxu0 0.0
    %3107 = vmatpush2.msra.mxu0 0.0
    %3108 = vmatprep.subr.mxu0 0.0
    %3109 = vmatpush2.msra.mxu0 0.0
    %3110 = vmatprep.subr.mxu0 0.0
    %3111 = vmatpush2.msra.mxu0 0.0
    %3112 = vmatprep.subr.mxu0 0.0
    %3113 = vmatpush2.msra.mxu0 0.0
    %3114 = vmatprep.subr.mxu0 0.0
    %3115 = vmatpush2.msra.mxu0 0.0
    %3116 = vmatprep.subr.mxu0 0.0
    %3117 = vmatpush2.msra.mxu0 0.0
    %3118 = vmatprep.subr.mxu0 0.0
    %3119 = vmatpush2.msra.mxu0 0.0
    %3120 = vmatprep.subr.mxu0 0.0
    %3121 = vmatpush2.msra.mxu0 0.0
    %3122 = vmatprep.subr.mxu0 0.0
    %3123 = vmatpush2.msra.mxu0 0.0
    %3124 = vmatprep.subr.mxu0 0.0
    %3125 = vmatpush2.msra.mxu0 0.0
    %3126 = vmatprep.subr.mxu0 0.0
    %3127 = vmatpush2.msra.mxu0 0.0
    %3128 = vmatprep.subr.mxu0 0.0
    %3129 = vmatpush2.msra.mxu0 0.0
    %3130 = vmatprep.subr.mxu0 0.0
    %3131 = vmatpush2.msra.mxu0 0.0
    %3132 = vmatprep.subr.mxu0 0.0
    %3133 = vmatpush2.msra.mxu0 0.0
    %3134 = vmatprep.mubr.f32.mxu0 0.0
    %3135 = vmatmul.mubr.f32.gmra.mxu0 %v2253
    %v3136 = vpop.f32.mrf.mxu0
    %v3137 = vadd.f32 0.0, %v3136
    %v3138 = vpop.f32.mrf.mxu0
    %3139 = vdwg.mxu0
    %v3140 = vadd.f32 %v3069, %v3137
    %v3141 = vxor.u32 %v3140, 2147483648
    %v3142 = vmul.f32 %v3141, 1.442695
    %v3143 = vpow.pop %v3142
    %v3144 = vadd.f32 %v3143, 1.0
    %v3145 = vrcp.pop %v3144
    %v3146 = vmul.f32 1.0, %v3145
    %v3147 = vtanh.pop %v3140
    %v3148 = vmul.f32 %v3146, %v2221
    %3150 = vrot.lane.b32.xlu0 %v3147, 64
    %v3151 = vpop.permute.xlu0 %3150
    %v3153 = vmul.f32 %v3146, %v3151
    %3155 = vrot.lane.b32.xlu0 %v3153, 32
    %v3156 = vpop.permute.xlu0 %3155
    %v3158 = vadd.f32 %v3148, %v3156
    %v3159 = vtanh.pop %v3158
    %3161 = vrot.lane.b32.xlu0 %v3159, 64
    %v3162 = vpop.permute.xlu0 %3161
    %v3164 = vmul.f32 %v3146, %v3162
    %v3167 = vunpack.c.l.s4 1966171168
    %v3168 = vunpack.c.0.s8 %v3167
    %v3169 = vlaneseq
    %v3170 = vshrl.u32 %v3169, 7
    %v3171 = vsub.s32 %v3168, %v3170
    %v3172 = vrot.slane %v3164, %v3171
    %v3173 = vcombine.high %v3172, %v3172
    %v3175 = vunpack.c.l.s4 1966171168
    %v3176 = vunpack.c.0.s8 %v3175
    %v3177 = vlaneseq
    %v3178 = vshrl.u32 %v3177, 7
    %v3179 = vsub.s32 %v3176, %v3178
    %v3180 = vrot.slane %v3172, %v3179
    %v3182 = vunpack.c.l.s4 1966171168
    %v3183 = vunpack.c.0.s8 %v3182
    %v3184 = vlaneseq
    %v3185 = vshrl.u32 %v3184, 7
    %v3186 = vsub.s32 %v3183, %v3185
    %v3187 = vrot.slane %v3173, %v3186
    %3188 = vrot.lane.b32.xlu0 %v3164, 32
    %v3189 = vpop.permute.xlu0 %3188
    %v3190 = vsel %vm142, %v3189, 0
    %3192 = vmatprep.subr.mxu0 0.0
    %3193 = vmatpush1.msra.mxu0 0.0
    %3194 = vmatprep.subr.mxu0 0.0
    %3195 = vmatpush1.msra.mxu0 0.0
    %3196 = vmatprep.subr.mxu0 0.0
    %3197 = vmatpush1.msra.mxu0 0.0
    %3198 = vmatprep.subr.mxu0 0.0
    %3199 = vmatpush1.msra.mxu0 0.0
    %3200 = vmatprep.subr.mxu0 0.0
    %3201 = vmatpush1.msra.mxu0 0.0
    %3202 = vmatprep.subr.mxu0 0.0
    %3203 = vmatpush1.msra.mxu0 0.0
    %3204 = vmatprep.subr.mxu0 0.0
    %3205 = vmatpush1.msra.mxu0 0.0
    %3206 = vmatprep.subr.mxu0 0.0
    %3207 = vmatpush1.msra.mxu0 0.0
    %3208 = vmatprep.subr.mxu0 0.0
    %3209 = vmatpush1.msra.mxu0 0.0
    %3210 = vmatprep.subr.mxu0 0.0
    %3211 = vmatpush1.msra.mxu0 0.0
    %3212 = vmatprep.subr.mxu0 0.0
    %3213 = vmatpush1.msra.mxu0 0.0
    %3214 = vmatprep.subr.mxu0 0.0
    %3215 = vmatpush1.msra.mxu0 0.0
    %3216 = vmatprep.subr.mxu0 0.0
    %3217 = vmatpush1.msra.mxu0 %v137
    %3218 = vmatprep.subr.mxu0 0.0
    %3219 = vmatpush1.msra.mxu0 %v136
    %3220 = vmatprep.subr.mxu0 0.0
    %3221 = vmatpush1.msra.mxu0 %v135
    %3222 = vmatprep.subr.mxu0 0.0
    %3223 = vmatpush1.msra.mxu0 %v134
    %3224 = vmatprep.subr.mxu0 0.0
    %3225 = vmatpush2.msra.mxu0 0.0
    %3226 = vmatprep.subr.mxu0 0.0
    %3227 = vmatpush2.msra.mxu0 0.0
    %3228 = vmatprep.subr.mxu0 0.0
    %3229 = vmatpush2.msra.mxu0 0.0
    %3230 = vmatprep.subr.mxu0 0.0
    %3231 = vmatpush2.msra.mxu0 0.0
    %3232 = vmatprep.subr.mxu0 0.0
    %3233 = vmatpush2.msra.mxu0 0.0
    %3234 = vmatprep.subr.mxu0 0.0
    %3235 = vmatpush2.msra.mxu0 0.0
    %3236 = vmatprep.subr.mxu0 0.0
    %3237 = vmatpush2.msra.mxu0 0.0
    %3238 = vmatprep.subr.mxu0 0.0
    %3239 = vmatpush2.msra.mxu0 0.0
    %3240 = vmatprep.subr.mxu0 0.0
    %3241 = vmatpush2.msra.mxu0 0.0
    %3242 = vmatprep.subr.mxu0 0.0
    %3243 = vmatpush2.msra.mxu0 0.0
    %3244 = vmatprep.subr.mxu0 0.0
    %3245 = vmatpush2.msra.mxu0 0.0
    %3246 = vmatprep.subr.mxu0 0.0
    %3247 = vmatpush2.msra.mxu0 0.0
    %3248 = vmatprep.subr.mxu0 0.0
    %3249 = vmatpush2.msra.mxu0 0.0
    %3250 = vmatprep.subr.mxu0 0.0
    %3251 = vmatpush2.msra.mxu0 0.0
    %3252 = vmatprep.subr.mxu0 0.0
    %3253 = vmatpush2.msra.mxu0 0.0
    %3254 = vmatprep.subr.mxu0 0.0
    %3255 = vmatpush2.msra.mxu0 0.0
    %3256 = vmatprep.mubr.f32.mxu0 0.0
    %3257 = vmatmul.mubr.f32.gmra.mxu0 %v3190
    %v3258 = vpop.f32.mrf.mxu0
    %v3259 = vadd.f32 0.0, %v3258
    %v3260 = vpop.f32.mrf.mxu0
    %3261 = vdwg.mxu0
    %v3262 = vlaneseq
    %v3263 = vshrl.u32 %v3262, 7
    %v3264 = vsub.s32 0, %v3263
    %v3265 = vrot.slane %v3180, %v3264
    %3266 = vrot.lane.b32.xlu0 %v3265, 32
    %v3267 = vpop.permute.xlu0 %3266
    %v3268 = vsel %vm142, %v3267, 0
    %3270 = vmatprep.subr.mxu0 0.0
    %3271 = vmatpush1.xpose.msra.mxu0 0.0
    %3272 = vmatprep.subr.mxu0 0.0
    %3273 = vmatpush1.xpose.msra.mxu0 0.0
    %3274 = vmatprep.subr.mxu0 0.0
    %3275 = vmatpush1.xpose.msra.mxu0 0.0
    %3276 = vmatprep.subr.mxu0 0.0
    %3277 = vmatpush1.xpose.msra.mxu0 0.0
    %3278 = vmatprep.subr.mxu0 0.0
    %3279 = vmatpush1.xpose.msra.mxu0 0.0
    %3280 = vmatprep.subr.mxu0 0.0
    %3281 = vmatpush1.xpose.msra.mxu0 0.0
    %3282 = vmatprep.subr.mxu0 0.0
    %3283 = vmatpush1.xpose.msra.mxu0 0.0
    %3284 = vmatprep.subr.mxu0 0.0
    %3285 = vmatpush1.xpose.msra.mxu0 0.0
    %3286 = vmatprep.subr.mxu0 0.0
    %3287 = vmatpush1.xpose.msra.mxu0 0.0
    %3288 = vmatprep.subr.mxu0 0.0
    %3289 = vmatpush1.xpose.msra.mxu0 0.0
    %3290 = vmatprep.subr.mxu0 0.0
    %3291 = vmatpush1.xpose.msra.mxu0 0.0
    %3292 = vmatprep.subr.mxu0 0.0
    %3293 = vmatpush1.xpose.msra.mxu0 0.0
    %3294 = vmatprep.subr.mxu0 0.0
    %3295 = vmatpush1.xpose.msra.mxu0 0.0
    %3296 = vmatprep.subr.mxu0 0.0
    %3297 = vmatpush1.xpose.msra.mxu0 0.0
    %3298 = vmatprep.subr.mxu0 0.0
    %3299 = vmatpush1.xpose.msra.mxu0 %v428
    %3300 = vmatprep.subr.mxu0 0.0
    %3301 = vmatpush1.xpose.msra.mxu0 %v425
    %3302 = vmatprep.subr.mxu0 0.0
    %3303 = vmatpush2.xpose.msra.mxu0 0.0
    %3304 = vmatprep.subr.mxu0 0.0
    %3305 = vmatpush2.xpose.msra.mxu0 0.0
    %3306 = vmatprep.subr.mxu0 0.0
    %3307 = vmatpush2.xpose.msra.mxu0 0.0
    %3308 = vmatprep.subr.mxu0 0.0
    %3309 = vmatpush2.xpose.msra.mxu0 0.0
    %3310 = vmatprep.subr.mxu0 0.0
    %3311 = vmatpush2.xpose.msra.mxu0 0.0
    %3312 = vmatprep.subr.mxu0 0.0
    %3313 = vmatpush2.xpose.msra.mxu0 0.0
    %3314 = vmatprep.subr.mxu0 0.0
    %3315 = vmatpush2.xpose.msra.mxu0 0.0
    %3316 = vmatprep.subr.mxu0 0.0
    %3317 = vmatpush2.xpose.msra.mxu0 0.0
    %3318 = vmatprep.subr.mxu0 0.0
    %3319 = vmatpush2.xpose.msra.mxu0 0.0
    %3320 = vmatprep.subr.mxu0 0.0
    %3321 = vmatpush2.xpose.msra.mxu0 0.0
    %3322 = vmatprep.subr.mxu0 0.0
    %3323 = vmatpush2.xpose.msra.mxu0 0.0
    %3324 = vmatprep.subr.mxu0 0.0
    %3325 = vmatpush2.xpose.msra.mxu0 0.0
    %3326 = vmatprep.subr.mxu0 0.0
    %3327 = vmatpush2.xpose.msra.mxu0 0.0
    %3328 = vmatprep.subr.mxu0 0.0
    %3329 = vmatpush2.xpose.msra.mxu0 0.0
    %3330 = vmatprep.subr.mxu0 0.0
    %3331 = vmatpush2.xpose.msra.mxu0 0.0
    %3332 = vmatprep.subr.mxu0 0.0
    %3333 = vmatpush2.xpose.msra.mxu0 0.0
    %3334 = vmatprep.mubr.f32.mxu0 0.0
    %3335 = vmatmul.mubr.f32.gmra.mxu0 %v3268
    %v3336 = vpop.f32.mrf.mxu0
    %v3337 = vadd.f32 %v90, %v3336
    %v3338 = vpop.f32.mrf.mxu0
    %3339 = vdwg.mxu0
    %v3340 = vlaneseq
    %v3341 = vshrl.u32 %v3340, 7
    %v3342 = vsub.s32 0, %v3341
    %v3343 = vrot.slane %v3187, %v3342
    %3344 = vrot.lane.b32.xlu0 %v3343, 32
    %v3345 = vpop.permute.xlu0 %3344
    %v3346 = vsel %vm142, %v3345, 0
    %3348 = vmatprep.subr.mxu0 0.0
    %3349 = vmatpush1.xpose.msra.mxu0 0.0
    %3350 = vmatprep.subr.mxu0 0.0
    %3351 = vmatpush1.xpose.msra.mxu0 0.0
    %3352 = vmatprep.subr.mxu0 0.0
    %3353 = vmatpush1.xpose.msra.mxu0 0.0
    %3354 = vmatprep.subr.mxu0 0.0
    %3355 = vmatpush1.xpose.msra.mxu0 0.0
    %3356 = vmatprep.subr.mxu0 0.0
    %3357 = vmatpush1.xpose.msra.mxu0 0.0
    %3358 = vmatprep.subr.mxu0 0.0
    %3359 = vmatpush1.xpose.msra.mxu0 0.0
    %3360 = vmatprep.subr.mxu0 0.0
    %3361 = vmatpush1.xpose.msra.mxu0 0.0
    %3362 = vmatprep.subr.mxu0 0.0
    %3363 = vmatpush1.xpose.msra.mxu0 0.0
    %3364 = vmatprep.subr.mxu0 0.0
    %3365 = vmatpush1.xpose.msra.mxu0 0.0
    %3366 = vmatprep.subr.mxu0 0.0
    %3367 = vmatpush1.xpose.msra.mxu0 0.0
    %3368 = vmatprep.subr.mxu0 0.0
    %3369 = vmatpush1.xpose.msra.mxu0 0.0
    %3370 = vmatprep.subr.mxu0 0.0
    %3371 = vmatpush1.xpose.msra.mxu0 0.0
    %3372 = vmatprep.subr.mxu0 0.0
    %3373 = vmatpush1.xpose.msra.mxu0 0.0
    %3374 = vmatprep.subr.mxu0 0.0
    %3375 = vmatpush1.xpose.msra.mxu0 0.0
    %3376 = vmatprep.subr.mxu0 0.0
    %3377 = vmatpush1.xpose.msra.mxu0 %v512
    %3378 = vmatprep.subr.mxu0 0.0
    %3379 = vmatpush1.xpose.msra.mxu0 %v509
    %3380 = vmatprep.subr.mxu0 0.0
    %3381 = vmatpush2.xpose.msra.mxu0 0.0
    %3382 = vmatprep.subr.mxu0 0.0
    %3383 = vmatpush2.xpose.msra.mxu0 0.0
    %3384 = vmatprep.subr.mxu0 0.0
    %3385 = vmatpush2.xpose.msra.mxu0 0.0
    %3386 = vmatprep.subr.mxu0 0.0
    %3387 = vmatpush2.xpose.msra.mxu0 0.0
    %3388 = vmatprep.subr.mxu0 0.0
    %3389 = vmatpush2.xpose.msra.mxu0 0.0
    %3390 = vmatprep.subr.mxu0 0.0
    %3391 = vmatpush2.xpose.msra.mxu0 0.0
    %3392 = vmatprep.subr.mxu0 0.0
    %3393 = vmatpush2.xpose.msra.mxu0 0.0
    %3394 = vmatprep.subr.mxu0 0.0
    %3395 = vmatpush2.xpose.msra.mxu0 0.0
    %3396 = vmatprep.subr.mxu0 0.0
    %3397 = vmatpush2.xpose.msra.mxu0 0.0
    %3398 = vmatprep.subr.mxu0 0.0
    %3399 = vmatpush2.xpose.msra.mxu0 0.0
    %3400 = vmatprep.subr.mxu0 0.0
    %3401 = vmatpush2.xpose.msra.mxu0 0.0
    %3402 = vmatprep.subr.mxu0 0.0
    %3403 = vmatpush2.xpose.msra.mxu0 0.0
    %3404 = vmatprep.subr.mxu0 0.0
    %3405 = vmatpush2.xpose.msra.mxu0 0.0
    %3406 = vmatprep.subr.mxu0 0.0
    %3407 = vmatpush2.xpose.msra.mxu0 0.0
    %3408 = vmatprep.subr.mxu0 0.0
    %3409 = vmatpush2.xpose.msra.mxu0 0.0
    %3410 = vmatprep.subr.mxu0 0.0
    %3411 = vmatpush2.xpose.msra.mxu0 0.0
    %3412 = vmatprep.mubr.f32.mxu0 0.0
    %3413 = vmatmul.mubr.f32.gmra.mxu0 %v3346
    %v3414 = vpop.f32.mrf.mxu0
    %v3415 = vadd.f32 %v97, %v3414
    %v3416 = vpop.f32.mrf.mxu0
    %3417 = vdwg.mxu0
    %v3418 = vsel %vm584, %v3337, -inf
    %3419 = vmax.xlane.f32.xlu0 %v3418
    %v3420 = vpop.xlane.xlu0 %3419
    %v3421 = vsel %vm584, %v3415, -inf
    %3422 = vmax.xlane.f32.xlu0 %v3421
    %v3423 = vpop.xlane.xlu0 %3422
    %v3424 = vsub.f32 %v3337, %v3420
    %v3425 = vsub.f32 %v3415, %v3423
    %v3426 = vmul.f32 %v3424, 1.442695
    %v3427 = vpow.pop %v3426
    %v3428 = vmul.f32 %v3425, 1.442695
    %v3429 = vpow.pop %v3428
    %v3430 = vsel %vm584, %v3427, 0.0
    %3431 = vadd.xlane.f32.xlu0 %v3430
    %v3432 = vpop.xlane.xlu0 %3431
    %v3433 = vsel %vm584, %v3429, 0.0
    %3434 = vadd.xlane.f32.xlu0 %v3433
    %v3435 = vpop.xlane.xlu0 %3434
    %v3436 = vrcp.pop %v3432
    %v3437 = vrcp.pop %v3435
    %v3438 = vmul.f32 %v3427, %v3436
    %v3439 = vmul.f32 %v3429, %v3437
    %v3441 = vsel %vm607, %v3438, 0
    %3443 = vmatprep.subr.mxu0 0.0
    %3444 = vmatpush1.msra.mxu0 0.0
    %3445 = vmatprep.subr.mxu0 0.0
    %3446 = vmatpush1.msra.mxu0 0.0
    %3447 = vmatprep.subr.mxu0 0.0
    %3448 = vmatpush1.msra.mxu0 0.0
    %3449 = vmatprep.subr.mxu0 0.0
    %3450 = vmatpush1.msra.mxu0 0.0
    %3451 = vmatprep.subr.mxu0 0.0
    %3452 = vmatpush1.msra.mxu0 0.0
    %3453 = vmatprep.subr.mxu0 0.0
    %3454 = vmatpush1.msra.mxu0 0.0
    %3455 = vmatprep.subr.mxu0 0.0
    %3456 = vmatpush1.msra.mxu0 0.0
    %3457 = vmatprep.subr.mxu0 0.0
    %3458 = vmatpush1.msra.mxu0 0.0
    %3459 = vmatprep.subr.mxu0 0.0
    %3460 = vmatpush1.msra.mxu0 0.0
    %3461 = vmatprep.subr.mxu0 0.0
    %3462 = vmatpush1.msra.mxu0 0.0
    %3463 = vmatprep.subr.mxu0 0.0
    %3464 = vmatpush1.msra.mxu0 0.0
    %3465 = vmatprep.subr.mxu0 0.0
    %3466 = vmatpush1.msra.mxu0 0.0
    %3467 = vmatprep.subr.mxu0 0.0
    %3468 = vmatpush1.msra.mxu0 0.0
    %3469 = vmatprep.subr.mxu0 0.0
    %3470 = vmatpush1.msra.mxu0 0.0
    %3471 = vmatprep.subr.mxu0 0.0
    %3472 = vmatpush1.msra.mxu0 %v613
    %3473 = vmatprep.subr.mxu0 0.0
    %3474 = vmatpush1.msra.mxu0 %v66
    %3475 = vmatprep.subr.mxu0 0.0
    %3476 = vmatpush2.msra.mxu0 0.0
    %3477 = vmatprep.subr.mxu0 0.0
    %3478 = vmatpush2.msra.mxu0 0.0
    %3479 = vmatprep.subr.mxu0 0.0
    %3480 = vmatpush2.msra.mxu0 0.0
    %3481 = vmatprep.subr.mxu0 0.0
    %3482 = vmatpush2.msra.mxu0 0.0
    %3483 = vmatprep.subr.mxu0 0.0
    %3484 = vmatpush2.msra.mxu0 0.0
    %3485 = vmatprep.subr.mxu0 0.0
    %3486 = vmatpush2.msra.mxu0 0.0
    %3487 = vmatprep.subr.mxu0 0.0
    %3488 = vmatpush2.msra.mxu0 0.0
    %3489 = vmatprep.subr.mxu0 0.0
    %3490 = vmatpush2.msra.mxu0 0.0
    %3491 = vmatprep.subr.mxu0 0.0
    %3492 = vmatpush2.msra.mxu0 0.0
    %3493 = vmatprep.subr.mxu0 0.0
    %3494 = vmatpush2.msra.mxu0 0.0
    %3495 = vmatprep.subr.mxu0 0.0
    %3496 = vmatpush2.msra.mxu0 0.0
    %3497 = vmatprep.subr.mxu0 0.0
    %3498 = vmatpush2.msra.mxu0 0.0
    %3499 = vmatprep.subr.mxu0 0.0
    %3500 = vmatpush2.msra.mxu0 0.0
    %3501 = vmatprep.subr.mxu0 0.0
    %3502 = vmatpush2.msra.mxu0 0.0
    %3503 = vmatprep.subr.mxu0 0.0
    %3504 = vmatpush2.msra.mxu0 0.0
    %3505 = vmatprep.subr.mxu0 0.0
    %3506 = vmatpush2.msra.mxu0 0.0
    %3507 = vmatprep.mubr.f32.mxu0 0.0
    %3508 = vmatmul.mubr.f32.gmra.mxu0 %v3441
    %v3509 = vpop.f32.mrf.mxu0
    %v3510 = vadd.f32 0.0, %v3509
    %v3511 = vpop.f32.mrf.mxu0
    %3512 = vdwg.mxu0
    %v3514 = vsel %vm607, %v3439, 0
    %3516 = vmatprep.subr.mxu0 0.0
    %3517 = vmatpush1.msra.mxu0 0.0
    %3518 = vmatprep.subr.mxu0 0.0
    %3519 = vmatpush1.msra.mxu0 0.0
    %3520 = vmatprep.subr.mxu0 0.0
    %3521 = vmatpush1.msra.mxu0 0.0
    %3522 = vmatprep.subr.mxu0 0.0
    %3523 = vmatpush1.msra.mxu0 0.0
    %3524 = vmatprep.subr.mxu0 0.0
    %3525 = vmatpush1.msra.mxu0 0.0
    %3526 = vmatprep.subr.mxu0 0.0
    %3527 = vmatpush1.msra.mxu0 0.0
    %3528 = vmatprep.subr.mxu0 0.0
    %3529 = vmatpush1.msra.mxu0 0.0
    %3530 = vmatprep.subr.mxu0 0.0
    %3531 = vmatpush1.msra.mxu0 0.0
    %3532 = vmatprep.subr.mxu0 0.0
    %3533 = vmatpush1.msra.mxu0 0.0
    %3534 = vmatprep.subr.mxu0 0.0
    %3535 = vmatpush1.msra.mxu0 0.0
    %3536 = vmatprep.subr.mxu0 0.0
    %3537 = vmatpush1.msra.mxu0 0.0
    %3538 = vmatprep.subr.mxu0 0.0
    %3539 = vmatpush1.msra.mxu0 0.0
    %3540 = vmatprep.subr.mxu0 0.0
    %3541 = vmatpush1.msra.mxu0 0.0
    %3542 = vmatprep.subr.mxu0 0.0
    %3543 = vmatpush1.msra.mxu0 0.0
    %3544 = vmatprep.subr.mxu0 0.0
    %3545 = vmatpush1.msra.mxu0 %v689
    %3546 = vmatprep.subr.mxu0 0.0
    %3547 = vmatpush1.msra.mxu0 %v68
    %3548 = vmatprep.subr.mxu0 0.0
    %3549 = vmatpush2.msra.mxu0 0.0
    %3550 = vmatprep.subr.mxu0 0.0
    %3551 = vmatpush2.msra.mxu0 0.0
    %3552 = vmatprep.subr.mxu0 0.0
    %3553 = vmatpush2.msra.mxu0 0.0
    %3554 = vmatprep.subr.mxu0 0.0
    %3555 = vmatpush2.msra.mxu0 0.0
    %3556 = vmatprep.subr.mxu0 0.0
    %3557 = vmatpush2.msra.mxu0 0.0
    %3558 = vmatprep.subr.mxu0 0.0
    %3559 = vmatpush2.msra.mxu0 0.0
    %3560 = vmatprep.subr.mxu0 0.0
    %3561 = vmatpush2.msra.mxu0 0.0
    %3562 = vmatprep.subr.mxu0 0.0
    %3563 = vmatpush2.msra.mxu0 0.0
    %3564 = vmatprep.subr.mxu0 0.0
    %3565 = vmatpush2.msra.mxu0 0.0
    %3566 = vmatprep.subr.mxu0 0.0
    %3567 = vmatpush2.msra.mxu0 0.0
    %3568 = vmatprep.subr.mxu0 0.0
    %3569 = vmatpush2.msra.mxu0 0.0
    %3570 = vmatprep.subr.mxu0 0.0
    %3571 = vmatpush2.msra.mxu0 0.0
    %3572 = vmatprep.subr.mxu0 0.0
    %3573 = vmatpush2.msra.mxu0 0.0
    %3574 = vmatprep.subr.mxu0 0.0
    %3575 = vmatpush2.msra.mxu0 0.0
    %3576 = vmatprep.subr.mxu0 0.0
    %3577 = vmatpush2.msra.mxu0 0.0
    %3578 = vmatprep.subr.mxu0 0.0
    %3579 = vmatpush2.msra.mxu0 0.0
    %3580 = vmatprep.mubr.f32.mxu0 0.0
    %3581 = vmatmul.mubr.f32.gmra.mxu0 %v3514
    %v3582 = vpop.f32.mrf.mxu0
    %v3583 = vadd.f32 0.0, %v3582
    %v3584 = vpop.f32.mrf.mxu0
    %3585 = vdwg.mxu0
    %3586 = vmatprep.subr.mxu0 0.0
    %3587 = vmatpush1.xpose.msra.mxu0 0.0
    %3588 = vmatprep.subr.mxu0 0.0
    %3589 = vmatpush1.xpose.msra.mxu0 0.0
    %3590 = vmatprep.subr.mxu0 0.0
    %3591 = vmatpush1.xpose.msra.mxu0 0.0
    %3592 = vmatprep.subr.mxu0 0.0
    %3593 = vmatpush1.xpose.msra.mxu0 0.0
    %3594 = vmatprep.subr.mxu0 0.0
    %3595 = vmatpush1.xpose.msra.mxu0 0.0
    %3596 = vmatprep.subr.mxu0 0.0
    %3597 = vmatpush1.xpose.msra.mxu0 0.0
    %3598 = vmatprep.subr.mxu0 0.0
    %3599 = vmatpush1.xpose.msra.mxu0 0.0
    %3600 = vmatprep.subr.mxu0 0.0
    %3601 = vmatpush1.xpose.msra.mxu0 0.0
    %3602 = vmatprep.subr.mxu0 0.0
    %3603 = vmatpush1.xpose.msra.mxu0 0.0
    %3604 = vmatprep.subr.mxu0 0.0
    %3605 = vmatpush1.xpose.msra.mxu0 0.0
    %3606 = vmatprep.subr.mxu0 0.0
    %3607 = vmatpush1.xpose.msra.mxu0 0.0
    %3608 = vmatprep.subr.mxu0 0.0
    %3609 = vmatpush1.xpose.msra.mxu0 0.0
    %3610 = vmatprep.subr.mxu0 0.0
    %3611 = vmatpush1.xpose.msra.mxu0 0.0
    %3612 = vmatprep.subr.mxu0 0.0
    %3613 = vmatpush1.xpose.msra.mxu0 0.0
    %3614 = vmatprep.subr.mxu0 0.0
    %3615 = vmatpush1.xpose.msra.mxu0 0.0
    %3616 = vmatprep.subr.mxu0 0.0
    %3617 = vmatpush1.xpose.msra.mxu0 %v762
    %3618 = vmatprep.subr.mxu0 0.0
    %3619 = vmatpush2.xpose.msra.mxu0 0.0
    %3620 = vmatprep.subr.mxu0 0.0
    %3621 = vmatpush2.xpose.msra.mxu0 0.0
    %3622 = vmatprep.subr.mxu0 0.0
    %3623 = vmatpush2.xpose.msra.mxu0 0.0
    %3624 = vmatprep.subr.mxu0 0.0
    %3625 = vmatpush2.xpose.msra.mxu0 0.0
    %3626 = vmatprep.subr.mxu0 0.0
    %3627 = vmatpush2.xpose.msra.mxu0 0.0
    %3628 = vmatprep.subr.mxu0 0.0
    %3629 = vmatpush2.xpose.msra.mxu0 0.0
    %3630 = vmatprep.subr.mxu0 0.0
    %3631 = vmatpush2.xpose.msra.mxu0 0.0
    %3632 = vmatprep.subr.mxu0 0.0
    %3633 = vmatpush2.xpose.msra.mxu0 0.0
    %3634 = vmatprep.subr.mxu0 0.0
    %3635 = vmatpush2.xpose.msra.mxu0 0.0
    %3636 = vmatprep.subr.mxu0 0.0
    %3637 = vmatpush2.xpose.msra.mxu0 0.0
    %3638 = vmatprep.subr.mxu0 0.0
    %3639 = vmatpush2.xpose.msra.mxu0 0.0
    %3640 = vmatprep.subr.mxu0 0.0
    %3641 = vmatpush2.xpose.msra.mxu0 0.0
    %3642 = vmatprep.subr.mxu0 0.0
    %3643 = vmatpush2.xpose.msra.mxu0 0.0
    %3644 = vmatprep.subr.mxu0 0.0
    %3645 = vmatpush2.xpose.msra.mxu0 0.0
    %3646 = vmatprep.subr.mxu0 0.0
    %3647 = vmatpush2.xpose.msra.mxu0 0.0
    %3648 = vmatprep.subr.mxu0 0.0
    %3649 = vmatpush2.xpose.msra.mxu0 0.0
    %3650 = vmatprep.mubr.f32.mxu0 0.0
    %3651 = vmatmul.mubr.f32.gmra.mxu0 %v3268
    %v3652 = vpop.f32.mrf.mxu0
    %v3653 = vadd.f32 %v116, %v3652
    %v3654 = vpop.f32.mrf.mxu0
    %3655 = vdwg.mxu0
    %3656 = vmatprep.subr.mxu0 0.0
    %3657 = vmatpush1.xpose.msra.mxu0 0.0
    %3658 = vmatprep.subr.mxu0 0.0
    %3659 = vmatpush1.xpose.msra.mxu0 0.0
    %3660 = vmatprep.subr.mxu0 0.0
    %3661 = vmatpush1.xpose.msra.mxu0 0.0
    %3662 = vmatprep.subr.mxu0 0.0
    %3663 = vmatpush1.xpose.msra.mxu0 0.0
    %3664 = vmatprep.subr.mxu0 0.0
    %3665 = vmatpush1.xpose.msra.mxu0 0.0
    %3666 = vmatprep.subr.mxu0 0.0
    %3667 = vmatpush1.xpose.msra.mxu0 0.0
    %3668 = vmatprep.subr.mxu0 0.0
    %3669 = vmatpush1.xpose.msra.mxu0 0.0
    %3670 = vmatprep.subr.mxu0 0.0
    %3671 = vmatpush1.xpose.msra.mxu0 0.0
    %3672 = vmatprep.subr.mxu0 0.0
    %3673 = vmatpush1.xpose.msra.mxu0 0.0
    %3674 = vmatprep.subr.mxu0 0.0
    %3675 = vmatpush1.xpose.msra.mxu0 0.0
    %3676 = vmatprep.subr.mxu0 0.0
    %3677 = vmatpush1.xpose.msra.mxu0 0.0
    %3678 = vmatprep.subr.mxu0 0.0
    %3679 = vmatpush1.xpose.msra.mxu0 0.0
    %3680 = vmatprep.subr.mxu0 0.0
    %3681 = vmatpush1.xpose.msra.mxu0 0.0
    %3682 = vmatprep.subr.mxu0 0.0
    %3683 = vmatpush1.xpose.msra.mxu0 0.0
    %3684 = vmatprep.subr.mxu0 0.0
    %3685 = vmatpush1.xpose.msra.mxu0 0.0
    %3686 = vmatprep.subr.mxu0 0.0
    %3687 = vmatpush1.xpose.msra.mxu0 %v835
    %3688 = vmatprep.subr.mxu0 0.0
    %3689 = vmatpush2.xpose.msra.mxu0 0.0
    %3690 = vmatprep.subr.mxu0 0.0
    %3691 = vmatpush2.xpose.msra.mxu0 0.0
    %3692 = vmatprep.subr.mxu0 0.0
    %3693 = vmatpush2.xpose.msra.mxu0 0.0
    %3694 = vmatprep.subr.mxu0 0.0
    %3695 = vmatpush2.xpose.msra.mxu0 0.0
    %3696 = vmatprep.subr.mxu0 0.0
    %3697 = vmatpush2.xpose.msra.mxu0 0.0
    %3698 = vmatprep.subr.mxu0 0.0
    %3699 = vmatpush2.xpose.msra.mxu0 0.0
    %3700 = vmatprep.subr.mxu0 0.0
    %3701 = vmatpush2.xpose.msra.mxu0 0.0
    %3702 = vmatprep.subr.mxu0 0.0
    %3703 = vmatpush2.xpose.msra.mxu0 0.0
    %3704 = vmatprep.subr.mxu0 0.0
    %3705 = vmatpush2.xpose.msra.mxu0 0.0
    %3706 = vmatprep.subr.mxu0 0.0
    %3707 = vmatpush2.xpose.msra.mxu0 0.0
    %3708 = vmatprep.subr.mxu0 0.0
    %3709 = vmatpush2.xpose.msra.mxu0 0.0
    %3710 = vmatprep.subr.mxu0 0.0
    %3711 = vmatpush2.xpose.msra.mxu0 0.0
    %3712 = vmatprep.subr.mxu0 0.0
    %3713 = vmatpush2.xpose.msra.mxu0 0.0
    %3714 = vmatprep.subr.mxu0 0.0
    %3715 = vmatpush2.xpose.msra.mxu0 0.0
    %3716 = vmatprep.subr.mxu0 0.0
    %3717 = vmatpush2.xpose.msra.mxu0 0.0
    %3718 = vmatprep.subr.mxu0 0.0
    %3719 = vmatpush2.xpose.msra.mxu0 0.0
    %3720 = vmatprep.mubr.f32.mxu0 0.0
    %3721 = vmatmul.mubr.f32.gmra.mxu0 %v3346
    %v3722 = vpop.f32.mrf.mxu0
    %v3723 = vadd.f32 %v123, %v3722
    %v3724 = vpop.f32.mrf.mxu0
    %3725 = vdwg.mxu0
    %v3726 = vsel %vm907, %v3653, -inf
    %3727 = vmax.xlane.f32.xlu0 %v3726
    %v3728 = vpop.xlane.xlu0 %3727
    %v3729 = vsel %vm907, %v3723, -inf
    %3730 = vmax.xlane.f32.xlu0 %v3729
    %v3731 = vpop.xlane.xlu0 %3730
    %v3732 = vsub.f32 %v3653, %v3728
    %v3733 = vsub.f32 %v3723, %v3731
    %v3734 = vmul.f32 %v3732, 1.442695
    %v3735 = vpow.pop %v3734
    %v3736 = vmul.f32 %v3733, 1.442695
    %v3737 = vpow.pop %v3736
    %v3738 = vsel %vm907, %v3735, 0.0
    %3739 = vadd.xlane.f32.xlu0 %v3738
    %v3740 = vpop.xlane.xlu0 %3739
    %v3741 = vsel %vm907, %v3737, 0.0
    %3742 = vadd.xlane.f32.xlu0 %v3741
    %v3743 = vpop.xlane.xlu0 %3742
    %v3744 = vrcp.pop %v3740
    %v3745 = vrcp.pop %v3743
    %v3746 = vmul.f32 %v3735, %v3744
    %v3747 = vmul.f32 %v3737, %v3745
    %v3749 = vsel %vm930, %v3746, 0
    %3751 = vmatprep.subr.mxu0 0.0
    %3752 = vmatpush1.msra.mxu0 0.0
    %3753 = vmatprep.subr.mxu0 0.0
    %3754 = vmatpush1.msra.mxu0 0.0
    %3755 = vmatprep.subr.mxu0 0.0
    %3756 = vmatpush1.msra.mxu0 0.0
    %3757 = vmatprep.subr.mxu0 0.0
    %3758 = vmatpush1.msra.mxu0 0.0
    %3759 = vmatprep.subr.mxu0 0.0
    %3760 = vmatpush1.msra.mxu0 0.0
    %3761 = vmatprep.subr.mxu0 0.0
    %3762 = vmatpush1.msra.mxu0 0.0
    %3763 = vmatprep.subr.mxu0 0.0
    %3764 = vmatpush1.msra.mxu0 0.0
    %3765 = vmatprep.subr.mxu0 0.0
    %3766 = vmatpush1.msra.mxu0 0.0
    %3767 = vmatprep.subr.mxu0 0.0
    %3768 = vmatpush1.msra.mxu0 0.0
    %3769 = vmatprep.subr.mxu0 0.0
    %3770 = vmatpush1.msra.mxu0 0.0
    %3771 = vmatprep.subr.mxu0 0.0
    %3772 = vmatpush1.msra.mxu0 0.0
    %3773 = vmatprep.subr.mxu0 0.0
    %3774 = vmatpush1.msra.mxu0 0.0
    %3775 = vmatprep.subr.mxu0 0.0
    %3776 = vmatpush1.msra.mxu0 0.0
    %3777 = vmatprep.subr.mxu0 0.0
    %3778 = vmatpush1.msra.mxu0 0.0
    %3779 = vmatprep.subr.mxu0 0.0
    %3780 = vmatpush1.msra.mxu0 0.0
    %3781 = vmatprep.subr.mxu0 0.0
    %3782 = vmatpush1.msra.mxu0 %v936
    %3783 = vmatprep.subr.mxu0 0.0
    %3784 = vmatpush2.msra.mxu0 0.0
    %3785 = vmatprep.subr.mxu0 0.0
    %3786 = vmatpush2.msra.mxu0 0.0
    %3787 = vmatprep.subr.mxu0 0.0
    %3788 = vmatpush2.msra.mxu0 0.0
    %3789 = vmatprep.subr.mxu0 0.0
    %3790 = vmatpush2.msra.mxu0 0.0
    %3791 = vmatprep.subr.mxu0 0.0
    %3792 = vmatpush2.msra.mxu0 0.0
    %3793 = vmatprep.subr.mxu0 0.0
    %3794 = vmatpush2.msra.mxu0 0.0
    %3795 = vmatprep.subr.mxu0 0.0
    %3796 = vmatpush2.msra.mxu0 0.0
    %3797 = vmatprep.subr.mxu0 0.0
    %3798 = vmatpush2.msra.mxu0 0.0
    %3799 = vmatprep.subr.mxu0 0.0
    %3800 = vmatpush2.msra.mxu0 0.0
    %3801 = vmatprep.subr.mxu0 0.0
    %3802 = vmatpush2.msra.mxu0 0.0
    %3803 = vmatprep.subr.mxu0 0.0
    %3804 = vmatpush2.msra.mxu0 0.0
    %3805 = vmatprep.subr.mxu0 0.0
    %3806 = vmatpush2.msra.mxu0 0.0
    %3807 = vmatprep.subr.mxu0 0.0
    %3808 = vmatpush2.msra.mxu0 0.0
    %3809 = vmatprep.subr.mxu0 0.0
    %3810 = vmatpush2.msra.mxu0 0.0
    %3811 = vmatprep.subr.mxu0 0.0
    %3812 = vmatpush2.msra.mxu0 0.0
    %3813 = vmatprep.subr.mxu0 0.0
    %3814 = vmatpush2.msra.mxu0 0.0
    %3815 = vmatprep.mubr.f32.mxu0 0.0
    %3816 = vmatmul.mubr.f32.gmra.mxu0 %v3749
    %v3817 = vpop.f32.mrf.mxu0
    %v3818 = vadd.f32 0.0, %v3817
    %v3819 = vpop.f32.mrf.mxu0
    %3820 = vdwg.mxu0
    %v3822 = vsel %vm930, %v3747, 0
    %3824 = vmatprep.subr.mxu0 0.0
    %3825 = vmatpush1.msra.mxu0 0.0
    %3826 = vmatprep.subr.mxu0 0.0
    %3827 = vmatpush1.msra.mxu0 0.0
    %3828 = vmatprep.subr.mxu0 0.0
    %3829 = vmatpush1.msra.mxu0 0.0
    %3830 = vmatprep.subr.mxu0 0.0
    %3831 = vmatpush1.msra.mxu0 0.0
    %3832 = vmatprep.subr.mxu0 0.0
    %3833 = vmatpush1.msra.mxu0 0.0
    %3834 = vmatprep.subr.mxu0 0.0
    %3835 = vmatpush1.msra.mxu0 0.0
    %3836 = vmatprep.subr.mxu0 0.0
    %3837 = vmatpush1.msra.mxu0 0.0
    %3838 = vmatprep.subr.mxu0 0.0
    %3839 = vmatpush1.msra.mxu0 0.0
    %3840 = vmatprep.subr.mxu0 0.0
    %3841 = vmatpush1.msra.mxu0 0.0
    %3842 = vmatprep.subr.mxu0 0.0
    %3843 = vmatpush1.msra.mxu0 0.0
    %3844 = vmatprep.subr.mxu0 0.0
    %3845 = vmatpush1.msra.mxu0 0.0
    %3846 = vmatprep.subr.mxu0 0.0
    %3847 = vmatpush1.msra.mxu0 0.0
    %3848 = vmatprep.subr.mxu0 0.0
    %3849 = vmatpush1.msra.mxu0 0.0
    %3850 = vmatprep.subr.mxu0 0.0
    %3851 = vmatpush1.msra.mxu0 0.0
    %3852 = vmatprep.subr.mxu0 0.0
    %3853 = vmatpush1.msra.mxu0 0.0
    %3854 = vmatprep.subr.mxu0 0.0
    %3855 = vmatpush1.msra.mxu0 %v1012
    %3856 = vmatprep.subr.mxu0 0.0
    %3857 = vmatpush2.msra.mxu0 0.0
    %3858 = vmatprep.subr.mxu0 0.0
    %3859 = vmatpush2.msra.mxu0 0.0
    %3860 = vmatprep.subr.mxu0 0.0
    %3861 = vmatpush2.msra.mxu0 0.0
    %3862 = vmatprep.subr.mxu0 0.0
    %3863 = vmatpush2.msra.mxu0 0.0
    %3864 = vmatprep.subr.mxu0 0.0
    %3865 = vmatpush2.msra.mxu0 0.0
    %3866 = vmatprep.subr.mxu0 0.0
    %3867 = vmatpush2.msra.mxu0 0.0
    %3868 = vmatprep.subr.mxu0 0.0
    %3869 = vmatpush2.msra.mxu0 0.0
    %3870 = vmatprep.subr.mxu0 0.0
    %3871 = vmatpush2.msra.mxu0 0.0
    %3872 = vmatprep.subr.mxu0 0.0
    %3873 = vmatpush2.msra.mxu0 0.0
    %3874 = vmatprep.subr.mxu0 0.0
    %3875 = vmatpush2.msra.mxu0 0.0
    %3876 = vmatprep.subr.mxu0 0.0
    %3877 = vmatpush2.msra.mxu0 0.0
    %3878 = vmatprep.subr.mxu0 0.0
    %3879 = vmatpush2.msra.mxu0 0.0
    %3880 = vmatprep.subr.mxu0 0.0
    %3881 = vmatpush2.msra.mxu0 0.0
    %3882 = vmatprep.subr.mxu0 0.0
    %3883 = vmatpush2.msra.mxu0 0.0
    %3884 = vmatprep.subr.mxu0 0.0
    %3885 = vmatpush2.msra.mxu0 0.0
    %3886 = vmatprep.subr.mxu0 0.0
    %3887 = vmatpush2.msra.mxu0 0.0
    %3888 = vmatprep.mubr.f32.mxu0 0.0
    %3889 = vmatmul.mubr.f32.gmra.mxu0 %v3822
    %v3890 = vpop.f32.mrf.mxu0
    %v3891 = vadd.f32 0.0, %v3890
    %v3892 = vpop.f32.mrf.mxu0
    %3893 = vdwg.mxu0
    %v3896 = vrot.slane %v3583, 7
    %v3897 = vsel %vm1087, %v3896, %v3510
    %v3899 = vadd.f32 %v3259, %v3897
    %v3900 = vtanh.pop %v3899
    %v3903 = vrot.slane %v3891, 7
    %v3904 = vsel %vm1087, %v3903, %v3818
    %3905 = vrot.lane.b32.xlu0 %v3904, 32
    %v3906 = vpop.permute.xlu0 %3905
    %v3908 = vadd.f32 %v3259, %v3906
    %v3909 = vtanh.pop %v3908
    %s3911 = scalar_lea.vmem [#allocation5], 6
    %3912 = vst.msk [vmem:[%s3911] sm:$0x3] %vm1102, %v3189
    %s3913 = scalar_lea.vmem [#allocation7], 6
    %3914 = vst.msk [vmem:[%s3913] sm:$0x3] %vm1102, %v3900
    %3916 = vrot.lane.b32.xlu0 %v3909, 96
    %v3917 = vpop.permute.xlu0 %3916
    %s3919 = scalar_lea.vmem [#allocation9], 6
    %3920 = vst.msk [vmem:[%s3919] sm:$0x3] %vm1102, %v3917
    %v3921 = vrot.slane %v3439, 7
    %v3922 = vsel %vm1087, %v3921, %v3438
    %s3924 = scalar_lea.vmem [#allocation10], 6
    %3925 = vst.msk [vmem:[%s3924] sm:$0x3] %vm1113, %v3922
    %v3926 = vrot.slane %v3747, 7
    %v3927 = vsel %vm1087, %v3926, %v3746
    %s3929 = scalar_lea.vmem [#allocation12], 6
    %3930 = vst.msk [vmem:[%s3929] sm:$0x3] %vm1118, %v3927
    %s3931 = scalar_lea.vmem %s0, 8
    %v3932 = vld [vmem:[%s3931] sm:$0x3]
    %v3934 = vsel %vm142, %v3900, 0
    %3936 = vmatprep.subr.mxu0 0.0
    %3937 = vmatpush1.msra.mxu0 0.0
    %3938 = vmatprep.subr.mxu0 0.0
    %3939 = vmatpush1.msra.mxu0 0.0
    %3940 = vmatprep.subr.mxu0 0.0
    %3941 = vmatpush1.msra.mxu0 0.0
    %3942 = vmatprep.subr.mxu0 0.0
    %3943 = vmatpush1.msra.mxu0 0.0
    %3944 = vmatprep.subr.mxu0 0.0
    %3945 = vmatpush1.msra.mxu0 0.0
    %3946 = vmatprep.subr.mxu0 0.0
    %3947 = vmatpush1.msra.mxu0 0.0
    %3948 = vmatprep.subr.mxu0 0.0
    %3949 = vmatpush1.msra.mxu0 0.0
    %3950 = vmatprep.subr.mxu0 0.0
    %3951 = vmatpush1.msra.mxu0 0.0
    %3952 = vmatprep.subr.mxu0 0.0
    %3953 = vmatpush1.msra.mxu0 0.0
    %3954 = vmatprep.subr.mxu0 0.0
    %3955 = vmatpush1.msra.mxu0 0.0
    %3956 = vmatprep.subr.mxu0 0.0
    %3957 = vmatpush1.msra.mxu0 0.0
    %3958 = vmatprep.subr.mxu0 0.0
    %3959 = vmatpush1.msra.mxu0 0.0
    %3960 = vmatprep.subr.mxu0 0.0
    %3961 = vmatpush1.msra.mxu0 %v129
    %3962 = vmatprep.subr.mxu0 0.0
    %3963 = vmatpush1.msra.mxu0 %v128
    %3964 = vmatprep.subr.mxu0 0.0
    %3965 = vmatpush1.msra.mxu0 %v127
    %3966 = vmatprep.subr.mxu0 0.0
    %3967 = vmatpush1.msra.mxu0 %v126
    %3968 = vmatprep.subr.mxu0 0.0
    %3969 = vmatpush2.msra.mxu0 0.0
    %3970 = vmatprep.subr.mxu0 0.0
    %3971 = vmatpush2.msra.mxu0 0.0
    %3972 = vmatprep.subr.mxu0 0.0
    %3973 = vmatpush2.msra.mxu0 0.0
    %3974 = vmatprep.subr.mxu0 0.0
    %3975 = vmatpush2.msra.mxu0 0.0
    %3976 = vmatprep.subr.mxu0 0.0
    %3977 = vmatpush2.msra.mxu0 0.0
    %3978 = vmatprep.subr.mxu0 0.0
    %3979 = vmatpush2.msra.mxu0 0.0
    %3980 = vmatprep.subr.mxu0 0.0
    %3981 = vmatpush2.msra.mxu0 0.0
    %3982 = vmatprep.subr.mxu0 0.0
    %3983 = vmatpush2.msra.mxu0 0.0
    %3984 = vmatprep.subr.mxu0 0.0
    %3985 = vmatpush2.msra.mxu0 0.0
    %3986 = vmatprep.subr.mxu0 0.0
    %3987 = vmatpush2.msra.mxu0 0.0
    %3988 = vmatprep.subr.mxu0 0.0
    %3989 = vmatpush2.msra.mxu0 0.0
    %3990 = vmatprep.subr.mxu0 0.0
    %3991 = vmatpush2.msra.mxu0 0.0
    %3992 = vmatprep.subr.mxu0 0.0
    %3993 = vmatpush2.msra.mxu0 0.0
    %3994 = vmatprep.subr.mxu0 0.0
    %3995 = vmatpush2.msra.mxu0 0.0
    %3996 = vmatprep.subr.mxu0 0.0
    %3997 = vmatpush2.msra.mxu0 0.0
    %3998 = vmatprep.subr.mxu0 0.0
    %3999 = vmatpush2.msra.mxu0 0.0
    %4000 = vmatprep.mubr.f32.mxu0 0.0
    %4001 = vmatmul.mubr.f32.gmra.mxu0 %v3934
    %v4002 = vpop.f32.mrf.mxu0
    %v4003 = vadd.f32 0.0, %v4002
    %v4004 = vpop.f32.mrf.mxu0
    %4005 = vdwg.mxu0
    %v4006 = vadd.f32 %v3932, %v4003
    %4007 = vmatprep.subr.mxu0 0.0
    %4008 = vmatpush1.msra.mxu0 0.0
    %4009 = vmatprep.subr.mxu0 0.0
    %4010 = vmatpush1.msra.mxu0 0.0
    %4011 = vmatprep.subr.mxu0 0.0
    %4012 = vmatpush1.msra.mxu0 0.0
    %4013 = vmatprep.subr.mxu0 0.0
    %4014 = vmatpush1.msra.mxu0 0.0
    %4015 = vmatprep.subr.mxu0 0.0
    %4016 = vmatpush1.msra.mxu0 0.0
    %4017 = vmatprep.subr.mxu0 0.0
    %4018 = vmatpush1.msra.mxu0 0.0
    %4019 = vmatprep.subr.mxu0 0.0
    %4020 = vmatpush1.msra.mxu0 0.0
    %4021 = vmatprep.subr.mxu0 0.0
    %4022 = vmatpush1.msra.mxu0 0.0
    %4023 = vmatprep.subr.mxu0 0.0
    %4024 = vmatpush1.msra.mxu0 0.0
    %4025 = vmatprep.subr.mxu0 0.0
    %4026 = vmatpush1.msra.mxu0 0.0
    %4027 = vmatprep.subr.mxu0 0.0
    %4028 = vmatpush1.msra.mxu0 0.0
    %4029 = vmatprep.subr.mxu0 0.0
    %4030 = vmatpush1.msra.mxu0 0.0
    %4031 = vmatprep.subr.mxu0 0.0
    %4032 = vmatpush1.msra.mxu0 %v133
    %4033 = vmatprep.subr.mxu0 0.0
    %4034 = vmatpush1.msra.mxu0 %v132
    %4035 = vmatprep.subr.mxu0 0.0
    %4036 = vmatpush1.msra.mxu0 %v131
    %4037 = vmatprep.subr.mxu0 0.0
    %4038 = vmatpush1.msra.mxu0 %v130
    %4039 = vmatprep.subr.mxu0 0.0
    %4040 = vmatpush2.msra.mxu0 0.0
    %4041 = vmatprep.subr.mxu0 0.0
    %4042 = vmatpush2.msra.mxu0 0.0
    %4043 = vmatprep.subr.mxu0 0.0
    %4044 = vmatpush2.msra.mxu0 0.0
    %4045 = vmatprep.subr.mxu0 0.0
    %4046 = vmatpush2.msra.mxu0 0.0
    %4047 = vmatprep.subr.mxu0 0.0
    %4048 = vmatpush2.msra.mxu0 0.0
    %4049 = vmatprep.subr.mxu0 0.0
    %4050 = vmatpush2.msra.mxu0 0.0
    %4051 = vmatprep.subr.mxu0 0.0
    %4052 = vmatpush2.msra.mxu0 0.0
    %4053 = vmatprep.subr.mxu0 0.0
    %4054 = vmatpush2.msra.mxu0 0.0
    %4055 = vmatprep.subr.mxu0 0.0
    %4056 = vmatpush2.msra.mxu0 0.0
    %4057 = vmatprep.subr.mxu0 0.0
    %4058 = vmatpush2.msra.mxu0 0.0
    %4059 = vmatprep.subr.mxu0 0.0
    %4060 = vmatpush2.msra.mxu0 0.0
    %4061 = vmatprep.subr.mxu0 0.0
    %4062 = vmatpush2.msra.mxu0 0.0
    %4063 = vmatprep.subr.mxu0 0.0
    %4064 = vmatpush2.msra.mxu0 0.0
    %4065 = vmatprep.subr.mxu0 0.0
    %4066 = vmatpush2.msra.mxu0 0.0
    %4067 = vmatprep.subr.mxu0 0.0
    %4068 = vmatpush2.msra.mxu0 0.0
    %4069 = vmatprep.subr.mxu0 0.0
    %4070 = vmatpush2.msra.mxu0 0.0
    %4071 = vmatprep.mubr.f32.mxu0 0.0
    %4072 = vmatmul.mubr.f32.gmra.mxu0 %v3190
    %v4073 = vpop.f32.mrf.mxu0
    %v4074 = vadd.f32 0.0, %v4073
    %v4075 = vpop.f32.mrf.mxu0
    %4076 = vdwg.mxu0
    %v4077 = vadd.f32 %v4006, %v4074
    %v4078 = vxor.u32 %v4077, 2147483648
    %v4079 = vmul.f32 %v4078, 1.442695
    %v4080 = vpow.pop %v4079
    %v4081 = vadd.f32 %v4080, 1.0
    %v4082 = vrcp.pop %v4081
    %v4083 = vmul.f32 1.0, %v4082
    %v4084 = vtanh.pop %v4077
    %v4085 = vmul.f32 %v4083, %v3158
    %4087 = vrot.lane.b32.xlu0 %v4084, 64
    %v4088 = vpop.permute.xlu0 %4087
    %v4090 = vmul.f32 %v4083, %v4088
    %4092 = vrot.lane.b32.xlu0 %v4090, 32
    %v4093 = vpop.permute.xlu0 %4092
    %v4095 = vadd.f32 %v4085, %v4093
    %v4096 = vtanh.pop %v4095
    %4098 = vrot.lane.b32.xlu0 %v4096, 64
    %v4099 = vpop.permute.xlu0 %4098
    %v4101 = vmul.f32 %v4083, %v4099
    %v4104 = vunpack.c.l.s4 1966171168
    %v4105 = vunpack.c.0.s8 %v4104
    %v4106 = vlaneseq
    %v4107 = vshrl.u32 %v4106, 7
    %v4108 = vsub.s32 %v4105, %v4107
    %v4109 = vrot.slane %v4101, %v4108
    %v4110 = vcombine.high %v4109, %v4109
    %v4112 = vunpack.c.l.s4 1966171168
    %v4113 = vunpack.c.0.s8 %v4112
    %v4114 = vlaneseq
    %v4115 = vshrl.u32 %v4114, 7
    %v4116 = vsub.s32 %v4113, %v4115
    %v4117 = vrot.slane %v4109, %v4116
    %v4119 = vunpack.c.l.s4 1966171168
    %v4120 = vunpack.c.0.s8 %v4119
    %v4121 = vlaneseq
    %v4122 = vshrl.u32 %v4121, 7
    %v4123 = vsub.s32 %v4120, %v4122
    %v4124 = vrot.slane %v4110, %v4123
    %4125 = vrot.lane.b32.xlu0 %v4101, 32
    %v4126 = vpop.permute.xlu0 %4125
    %v4127 = vsel %vm142, %v4126, 0
    %4129 = vmatprep.subr.mxu0 0.0
    %4130 = vmatpush1.msra.mxu0 0.0
    %4131 = vmatprep.subr.mxu0 0.0
    %4132 = vmatpush1.msra.mxu0 0.0
    %4133 = vmatprep.subr.mxu0 0.0
    %4134 = vmatpush1.msra.mxu0 0.0
    %4135 = vmatprep.subr.mxu0 0.0
    %4136 = vmatpush1.msra.mxu0 0.0
    %4137 = vmatprep.subr.mxu0 0.0
    %4138 = vmatpush1.msra.mxu0 0.0
    %4139 = vmatprep.subr.mxu0 0.0
    %4140 = vmatpush1.msra.mxu0 0.0
    %4141 = vmatprep.subr.mxu0 0.0
    %4142 = vmatpush1.msra.mxu0 0.0
    %4143 = vmatprep.subr.mxu0 0.0
    %4144 = vmatpush1.msra.mxu0 0.0
    %4145 = vmatprep.subr.mxu0 0.0
    %4146 = vmatpush1.msra.mxu0 0.0
    %4147 = vmatprep.subr.mxu0 0.0
    %4148 = vmatpush1.msra.mxu0 0.0
    %4149 = vmatprep.subr.mxu0 0.0
    %4150 = vmatpush1.msra.mxu0 0.0
    %4151 = vmatprep.subr.mxu0 0.0
    %4152 = vmatpush1.msra.mxu0 0.0
    %4153 = vmatprep.subr.mxu0 0.0
    %4154 = vmatpush1.msra.mxu0 %v137
    %4155 = vmatprep.subr.mxu0 0.0
    %4156 = vmatpush1.msra.mxu0 %v136
    %4157 = vmatprep.subr.mxu0 0.0
    %4158 = vmatpush1.msra.mxu0 %v135
    %4159 = vmatprep.subr.mxu0 0.0
    %4160 = vmatpush1.msra.mxu0 %v134
    %4161 = vmatprep.subr.mxu0 0.0
    %4162 = vmatpush2.msra.mxu0 0.0
    %4163 = vmatprep.subr.mxu0 0.0
    %4164 = vmatpush2.msra.mxu0 0.0
    %4165 = vmatprep.subr.mxu0 0.0
    %4166 = vmatpush2.msra.mxu0 0.0
    %4167 = vmatprep.subr.mxu0 0.0
    %4168 = vmatpush2.msra.mxu0 0.0
    %4169 = vmatprep.subr.mxu0 0.0
    %4170 = vmatpush2.msra.mxu0 0.0
    %4171 = vmatprep.subr.mxu0 0.0
    %4172 = vmatpush2.msra.mxu0 0.0
    %4173 = vmatprep.subr.mxu0 0.0
    %4174 = vmatpush2.msra.mxu0 0.0
    %4175 = vmatprep.subr.mxu0 0.0
    %4176 = vmatpush2.msra.mxu0 0.0
    %4177 = vmatprep.subr.mxu0 0.0
    %4178 = vmatpush2.msra.mxu0 0.0
    %4179 = vmatprep.subr.mxu0 0.0
    %4180 = vmatpush2.msra.mxu0 0.0
    %4181 = vmatprep.subr.mxu0 0.0
    %4182 = vmatpush2.msra.mxu0 0.0
    %4183 = vmatprep.subr.mxu0 0.0
    %4184 = vmatpush2.msra.mxu0 0.0
    %4185 = vmatprep.subr.mxu0 0.0
    %4186 = vmatpush2.msra.mxu0 0.0
    %4187 = vmatprep.subr.mxu0 0.0
    %4188 = vmatpush2.msra.mxu0 0.0
    %4189 = vmatprep.subr.mxu0 0.0
    %4190 = vmatpush2.msra.mxu0 0.0
    %4191 = vmatprep.subr.mxu0 0.0
    %4192 = vmatpush2.msra.mxu0 0.0
    %4193 = vmatprep.mubr.f32.mxu0 0.0
    %4194 = vmatmul.mubr.f32.gmra.mxu0 %v4127
    %v4195 = vpop.f32.mrf.mxu0
    %v4196 = vadd.f32 0.0, %v4195
    %v4197 = vpop.f32.mrf.mxu0
    %4198 = vdwg.mxu0
    %v4199 = vlaneseq
    %v4200 = vshrl.u32 %v4199, 7
    %v4201 = vsub.s32 0, %v4200
    %v4202 = vrot.slane %v4117, %v4201
    %4203 = vrot.lane.b32.xlu0 %v4202, 32
    %v4204 = vpop.permute.xlu0 %4203
    %v4205 = vsel %vm142, %v4204, 0
    %4207 = vmatprep.subr.mxu0 0.0
    %4208 = vmatpush1.xpose.msra.mxu0 0.0
    %4209 = vmatprep.subr.mxu0 0.0
    %4210 = vmatpush1.xpose.msra.mxu0 0.0
    %4211 = vmatprep.subr.mxu0 0.0
    %4212 = vmatpush1.xpose.msra.mxu0 0.0
    %4213 = vmatprep.subr.mxu0 0.0
    %4214 = vmatpush1.xpose.msra.mxu0 0.0
    %4215 = vmatprep.subr.mxu0 0.0
    %4216 = vmatpush1.xpose.msra.mxu0 0.0
    %4217 = vmatprep.subr.mxu0 0.0
    %4218 = vmatpush1.xpose.msra.mxu0 0.0
    %4219 = vmatprep.subr.mxu0 0.0
    %4220 = vmatpush1.xpose.msra.mxu0 0.0
    %4221 = vmatprep.subr.mxu0 0.0
    %4222 = vmatpush1.xpose.msra.mxu0 0.0
    %4223 = vmatprep.subr.mxu0 0.0
    %4224 = vmatpush1.xpose.msra.mxu0 0.0
    %4225 = vmatprep.subr.mxu0 0.0
    %4226 = vmatpush1.xpose.msra.mxu0 0.0
    %4227 = vmatprep.subr.mxu0 0.0
    %4228 = vmatpush1.xpose.msra.mxu0 0.0
    %4229 = vmatprep.subr.mxu0 0.0
    %4230 = vmatpush1.xpose.msra.mxu0 0.0
    %4231 = vmatprep.subr.mxu0 0.0
    %4232 = vmatpush1.xpose.msra.mxu0 0.0
    %4233 = vmatprep.subr.mxu0 0.0
    %4234 = vmatpush1.xpose.msra.mxu0 0.0
    %4235 = vmatprep.subr.mxu0 0.0
    %4236 = vmatpush1.xpose.msra.mxu0 %v428
    %4237 = vmatprep.subr.mxu0 0.0
    %4238 = vmatpush1.xpose.msra.mxu0 %v425
    %4239 = vmatprep.subr.mxu0 0.0
    %4240 = vmatpush2.xpose.msra.mxu0 0.0
    %4241 = vmatprep.subr.mxu0 0.0
    %4242 = vmatpush2.xpose.msra.mxu0 0.0
    %4243 = vmatprep.subr.mxu0 0.0
    %4244 = vmatpush2.xpose.msra.mxu0 0.0
    %4245 = vmatprep.subr.mxu0 0.0
    %4246 = vmatpush2.xpose.msra.mxu0 0.0
    %4247 = vmatprep.subr.mxu0 0.0
    %4248 = vmatpush2.xpose.msra.mxu0 0.0
    %4249 = vmatprep.subr.mxu0 0.0
    %4250 = vmatpush2.xpose.msra.mxu0 0.0
    %4251 = vmatprep.subr.mxu0 0.0
    %4252 = vmatpush2.xpose.msra.mxu0 0.0
    %4253 = vmatprep.subr.mxu0 0.0
    %4254 = vmatpush2.xpose.msra.mxu0 0.0
    %4255 = vmatprep.subr.mxu0 0.0
    %4256 = vmatpush2.xpose.msra.mxu0 0.0
    %4257 = vmatprep.subr.mxu0 0.0
    %4258 = vmatpush2.xpose.msra.mxu0 0.0
    %4259 = vmatprep.subr.mxu0 0.0
    %4260 = vmatpush2.xpose.msra.mxu0 0.0
    %4261 = vmatprep.subr.mxu0 0.0
    %4262 = vmatpush2.xpose.msra.mxu0 0.0
    %4263 = vmatprep.subr.mxu0 0.0
    %4264 = vmatpush2.xpose.msra.mxu0 0.0
    %4265 = vmatprep.subr.mxu0 0.0
    %4266 = vmatpush2.xpose.msra.mxu0 0.0
    %4267 = vmatprep.subr.mxu0 0.0
    %4268 = vmatpush2.xpose.msra.mxu0 0.0
    %4269 = vmatprep.subr.mxu0 0.0
    %4270 = vmatpush2.xpose.msra.mxu0 0.0
    %4271 = vmatprep.mubr.f32.mxu0 0.0
    %4272 = vmatmul.mubr.f32.gmra.mxu0 %v4205
    %v4273 = vpop.f32.mrf.mxu0
    %v4274 = vadd.f32 %v90, %v4273
    %v4275 = vpop.f32.mrf.mxu0
    %4276 = vdwg.mxu0
    %v4277 = vlaneseq
    %v4278 = vshrl.u32 %v4277, 7
    %v4279 = vsub.s32 0, %v4278
    %v4280 = vrot.slane %v4124, %v4279
    %4281 = vrot.lane.b32.xlu0 %v4280, 32
    %v4282 = vpop.permute.xlu0 %4281
    %v4283 = vsel %vm142, %v4282, 0
    %4285 = vmatprep.subr.mxu0 0.0
    %4286 = vmatpush1.xpose.msra.mxu0 0.0
    %4287 = vmatprep.subr.mxu0 0.0
    %4288 = vmatpush1.xpose.msra.mxu0 0.0
    %4289 = vmatprep.subr.mxu0 0.0
    %4290 = vmatpush1.xpose.msra.mxu0 0.0
    %4291 = vmatprep.subr.mxu0 0.0
    %4292 = vmatpush1.xpose.msra.mxu0 0.0
    %4293 = vmatprep.subr.mxu0 0.0
    %4294 = vmatpush1.xpose.msra.mxu0 0.0
    %4295 = vmatprep.subr.mxu0 0.0
    %4296 = vmatpush1.xpose.msra.mxu0 0.0
    %4297 = vmatprep.subr.mxu0 0.0
    %4298 = vmatpush1.xpose.msra.mxu0 0.0
    %4299 = vmatprep.subr.mxu0 0.0
    %4300 = vmatpush1.xpose.msra.mxu0 0.0
    %4301 = vmatprep.subr.mxu0 0.0
    %4302 = vmatpush1.xpose.msra.mxu0 0.0
    %4303 = vmatprep.subr.mxu0 0.0
    %4304 = vmatpush1.xpose.msra.mxu0 0.0
    %4305 = vmatprep.subr.mxu0 0.0
    %4306 = vmatpush1.xpose.msra.mxu0 0.0
    %4307 = vmatprep.subr.mxu0 0.0
    %4308 = vmatpush1.xpose.msra.mxu0 0.0
    %4309 = vmatprep.subr.mxu0 0.0
    %4310 = vmatpush1.xpose.msra.mxu0 0.0
    %4311 = vmatprep.subr.mxu0 0.0
    %4312 = vmatpush1.xpose.msra.mxu0 0.0
    %4313 = vmatprep.subr.mxu0 0.0
    %4314 = vmatpush1.xpose.msra.mxu0 %v512
    %4315 = vmatprep.subr.mxu0 0.0
    %4316 = vmatpush1.xpose.msra.mxu0 %v509
    %4317 = vmatprep.subr.mxu0 0.0
    %4318 = vmatpush2.xpose.msra.mxu0 0.0
    %4319 = vmatprep.subr.mxu0 0.0
    %4320 = vmatpush2.xpose.msra.mxu0 0.0
    %4321 = vmatprep.subr.mxu0 0.0
    %4322 = vmatpush2.xpose.msra.mxu0 0.0
    %4323 = vmatprep.subr.mxu0 0.0
    %4324 = vmatpush2.xpose.msra.mxu0 0.0
    %4325 = vmatprep.subr.mxu0 0.0
    %4326 = vmatpush2.xpose.msra.mxu0 0.0
    %4327 = vmatprep.subr.mxu0 0.0
    %4328 = vmatpush2.xpose.msra.mxu0 0.0
    %4329 = vmatprep.subr.mxu0 0.0
    %4330 = vmatpush2.xpose.msra.mxu0 0.0
    %4331 = vmatprep.subr.mxu0 0.0
    %4332 = vmatpush2.xpose.msra.mxu0 0.0
    %4333 = vmatprep.subr.mxu0 0.0
    %4334 = vmatpush2.xpose.msra.mxu0 0.0
    %4335 = vmatprep.subr.mxu0 0.0
    %4336 = vmatpush2.xpose.msra.mxu0 0.0
    %4337 = vmatprep.subr.mxu0 0.0
    %4338 = vmatpush2.xpose.msra.mxu0 0.0
    %4339 = vmatprep.subr.mxu0 0.0
    %4340 = vmatpush2.xpose.msra.mxu0 0.0
    %4341 = vmatprep.subr.mxu0 0.0
    %4342 = vmatpush2.xpose.msra.mxu0 0.0
    %4343 = vmatprep.subr.mxu0 0.0
    %4344 = vmatpush2.xpose.msra.mxu0 0.0
    %4345 = vmatprep.subr.mxu0 0.0
    %4346 = vmatpush2.xpose.msra.mxu0 0.0
    %4347 = vmatprep.subr.mxu0 0.0
    %4348 = vmatpush2.xpose.msra.mxu0 0.0
    %4349 = vmatprep.mubr.f32.mxu0 0.0
    %4350 = vmatmul.mubr.f32.gmra.mxu0 %v4283
    %v4351 = vpop.f32.mrf.mxu0
    %v4352 = vadd.f32 %v97, %v4351
    %v4353 = vpop.f32.mrf.mxu0
    %4354 = vdwg.mxu0
    %v4355 = vsel %vm584, %v4274, -inf
    %4356 = vmax.xlane.f32.xlu0 %v4355
    %v4357 = vpop.xlane.xlu0 %4356
    %v4358 = vsel %vm584, %v4352, -inf
    %4359 = vmax.xlane.f32.xlu0 %v4358
    %v4360 = vpop.xlane.xlu0 %4359
    %v4361 = vsub.f32 %v4274, %v4357
    %v4362 = vsub.f32 %v4352, %v4360
    %v4363 = vmul.f32 %v4361, 1.442695
    %v4364 = vpow.pop %v4363
    %v4365 = vmul.f32 %v4362, 1.442695
    %v4366 = vpow.pop %v4365
    %v4367 = vsel %vm584, %v4364, 0.0
    %4368 = vadd.xlane.f32.xlu0 %v4367
    %v4369 = vpop.xlane.xlu0 %4368
    %v4370 = vsel %vm584, %v4366, 0.0
    %4371 = vadd.xlane.f32.xlu0 %v4370
    %v4372 = vpop.xlane.xlu0 %4371
    %v4373 = vrcp.pop %v4369
    %v4374 = vrcp.pop %v4372
    %v4375 = vmul.f32 %v4364, %v4373
    %v4376 = vmul.f32 %v4366, %v4374
    %v4378 = vsel %vm607, %v4375, 0
    %4380 = vmatprep.subr.mxu0 0.0
    %4381 = vmatpush1.msra.mxu0 0.0
    %4382 = vmatprep.subr.mxu0 0.0
    %4383 = vmatpush1.msra.mxu0 0.0
    %4384 = vmatprep.subr.mxu0 0.0
    %4385 = vmatpush1.msra.mxu0 0.0
    %4386 = vmatprep.subr.mxu0 0.0
    %4387 = vmatpush1.msra.mxu0 0.0
    %4388 = vmatprep.subr.mxu0 0.0
    %4389 = vmatpush1.msra.mxu0 0.0
    %4390 = vmatprep.subr.mxu0 0.0
    %4391 = vmatpush1.msra.mxu0 0.0
    %4392 = vmatprep.subr.mxu0 0.0
    %4393 = vmatpush1.msra.mxu0 0.0
    %4394 = vmatprep.subr.mxu0 0.0
    %4395 = vmatpush1.msra.mxu0 0.0
    %4396 = vmatprep.subr.mxu0 0.0
    %4397 = vmatpush1.msra.mxu0 0.0
    %4398 = vmatprep.subr.mxu0 0.0
    %4399 = vmatpush1.msra.mxu0 0.0
    %4400 = vmatprep.subr.mxu0 0.0
    %4401 = vmatpush1.msra.mxu0 0.0
    %4402 = vmatprep.subr.mxu0 0.0
    %4403 = vmatpush1.msra.mxu0 0.0
    %4404 = vmatprep.subr.mxu0 0.0
    %4405 = vmatpush1.msra.mxu0 0.0
    %4406 = vmatprep.subr.mxu0 0.0
    %4407 = vmatpush1.msra.mxu0 0.0
    %4408 = vmatprep.subr.mxu0 0.0
    %4409 = vmatpush1.msra.mxu0 %v613
    %4410 = vmatprep.subr.mxu0 0.0
    %4411 = vmatpush1.msra.mxu0 %v66
    %4412 = vmatprep.subr.mxu0 0.0
    %4413 = vmatpush2.msra.mxu0 0.0
    %4414 = vmatprep.subr.mxu0 0.0
    %4415 = vmatpush2.msra.mxu0 0.0
    %4416 = vmatprep.subr.mxu0 0.0
    %4417 = vmatpush2.msra.mxu0 0.0
    %4418 = vmatprep.subr.mxu0 0.0
    %4419 = vmatpush2.msra.mxu0 0.0
    %4420 = vmatprep.subr.mxu0 0.0
    %4421 = vmatpush2.msra.mxu0 0.0
    %4422 = vmatprep.subr.mxu0 0.0
    %4423 = vmatpush2.msra.mxu0 0.0
    %4424 = vmatprep.subr.mxu0 0.0
    %4425 = vmatpush2.msra.mxu0 0.0
    %4426 = vmatprep.subr.mxu0 0.0
    %4427 = vmatpush2.msra.mxu0 0.0
    %4428 = vmatprep.subr.mxu0 0.0
    %4429 = vmatpush2.msra.mxu0 0.0
    %4430 = vmatprep.subr.mxu0 0.0
    %4431 = vmatpush2.msra.mxu0 0.0
    %4432 = vmatprep.subr.mxu0 0.0
    %4433 = vmatpush2.msra.mxu0 0.0
    %4434 = vmatprep.subr.mxu0 0.0
    %4435 = vmatpush2.msra.mxu0 0.0
    %4436 = vmatprep.subr.mxu0 0.0
    %4437 = vmatpush2.msra.mxu0 0.0
    %4438 = vmatprep.subr.mxu0 0.0
    %4439 = vmatpush2.msra.mxu0 0.0
    %4440 = vmatprep.subr.mxu0 0.0
    %4441 = vmatpush2.msra.mxu0 0.0
    %4442 = vmatprep.subr.mxu0 0.0
    %4443 = vmatpush2.msra.mxu0 0.0
    %4444 = vmatprep.mubr.f32.mxu0 0.0
    %4445 = vmatmul.mubr.f32.gmra.mxu0 %v4378
    %v4446 = vpop.f32.mrf.mxu0
    %v4447 = vadd.f32 0.0, %v4446
    %v4448 = vpop.f32.mrf.mxu0
    %4449 = vdwg.mxu0
    %v4451 = vsel %vm607, %v4376, 0
    %4453 = vmatprep.subr.mxu0 0.0
    %4454 = vmatpush1.msra.mxu0 0.0
    %4455 = vmatprep.subr.mxu0 0.0
    %4456 = vmatpush1.msra.mxu0 0.0
    %4457 = vmatprep.subr.mxu0 0.0
    %4458 = vmatpush1.msra.mxu0 0.0
    %4459 = vmatprep.subr.mxu0 0.0
    %4460 = vmatpush1.msra.mxu0 0.0
    %4461 = vmatprep.subr.mxu0 0.0
    %4462 = vmatpush1.msra.mxu0 0.0
    %4463 = vmatprep.subr.mxu0 0.0
    %4464 = vmatpush1.msra.mxu0 0.0
    %4465 = vmatprep.subr.mxu0 0.0
    %4466 = vmatpush1.msra.mxu0 0.0
    %4467 = vmatprep.subr.mxu0 0.0
    %4468 = vmatpush1.msra.mxu0 0.0
    %4469 = vmatprep.subr.mxu0 0.0
    %4470 = vmatpush1.msra.mxu0 0.0
    %4471 = vmatprep.subr.mxu0 0.0
    %4472 = vmatpush1.msra.mxu0 0.0
    %4473 = vmatprep.subr.mxu0 0.0
    %4474 = vmatpush1.msra.mxu0 0.0
    %4475 = vmatprep.subr.mxu0 0.0
    %4476 = vmatpush1.msra.mxu0 0.0
    %4477 = vmatprep.subr.mxu0 0.0
    %4478 = vmatpush1.msra.mxu0 0.0
    %4479 = vmatprep.subr.mxu0 0.0
    %4480 = vmatpush1.msra.mxu0 0.0
    %4481 = vmatprep.subr.mxu0 0.0
    %4482 = vmatpush1.msra.mxu0 %v689
    %4483 = vmatprep.subr.mxu0 0.0
    %4484 = vmatpush1.msra.mxu0 %v68
    %4485 = vmatprep.subr.mxu0 0.0
    %4486 = vmatpush2.msra.mxu0 0.0
    %4487 = vmatprep.subr.mxu0 0.0
    %4488 = vmatpush2.msra.mxu0 0.0
    %4489 = vmatprep.subr.mxu0 0.0
    %4490 = vmatpush2.msra.mxu0 0.0
    %4491 = vmatprep.subr.mxu0 0.0
    %4492 = vmatpush2.msra.mxu0 0.0
    %4493 = vmatprep.subr.mxu0 0.0
    %4494 = vmatpush2.msra.mxu0 0.0
    %4495 = vmatprep.subr.mxu0 0.0
    %4496 = vmatpush2.msra.mxu0 0.0
    %4497 = vmatprep.subr.mxu0 0.0
    %4498 = vmatpush2.msra.mxu0 0.0
    %4499 = vmatprep.subr.mxu0 0.0
    %4500 = vmatpush2.msra.mxu0 0.0
    %4501 = vmatprep.subr.mxu0 0.0
    %4502 = vmatpush2.msra.mxu0 0.0
    %4503 = vmatprep.subr.mxu0 0.0
    %4504 = vmatpush2.msra.mxu0 0.0
    %4505 = vmatprep.subr.mxu0 0.0
    %4506 = vmatpush2.msra.mxu0 0.0
    %4507 = vmatprep.subr.mxu0 0.0
    %4508 = vmatpush2.msra.mxu0 0.0
    %4509 = vmatprep.subr.mxu0 0.0
    %4510 = vmatpush2.msra.mxu0 0.0
    %4511 = vmatprep.subr.mxu0 0.0
    %4512 = vmatpush2.msra.mxu0 0.0
    %4513 = vmatprep.subr.mxu0 0.0
    %4514 = vmatpush2.msra.mxu0 0.0
    %4515 = vmatprep.subr.mxu0 0.0
    %4516 = vmatpush2.msra.mxu0 0.0
    %4517 = vmatprep.mubr.f32.mxu0 0.0
    %4518 = vmatmul.mubr.f32.gmra.mxu0 %v4451
    %v4519 = vpop.f32.mrf.mxu0
    %v4520 = vadd.f32 0.0, %v4519
    %v4521 = vpop.f32.mrf.mxu0
    %4522 = vdwg.mxu0
    %4523 = vmatprep.subr.mxu0 0.0
    %4524 = vmatpush1.xpose.msra.mxu0 0.0
    %4525 = vmatprep.subr.mxu0 0.0
    %4526 = vmatpush1.xpose.msra.mxu0 0.0
    %4527 = vmatprep.subr.mxu0 0.0
    %4528 = vmatpush1.xpose.msra.mxu0 0.0
    %4529 = vmatprep.subr.mxu0 0.0
    %4530 = vmatpush1.xpose.msra.mxu0 0.0
    %4531 = vmatprep.subr.mxu0 0.0
    %4532 = vmatpush1.xpose.msra.mxu0 0.0
    %4533 = vmatprep.subr.mxu0 0.0
    %4534 = vmatpush1.xpose.msra.mxu0 0.0
    %4535 = vmatprep.subr.mxu0 0.0
    %4536 = vmatpush1.xpose.msra.mxu0 0.0
    %4537 = vmatprep.subr.mxu0 0.0
    %4538 = vmatpush1.xpose.msra.mxu0 0.0
    %4539 = vmatprep.subr.mxu0 0.0
    %4540 = vmatpush1.xpose.msra.mxu0 0.0
    %4541 = vmatprep.subr.mxu0 0.0
    %4542 = vmatpush1.xpose.msra.mxu0 0.0
    %4543 = vmatprep.subr.mxu0 0.0
    %4544 = vmatpush1.xpose.msra.mxu0 0.0
    %4545 = vmatprep.subr.mxu0 0.0
    %4546 = vmatpush1.xpose.msra.mxu0 0.0
    %4547 = vmatprep.subr.mxu0 0.0
    %4548 = vmatpush1.xpose.msra.mxu0 0.0
    %4549 = vmatprep.subr.mxu0 0.0
    %4550 = vmatpush1.xpose.msra.mxu0 0.0
    %4551 = vmatprep.subr.mxu0 0.0
    %4552 = vmatpush1.xpose.msra.mxu0 0.0
    %4553 = vmatprep.subr.mxu0 0.0
    %4554 = vmatpush1.xpose.msra.mxu0 %v762
    %4555 = vmatprep.subr.mxu0 0.0
    %4556 = vmatpush2.xpose.msra.mxu0 0.0
    %4557 = vmatprep.subr.mxu0 0.0
    %4558 = vmatpush2.xpose.msra.mxu0 0.0
    %4559 = vmatprep.subr.mxu0 0.0
    %4560 = vmatpush2.xpose.msra.mxu0 0.0
    %4561 = vmatprep.subr.mxu0 0.0
    %4562 = vmatpush2.xpose.msra.mxu0 0.0
    %4563 = vmatprep.subr.mxu0 0.0
    %4564 = vmatpush2.xpose.msra.mxu0 0.0
    %4565 = vmatprep.subr.mxu0 0.0
    %4566 = vmatpush2.xpose.msra.mxu0 0.0
    %4567 = vmatprep.subr.mxu0 0.0
    %4568 = vmatpush2.xpose.msra.mxu0 0.0
    %4569 = vmatprep.subr.mxu0 0.0
    %4570 = vmatpush2.xpose.msra.mxu0 0.0
    %4571 = vmatprep.subr.mxu0 0.0
    %4572 = vmatpush2.xpose.msra.mxu0 0.0
    %4573 = vmatprep.subr.mxu0 0.0
    %4574 = vmatpush2.xpose.msra.mxu0 0.0
    %4575 = vmatprep.subr.mxu0 0.0
    %4576 = vmatpush2.xpose.msra.mxu0 0.0
    %4577 = vmatprep.subr.mxu0 0.0
    %4578 = vmatpush2.xpose.msra.mxu0 0.0
    %4579 = vmatprep.subr.mxu0 0.0
    %4580 = vmatpush2.xpose.msra.mxu0 0.0
    %4581 = vmatprep.subr.mxu0 0.0
    %4582 = vmatpush2.xpose.msra.mxu0 0.0
    %4583 = vmatprep.subr.mxu0 0.0
    %4584 = vmatpush2.xpose.msra.mxu0 0.0
    %4585 = vmatprep.subr.mxu0 0.0
    %4586 = vmatpush2.xpose.msra.mxu0 0.0
    %4587 = vmatprep.mubr.f32.mxu0 0.0
    %4588 = vmatmul.mubr.f32.gmra.mxu0 %v4205
    %v4589 = vpop.f32.mrf.mxu0
    %v4590 = vadd.f32 %v116, %v4589
    %v4591 = vpop.f32.mrf.mxu0
    %4592 = vdwg.mxu0
    %4593 = vmatprep.subr.mxu0 0.0
    %4594 = vmatpush1.xpose.msra.mxu0 0.0
    %4595 = vmatprep.subr.mxu0 0.0
    %4596 = vmatpush1.xpose.msra.mxu0 0.0
    %4597 = vmatprep.subr.mxu0 0.0
    %4598 = vmatpush1.xpose.msra.mxu0 0.0
    %4599 = vmatprep.subr.mxu0 0.0
    %4600 = vmatpush1.xpose.msra.mxu0 0.0
    %4601 = vmatprep.subr.mxu0 0.0
    %4602 = vmatpush1.xpose.msra.mxu0 0.0
    %4603 = vmatprep.subr.mxu0 0.0
    %4604 = vmatpush1.xpose.msra.mxu0 0.0
    %4605 = vmatprep.subr.mxu0 0.0
    %4606 = vmatpush1.xpose.msra.mxu0 0.0
    %4607 = vmatprep.subr.mxu0 0.0
    %4608 = vmatpush1.xpose.msra.mxu0 0.0
    %4609 = vmatprep.subr.mxu0 0.0
    %4610 = vmatpush1.xpose.msra.mxu0 0.0
    %4611 = vmatprep.subr.mxu0 0.0
    %4612 = vmatpush1.xpose.msra.mxu0 0.0
    %4613 = vmatprep.subr.mxu0 0.0
    %4614 = vmatpush1.xpose.msra.mxu0 0.0
    %4615 = vmatprep.subr.mxu0 0.0
    %4616 = vmatpush1.xpose.msra.mxu0 0.0
    %4617 = vmatprep.subr.mxu0 0.0
    %4618 = vmatpush1.xpose.msra.mxu0 0.0
    %4619 = vmatprep.subr.mxu0 0.0
    %4620 = vmatpush1.xpose.msra.mxu0 0.0
    %4621 = vmatprep.subr.mxu0 0.0
    %4622 = vmatpush1.xpose.msra.mxu0 0.0
    %4623 = vmatprep.subr.mxu0 0.0
    %4624 = vmatpush1.xpose.msra.mxu0 %v835
    %4625 = vmatprep.subr.mxu0 0.0
    %4626 = vmatpush2.xpose.msra.mxu0 0.0
    %4627 = vmatprep.subr.mxu0 0.0
    %4628 = vmatpush2.xpose.msra.mxu0 0.0
    %4629 = vmatprep.subr.mxu0 0.0
    %4630 = vmatpush2.xpose.msra.mxu0 0.0
    %4631 = vmatprep.subr.mxu0 0.0
    %4632 = vmatpush2.xpose.msra.mxu0 0.0
    %4633 = vmatprep.subr.mxu0 0.0
    %4634 = vmatpush2.xpose.msra.mxu0 0.0
    %4635 = vmatprep.subr.mxu0 0.0
    %4636 = vmatpush2.xpose.msra.mxu0 0.0
    %4637 = vmatprep.subr.mxu0 0.0
    %4638 = vmatpush2.xpose.msra.mxu0 0.0
    %4639 = vmatprep.subr.mxu0 0.0
    %4640 = vmatpush2.xpose.msra.mxu0 0.0
    %4641 = vmatprep.subr.mxu0 0.0
    %4642 = vmatpush2.xpose.msra.mxu0 0.0
    %4643 = vmatprep.subr.mxu0 0.0
    %4644 = vmatpush2.xpose.msra.mxu0 0.0
    %4645 = vmatprep.subr.mxu0 0.0
    %4646 = vmatpush2.xpose.msra.mxu0 0.0
    %4647 = vmatprep.subr.mxu0 0.0
    %4648 = vmatpush2.xpose.msra.mxu0 0.0
    %4649 = vmatprep.subr.mxu0 0.0
    %4650 = vmatpush2.xpose.msra.mxu0 0.0
    %4651 = vmatprep.subr.mxu0 0.0
    %4652 = vmatpush2.xpose.msra.mxu0 0.0
    %4653 = vmatprep.subr.mxu0 0.0
    %4654 = vmatpush2.xpose.msra.mxu0 0.0
    %4655 = vmatprep.subr.mxu0 0.0
    %4656 = vmatpush2.xpose.msra.mxu0 0.0
    %4657 = vmatprep.mubr.f32.mxu0 0.0
    %4658 = vmatmul.mubr.f32.gmra.mxu0 %v4283
    %v4659 = vpop.f32.mrf.mxu0
    %v4660 = vadd.f32 %v123, %v4659
    %v4661 = vpop.f32.mrf.mxu0
    %4662 = vdwg.mxu0
    %v4663 = vsel %vm907, %v4590, -inf
    %4664 = vmax.xlane.f32.xlu0 %v4663
    %v4665 = vpop.xlane.xlu0 %4664
    %v4666 = vsel %vm907, %v4660, -inf
    %4667 = vmax.xlane.f32.xlu0 %v4666
    %v4668 = vpop.xlane.xlu0 %4667
    %v4669 = vsub.f32 %v4590, %v4665
    %v4670 = vsub.f32 %v4660, %v4668
    %v4671 = vmul.f32 %v4669, 1.442695
    %v4672 = vpow.pop %v4671
    %v4673 = vmul.f32 %v4670, 1.442695
    %v4674 = vpow.pop %v4673
    %v4675 = vsel %vm907, %v4672, 0.0
    %4676 = vadd.xlane.f32.xlu0 %v4675
    %v4677 = vpop.xlane.xlu0 %4676
    %v4678 = vsel %vm907, %v4674, 0.0
    %4679 = vadd.xlane.f32.xlu0 %v4678
    %v4680 = vpop.xlane.xlu0 %4679
    %v4681 = vrcp.pop %v4677
    %v4682 = vrcp.pop %v4680
    %v4683 = vmul.f32 %v4672, %v4681
    %v4684 = vmul.f32 %v4674, %v4682
    %v4686 = vsel %vm930, %v4683, 0
    %4688 = vmatprep.subr.mxu0 0.0
    %4689 = vmatpush1.msra.mxu0 0.0
    %4690 = vmatprep.subr.mxu0 0.0
    %4691 = vmatpush1.msra.mxu0 0.0
    %4692 = vmatprep.subr.mxu0 0.0
    %4693 = vmatpush1.msra.mxu0 0.0
    %4694 = vmatprep.subr.mxu0 0.0
    %4695 = vmatpush1.msra.mxu0 0.0
    %4696 = vmatprep.subr.mxu0 0.0
    %4697 = vmatpush1.msra.mxu0 0.0
    %4698 = vmatprep.subr.mxu0 0.0
    %4699 = vmatpush1.msra.mxu0 0.0
    %4700 = vmatprep.subr.mxu0 0.0
    %4701 = vmatpush1.msra.mxu0 0.0
    %4702 = vmatprep.subr.mxu0 0.0
    %4703 = vmatpush1.msra.mxu0 0.0
    %4704 = vmatprep.subr.mxu0 0.0
    %4705 = vmatpush1.msra.mxu0 0.0
    %4706 = vmatprep.subr.mxu0 0.0
    %4707 = vmatpush1.msra.mxu0 0.0
    %4708 = vmatprep.subr.mxu0 0.0
    %4709 = vmatpush1.msra.mxu0 0.0
    %4710 = vmatprep.subr.mxu0 0.0
    %4711 = vmatpush1.msra.mxu0 0.0
    %4712 = vmatprep.subr.mxu0 0.0
    %4713 = vmatpush1.msra.mxu0 0.0
    %4714 = vmatprep.subr.mxu0 0.0
    %4715 = vmatpush1.msra.mxu0 0.0
    %4716 = vmatprep.subr.mxu0 0.0
    %4717 = vmatpush1.msra.mxu0 0.0
    %4718 = vmatprep.subr.mxu0 0.0
    %4719 = vmatpush1.msra.mxu0 %v936
    %4720 = vmatprep.subr.mxu0 0.0
    %4721 = vmatpush2.msra.mxu0 0.0
    %4722 = vmatprep.subr.mxu0 0.0
    %4723 = vmatpush2.msra.mxu0 0.0
    %4724 = vmatprep.subr.mxu0 0.0
    %4725 = vmatpush2.msra.mxu0 0.0
    %4726 = vmatprep.subr.mxu0 0.0
    %4727 = vmatpush2.msra.mxu0 0.0
    %4728 = vmatprep.subr.mxu0 0.0
    %4729 = vmatpush2.msra.mxu0 0.0
    %4730 = vmatprep.subr.mxu0 0.0
    %4731 = vmatpush2.msra.mxu0 0.0
    %4732 = vmatprep.subr.mxu0 0.0
    %4733 = vmatpush2.msra.mxu0 0.0
    %4734 = vmatprep.subr.mxu0 0.0
    %4735 = vmatpush2.msra.mxu0 0.0
    %4736 = vmatprep.subr.mxu0 0.0
    %4737 = vmatpush2.msra.mxu0 0.0
    %4738 = vmatprep.subr.mxu0 0.0
    %4739 = vmatpush2.msra.mxu0 0.0
    %4740 = vmatprep.subr.mxu0 0.0
    %4741 = vmatpush2.msra.mxu0 0.0
    %4742 = vmatprep.subr.mxu0 0.0
    %4743 = vmatpush2.msra.mxu0 0.0
    %4744 = vmatprep.subr.mxu0 0.0
    %4745 = vmatpush2.msra.mxu0 0.0
    %4746 = vmatprep.subr.mxu0 0.0
    %4747 = vmatpush2.msra.mxu0 0.0
    %4748 = vmatprep.subr.mxu0 0.0
    %4749 = vmatpush2.msra.mxu0 0.0
    %4750 = vmatprep.subr.mxu0 0.0
    %4751 = vmatpush2.msra.mxu0 0.0
    %4752 = vmatprep.mubr.f32.mxu0 0.0
    %4753 = vmatmul.mubr.f32.gmra.mxu0 %v4686
    %v4754 = vpop.f32.mrf.mxu0
    %v4755 = vadd.f32 0.0, %v4754
    %v4756 = vpop.f32.mrf.mxu0
    %4757 = vdwg.mxu0
    %v4759 = vsel %vm930, %v4684, 0
    %4761 = vmatprep.subr.mxu0 0.0
    %4762 = vmatpush1.msra.mxu0 0.0
    %4763 = vmatprep.subr.mxu0 0.0
    %4764 = vmatpush1.msra.mxu0 0.0
    %4765 = vmatprep.subr.mxu0 0.0
    %4766 = vmatpush1.msra.mxu0 0.0
    %4767 = vmatprep.subr.mxu0 0.0
    %4768 = vmatpush1.msra.mxu0 0.0
    %4769 = vmatprep.subr.mxu0 0.0
    %4770 = vmatpush1.msra.mxu0 0.0
    %4771 = vmatprep.subr.mxu0 0.0
    %4772 = vmatpush1.msra.mxu0 0.0
    %4773 = vmatprep.subr.mxu0 0.0
    %4774 = vmatpush1.msra.mxu0 0.0
    %4775 = vmatprep.subr.mxu0 0.0
    %4776 = vmatpush1.msra.mxu0 0.0
    %4777 = vmatprep.subr.mxu0 0.0
    %4778 = vmatpush1.msra.mxu0 0.0
    %4779 = vmatprep.subr.mxu0 0.0
    %4780 = vmatpush1.msra.mxu0 0.0
    %4781 = vmatprep.subr.mxu0 0.0
    %4782 = vmatpush1.msra.mxu0 0.0
    %4783 = vmatprep.subr.mxu0 0.0
    %4784 = vmatpush1.msra.mxu0 0.0
    %4785 = vmatprep.subr.mxu0 0.0
    %4786 = vmatpush1.msra.mxu0 0.0
    %4787 = vmatprep.subr.mxu0 0.0
    %4788 = vmatpush1.msra.mxu0 0.0
    %4789 = vmatprep.subr.mxu0 0.0
    %4790 = vmatpush1.msra.mxu0 0.0
    %4791 = vmatprep.subr.mxu0 0.0
    %4792 = vmatpush1.msra.mxu0 %v1012
    %4793 = vmatprep.subr.mxu0 0.0
    %4794 = vmatpush2.msra.mxu0 0.0
    %4795 = vmatprep.subr.mxu0 0.0
    %4796 = vmatpush2.msra.mxu0 0.0
    %4797 = vmatprep.subr.mxu0 0.0
    %4798 = vmatpush2.msra.mxu0 0.0
    %4799 = vmatprep.subr.mxu0 0.0
    %4800 = vmatpush2.msra.mxu0 0.0
    %4801 = vmatprep.subr.mxu0 0.0
    %4802 = vmatpush2.msra.mxu0 0.0
    %4803 = vmatprep.subr.mxu0 0.0
    %4804 = vmatpush2.msra.mxu0 0.0
    %4805 = vmatprep.subr.mxu0 0.0
    %4806 = vmatpush2.msra.mxu0 0.0
    %4807 = vmatprep.subr.mxu0 0.0
    %4808 = vmatpush2.msra.mxu0 0.0
    %4809 = vmatprep.subr.mxu0 0.0
    %4810 = vmatpush2.msra.mxu0 0.0
    %4811 = vmatprep.subr.mxu0 0.0
    %4812 = vmatpush2.msra.mxu0 0.0
    %4813 = vmatprep.subr.mxu0 0.0
    %4814 = vmatpush2.msra.mxu0 0.0
    %4815 = vmatprep.subr.mxu0 0.0
    %4816 = vmatpush2.msra.mxu0 0.0
    %4817 = vmatprep.subr.mxu0 0.0
    %4818 = vmatpush2.msra.mxu0 0.0
    %4819 = vmatprep.subr.mxu0 0.0
    %4820 = vmatpush2.msra.mxu0 0.0
    %4821 = vmatprep.subr.mxu0 0.0
    %4822 = vmatpush2.msra.mxu0 0.0
    %4823 = vmatprep.subr.mxu0 0.0
    %4824 = vmatpush2.msra.mxu0 0.0
    %4825 = vmatprep.mubr.f32.mxu0 0.0
    %4826 = vmatmul.mubr.f32.gmra.mxu0 %v4759
    %v4827 = vpop.f32.mrf.mxu0
    %v4828 = vadd.f32 0.0, %v4827
    %v4829 = vpop.f32.mrf.mxu0
    %4830 = vdwg.mxu0
    %v4833 = vrot.slane %v4520, 7
    %v4834 = vsel %vm1087, %v4833, %v4447
    %v4836 = vadd.f32 %v4196, %v4834
    %v4837 = vtanh.pop %v4836
    %v4840 = vrot.slane %v4828, 7
    %v4841 = vsel %vm1087, %v4840, %v4755
    %4842 = vrot.lane.b32.xlu0 %v4841, 32
    %v4843 = vpop.permute.xlu0 %4842
    %v4845 = vadd.f32 %v4196, %v4843
    %v4846 = vtanh.pop %v4845
    %s4848 = scalar_lea.vmem [#allocation5], 8
    %4849 = vst.msk [vmem:[%s4848] sm:$0x3] %vm1102, %v4126
    %s4850 = scalar_lea.vmem [#allocation7], 8
    %4851 = vst.msk [vmem:[%s4850] sm:$0x3] %vm1102, %v4837
    %4853 = vrot.lane.b32.xlu0 %v4846, 96
    %v4854 = vpop.permute.xlu0 %4853
    %s4856 = scalar_lea.vmem [#allocation9], 8
    %4857 = vst.msk [vmem:[%s4856] sm:$0x3] %vm1102, %v4854
    %v4858 = vrot.slane %v4376, 7
    %v4859 = vsel %vm1087, %v4858, %v4375
    %s4861 = scalar_lea.vmem [#allocation10], 8
    %4862 = vst.msk [vmem:[%s4861] sm:$0x3] %vm1113, %v4859
    %v4863 = vrot.slane %v4684, 7
    %v4864 = vsel %vm1087, %v4863, %v4683
    %s4866 = scalar_lea.vmem [#allocation12], 8
    %4867 = vst.msk [vmem:[%s4866] sm:$0x3] %vm1118, %v4864
    %4868 = vst.msk [vmem:[#allocation2] sm:$0x3] %vm1102, %v4126
    %4870 = vrot.lane.b32.xlu0 %v4095, 96
    %v4871 = vpop.permute.xlu0 %4870
    %4873 = vst.msk [vmem:[#allocation3] sm:$0x3] %vm1102, %v4871
    %4874 = vst.msk [vmem:[#allocation4] sm:$0x3] %vm1102, %v4837
    // Predicated region
    $region54: #{tpu_custom_call.1} parent=1 // pred_check
      %p4875 = pneg %p52
    $region55: #{tpu_custom_call.1} parent=1 // pred_check_branch
      %4877 = sbr.rel (%p4875) target = $region57
    $region56: #{tpu_custom_call.1} parent=1 // pred_region
      %4878 = vst.msk [vmem:[#allocation13] sm:$0x3] %vm1102, %v4126
      %4879 = vst.msk [vmem:[#allocation15] sm:$0x3] %vm1102, %v4871
    $region57: #{tpu_custom_call.1} parent=1 // pred_fallthru
      _
    // Predicated region
    $region58: #{tpu_custom_call.1} parent=1 // pred_check
      _
    $region59: #{tpu_custom_call.1} parent=1 // pred_check_branch
      %4881 = sbr.rel (0) target = $region61
    $region60: #{tpu_custom_call.1} parent=1 // pred_region
      %s4883 = ssub.s32 160, 160
      %4884 = vsyncadd [#allocation6], %s4883
      %s4885 = sshll.u32 [#allocation5], 4
      %s4886 = int_to_ptr.vmem [resolvable:$true] %s4885
      %4891 = dma.vmem_to_hbm [thread:$0]  %s4886, 160, %s12, [#allocation6], 32, 32, 2
    $region61: #{tpu_custom_call.1} parent=1 // pred_fallthru
      _
    // Predicated region
    $region62: #{tpu_custom_call.1} parent=1 // pred_check
      _
    $region63: #{tpu_custom_call.1} parent=1 // pred_check_branch
      %4893 = sbr.rel (0) target = $region65
    $region64: #{tpu_custom_call.1} parent=1 // pred_region
      %s4895 = ssub.s32 160, 160
      %4896 = vsyncadd [#allocation8], %s4895
      %s4897 = sshll.u32 [#allocation7], 4
      %s4898 = int_to_ptr.vmem [resolvable:$true] %s4897
      %4903 = dma.vmem_to_hbm [thread:$0]  %s4898, 160, %s13, [#allocation8], 32, 32, 2
    $region65: #{tpu_custom_call.1} parent=1 // pred_fallthru
      _
    // Predicated region
    $region66: #{tpu_custom_call.1} parent=1 // pred_check
      _
    $region67: #{tpu_custom_call.1} parent=1 // pred_check_branch
      %4905 = sbr.rel (0) target = $region69
    $region68: #{tpu_custom_call.1} parent=1 // pred_region
      %s4907 = ssub.s32 160, 160
      %4908 = vsyncadd [#allocation8], %s4907
      %s4909 = sshll.u32 [#allocation9], 4
      %s4910 = int_to_ptr.vmem [resolvable:$true] %s4909
      %4915 = dma.vmem_to_hbm [thread:$0]  %s4910, 160, %s14, [#allocation8], 32, 32, 2
    $region69: #{tpu_custom_call.1} parent=1 // pred_fallthru
      _
    // Predicated region
    $region70: #{tpu_custom_call.1} parent=1 // pred_check
      _
    $region71: #{tpu_custom_call.1} parent=1 // pred_check_branch
      %4917 = sbr.rel (0) target = $region73
    $region72: #{tpu_custom_call.1} parent=1 // pred_region
      %s4919 = ssub.s32 160, 160
      %4920 = vsyncadd [#allocation11], %s4919
      %s4921 = sshll.u32 [#allocation10], 4
      %s4922 = int_to_ptr.vmem [resolvable:$true] %s4921
      %4927 = dma.vmem_to_hbm [thread:$0]  %s4922, 160, %s15, [#allocation11], 32, 32, 2
    $region73: #{tpu_custom_call.1} parent=1 // pred_fallthru
      _
    // Predicated region
    $region74: #{tpu_custom_call.1} parent=1 // pred_check
      _
    $region75: #{tpu_custom_call.1} parent=1 // pred_check_branch
      %4929 = sbr.rel (0) target = $region77
    $region76: #{tpu_custom_call.1} parent=1 // pred_region
      %s4931 = ssub.s32 160, 160
      %4932 = vsyncadd [#allocation11], %s4931
      %s4933 = sshll.u32 [#allocation12], 4
      %s4934 = int_to_ptr.vmem [resolvable:$true] %s4933
      %4939 = dma.vmem_to_hbm [thread:$0]  %s4934, 160, %s16, [#allocation11], 32, 32, 2
    $region77: #{tpu_custom_call.1} parent=1 // pred_fallthru
      _
    // Predicated region
    $region78: #{tpu_custom_call.1} parent=1 // pred_check
      _
    $region79: #{tpu_custom_call.1} parent=1 // pred_check_branch
      %4941 = sbr.rel (0) target = $region81
    $region80: #{tpu_custom_call.1} parent=1 // pred_region
      %s4943 = ssub.s32 32, 32
      %4944 = vsyncadd [#allocation14], %s4943
      %s4946 = sshll.u32 [#allocation13], 4
      %s4947 = int_to_ptr.vmem [resolvable:$true] %s4946
      %4949 = dma.vmem_to_hbm [thread:$0]  %s4947, 32, %s17, [#allocation14]
    $region81: #{tpu_custom_call.1} parent=1 // pred_fallthru
      _
    // Predicated region
    $region82: #{tpu_custom_call.1} parent=1 // pred_check
      _
    $region83: #{tpu_custom_call.1} parent=1 // pred_check_branch
      %4951 = sbr.rel (0) target = $region85
    $region84: #{tpu_custom_call.1} parent=1 // pred_region
      %s4953 = ssub.s32 32, 32
      %4954 = vsyncadd [#allocation14], %s4953
      %s4956 = sshll.u32 [#allocation15], 4
      %s4957 = int_to_ptr.vmem [resolvable:$true] %s4956
      %4959 = dma.vmem_to_hbm [thread:$0]  %s4957, 32, %s18, [#allocation14]
    $region85: #{tpu_custom_call.1} parent=1 // pred_fallthru
      _
    // Predicated region
    $region86: #{tpu_custom_call.1} parent=1 // pred_check
      _
    $region87: #{tpu_custom_call.1} parent=1 // pred_check_branch
      %4961 = sbr.rel (0) target = $region89
    $region88: #{tpu_custom_call.1} parent=1 // pred_region
      %4962 = dma.done [#allocation6], 160
    $region89: #{tpu_custom_call.1} parent=1 // pred_fallthru
      _
    // Predicated region
    $region90: #{tpu_custom_call.1} parent=1 // pred_check
      _
    $region91: #{tpu_custom_call.1} parent=1 // pred_check_branch
      %4964 = sbr.rel (0) target = $region93
    $region92: #{tpu_custom_call.1} parent=1 // pred_region
      %4965 = dma.done [#allocation8], 160
    $region93: #{tpu_custom_call.1} parent=1 // pred_fallthru
      _
    // Predicated region
    $region94: #{tpu_custom_call.1} parent=1 // pred_check
      _
    $region95: #{tpu_custom_call.1} parent=1 // pred_check_branch
      %4967 = sbr.rel (0) target = $region97
    $region96: #{tpu_custom_call.1} parent=1 // pred_region
      %4968 = dma.done [#allocation8], 160
    $region97: #{tpu_custom_call.1} parent=1 // pred_fallthru
      _
    // Predicated region
    $region98: #{tpu_custom_call.1} parent=1 // pred_check
      _
    $region99: #{tpu_custom_call.1} parent=1 // pred_check_branch
      %4970 = sbr.rel (0) target = $region101
    $region100: #{tpu_custom_call.1} parent=1 // pred_region
      %4971 = dma.done [#allocation11], 160
    $region101: #{tpu_custom_call.1} parent=1 // pred_fallthru
      _
    // Predicated region
    $region102: #{tpu_custom_call.1} parent=1 // pred_check
      _
    $region103: #{tpu_custom_call.1} parent=1 // pred_check_branch
      %4973 = sbr.rel (0) target = $region105
    $region104: #{tpu_custom_call.1} parent=1 // pred_region
      %4974 = dma.done [#allocation11], 160
    $region105: #{tpu_custom_call.1} parent=1 // pred_fallthru
      _
    // Predicated region
    $region106: #{tpu_custom_call.1} parent=1 // pred_check
      _
    $region107: #{tpu_custom_call.1} parent=1 // pred_check_branch
      %4976 = sbr.rel (0) target = $region109
    $region108: #{tpu_custom_call.1} parent=1 // pred_region
      %4977 = dma.done [#allocation14], 32
    $region109: #{tpu_custom_call.1} parent=1 // pred_fallthru
      _
    // Predicated region
    $region110: #{tpu_custom_call.1} parent=1 // pred_check
      _
    $region111: #{tpu_custom_call.1} parent=1 // pred_check_branch
      %4979 = sbr.rel (0) target = $region113
    $region112: #{tpu_custom_call.1} parent=1 // pred_region
      %4980 = dma.done [#allocation14], 32
    $region113: #{tpu_custom_call.1} parent=1 // pred_fallthru
      _
    %4981 = vsyncpa [#allocation6], 1
    %4982 = vsyncpa [#allocation8], 1
    %4983 = vsyncpa [#allocation11], 1
    %4984 = vsyncpa [#allocation14], 1

</llo_original>
